<compile_context>
chip_gen: v6e
topology: v6e:2x2x1
jax: 0.10.0
libtpu: 0.0.40
codegen_flags: <defaults>
</compile_context>

<pallas_src>
import math
from functools import partial

import jax
import jax.numpy as jnp
from jax.experimental import pallas as pl
from jax.experimental.pallas import tpu as pltpu

# ----------------------------- configuration ------------------------------
B = 2            # batch
S = 8            # sequence length (number of spatial tokens / agents)
E = 32           # d_model
NH = 4           # num heads
HD = E // NH     # head dim
FF = 64          # dim_feedforward
NUM_LAYERS = 2
EPS = 1e-5


# ------------------------------ kernel body --------------------------------
def _layernorm(x, g, b):
    # x: (N, D), g/b: (1, D)
    mu = jnp.mean(x, axis=-1, keepdims=True)
    xc = x - mu
    var = jnp.mean(xc * xc, axis=-1, keepdims=True)
    return xc * jax.lax.rsqrt(var + EPS) * g + b


def fused_encoder_kernel(x_ref,
                         w_in_ref, b_in_ref, w_out_ref, b_out_ref,
                         w1_ref, b1_ref, w2_ref, b2_ref,
                         g1_ref, be1_ref, g2_ref, be2_ref,
                         gf_ref, bf_ref,
                         y_ref, attn_ref,
                         *, num_layers, apply_final_norm,
                         batch, seq, nheads, dmodel, batched_heads):
    """All encoder layers (+ optional final norm) for the whole batch.

    x_ref:     (B*S, E)                      activations, batch collapsed
    w_in_ref:  (L, E, 3E)  b_in_ref: (L, 3E) QKV in-proj (pre-transposed,
                                             1/sqrt(HD) folded into Q part)
    w_out_ref: (L, E, E)   b_out_ref:(L, E)  attention out-proj
    w1_ref:    (L, E, FF)  b1_ref:   (L, FF) FFN linear1
    w2_ref:    (L, FF, E)  b2_ref:   (L, E)  FFN linear2
    g1/be1, g2/be2: (L, E)                   LayerNorm 1 / 2
    gf/bf: (1, E)                            final LayerNorm (may be unused)
    y_ref:  (B*S, E)   attn_ref: (B, S, S)   last-layer head-averaged attn
    """
    assert num_layers >= 1
    hd = dmodel // nheads
    inv_nh = 1.0 / nheads

    x = x_ref[...].astype(jnp.float32)                       # (B*S, E)
    attn_mean = None

    for l in range(num_layers):                              # unrolled at trace time
        last = (l == num_layers - 1)

        # ---- QKV in-projection for the whole batch (one MXU-friendly dot) ----
        qkv = (jnp.dot(x, w_in_ref[l], preferred_element_type=jnp.float32)
               + b_in_ref[pl.ds(l, 1), :])                   # (B*S, 3E)

        if batched_heads:
            # Preferred form: heads as an einsum batch dim, no concatenates.
            q4 = qkv[:, 0 * dmodel:1 * dmodel].reshape(batch, seq, nheads, hd)
            k4 = qkv[:, 1 * dmodel:2 * dmodel].reshape(batch, seq, nheads, hd)
            v4 = qkv[:, 2 * dmodel:3 * dmodel].reshape(batch, seq, nheads, hd)

            sc = jnp.einsum('bqhd,bkhd->bhqk', q4, k4,
                            preferred_element_type=jnp.float32)   # (B,NH,S,S)
            sc = sc - jnp.max(sc, axis=-1, keepdims=True)
            p_un = jnp.exp(sc)
            denom = jnp.sum(p_un, axis=-1, keepdims=True)
            if last:
                p = p_un / denom                              # exact (exposed attn)
                attn_mean = jnp.sum(p, axis=1) * inv_nh       # (B,S,S)
            else:
                p = p_un * pl.reciprocal(denom, approx=True)  # EUP slot

            ctx = jnp.einsum('bhqk,bkhd->bqhd', p, v4,
                             preferred_element_type=jnp.float32)  # (B,S,NH,HD)
            head_out = ctx.reshape(batch * seq, dmodel)
        else:
            # Fallback: single-leading-batch-dim einsums per head (always lowers).
            q = qkv[:, 0 * dmodel:1 * dmodel].reshape(batch, seq, dmodel)
            k = qkv[:, 1 * dmodel:2 * dmodel].reshape(batch, seq, dmodel)
            v = qkv[:, 2 * dmodel:3 * dmodel].reshape(batch, seq, dmodel)

            sc = jnp.concatenate(
                [jnp.einsum('bqd,bkd->bqk',
                            q[:, :, h * hd:(h + 1) * hd],
                            k[:, :, h * hd:(h + 1) * hd],
                            preferred_element_type=jnp.float32)
                 for h in range(nheads)], axis=0)             # (NH*B,S,S), h-major
            sc = sc - jnp.max(sc, axis=-1, keepdims=True)
            p_un = jnp.exp(sc)
            denom = jnp.sum(p_un, axis=-1, keepdims=True)
            if last:
                p = p_un / denom
                attn_mean = (jnp.sum(p.reshape(nheads, batch, seq, seq), axis=0)
                             * inv_nh)                        # (B,S,S)
            else:
                p = p_un * pl.reciprocal(denom, approx=True)

            head_out = jnp.concatenate(
                [jnp.einsum('bqk,bkd->bqd',
                            p[h * batch:(h + 1) * batch],
                            v[:, :, h * hd:(h + 1) * hd],
                            preferred_element_type=jnp.float32)
                 for h in range(nheads)], axis=-1).reshape(batch * seq, dmodel)

        attn_out = (jnp.dot(head_out, w_out_ref[l],
                            preferred_element_type=jnp.float32)
                    + b_out_ref[pl.ds(l, 1), :])

        # ---- residual + LayerNorm1 ----
        h1 = _layernorm(x + attn_out,
                        g1_ref[pl.ds(l, 1), :], be1_ref[pl.ds(l, 1), :])

        # ---- feed-forward (whole batch, pre-transposed weights) ----
        ff = (jnp.dot(h1, w1_ref[l], preferred_element_type=jnp.float32)
              + b1_ref[pl.ds(l, 1), :])
        ff = jnp.maximum(ff, 0.0)                             # ReLU
        ff = (jnp.dot(ff, w2_ref[l], preferred_element_type=jnp.float32)
              + b2_ref[pl.ds(l, 1), :])

        # ---- residual + LayerNorm2 ----
        x = _layernorm(h1 + ff,
                       g2_ref[pl.ds(l, 1), :], be2_ref[pl.ds(l, 1), :])

    if apply_final_norm:
        x = _layernorm(x, gf_ref[...], bf_ref[...])

    y_ref[...] = x.astype(y_ref.dtype)
    attn_ref[...] = attn_mean.astype(attn_ref.dtype)


# ------------------------------ wrapper -------------------------------------
def _vmem_spec():
    return pl.BlockSpec(memory_space=pltpu.MemorySpace.VMEM)


# Whether Mosaic on this jax/libtpu build lowers the head-batched einsums
# (dot_general with two batch dims). Probed once, then cached.
_ATTN_BATCHED_HEADS_OK = None


def spatial_msm_encoder(src, layer_params, final_norm_params=None):
    """Forward of SpatialMSMEncoder. Returns (output, attn_of_last_layer)."""
    global _ATTN_BATCHED_HEADS_OK

    Bn, Sn, En = src.shape
    L = len(layer_params)
    assert L >= 1, "SpatialMSMEncoder needs at least one layer"
    assert En % NH == 0, "d_model must be divisible by num heads"

    scale = 1.0 / math.sqrt(En // NH)

    # One-time host-side prep: (in, out) weight layout, layer stacking, and the
    # attention scale folded into the Q columns of the in-projection.
    def prep_in(p):
        w = p["w_in"].T                       # (E, 3E)
        w = w.at[:, :En].multiply(scale)      # scale Q weight columns
        b = p["b_in"].reshape(-1)             # (3E,)
        b = b.at[:En].multiply(scale)         # scale Q bias part
        return w, b

    w_in_list, b_in_list = zip(*(prep_in(p) for p in layer_params))
    w_in_t = jnp.stack(w_in_list)                                       # (L, E, 3E)
    b_in_s = jnp.stack(b_in_list)                                       # (L, 3E)
    w_out_t = jnp.stack([p["w_out"].T for p in layer_params])           # (L, E, E)
    b_out_s = jnp.stack([p["b_out"].reshape(-1) for p in layer_params]) # (L, E)
    w1_t = jnp.stack([p["w1"].T for p in layer_params])                 # (L, E, FF)
    b1_s = jnp.stack([p["b1"].reshape(-1) for p in layer_params])       # (L, FF)
    w2_t = jnp.stack([p["w2"].T for p in layer_params])                 # (L, FF, E)
    b2_s = jnp.stack([p["b2"].reshape(-1) for p in layer_params])       # (L, E)
    g1_s = jnp.stack([p["g1"].reshape(-1) for p in layer_params])       # (L, E)
    be1_s = jnp.stack([p["beta1"].reshape(-1) for p in layer_params])
    g2_s = jnp.stack([p["g2"].reshape(-1) for p in layer_params])
    be2_s = jnp.stack([p["beta2"].reshape(-1) for p in layer_params])

    apply_final = final_norm_params is not None
    if apply_final:
        gf, bf = final_norm_params
        gf = gf.reshape(1, En)
        bf = bf.reshape(1, En)
    else:
        gf = jnp.ones((1, En), jnp.float32)
        bf = jnp.zeros((1, En), jnp.float32)

    x2d = src.reshape(Bn * Sn, En)

    in_arrays = (x2d, w_in_t, b_in_s, w_out_t, b_out_s,
                 w1_t, b1_s, w2_t, b2_s,
                 g1_s, be1_s, g2_s, be2_s, gf, bf)

    out_shape = (jax.ShapeDtypeStruct((Bn * Sn, En), jnp.float32),
                 jax.ShapeDtypeStruct((Bn, Sn, Sn), jnp.float32))

    def run(batched_heads):
        kernel = partial(fused_encoder_kernel,
                         num_layers=L, apply_final_norm=apply_final,
                         batch=Bn, seq=Sn, nheads=NH, dmodel=En,
                         batched_heads=batched_heads)
        # Single un-gridded invocation: all weights (<100 KB) and activations
        # stay resident in VMEM for the entire stack; nothing to pipeline.
        return pl.pallas_call(
            kernel,
            in_specs=[_vmem_spec() for _ in in_arrays],
            out_specs=(_vmem_spec(), _vmem_spec()),
            out_shape=out_shape,
        )(*in_arrays)

    if _ATTN_BATCHED_HEADS_OK is None:
        try:
            y2d, attn = run(batched_heads=True)
            jax.block_until_ready((y2d, attn))
            _ATTN_BATCHED_HEADS_OK = True
        except Exception:
            # Mosaic rejected the two-batch-dim dot_general form; use the
            # proven per-head-loop attention instead.
            _ATTN_BATCHED_HEADS_OK = False
            y2d, attn = run(batched_heads=False)
    else:
        y2d, attn = run(batched_heads=_ATTN_BATCHED_HEADS_OK)

    return y2d.reshape(Bn, Sn, En), attn


# ----------------------- pure-JAX reference (checking) ----------------------
def _ref_layer(x, p):
    hi = jax.lax.Precision.HIGHEST
    qkv = jnp.einsum("bse,fe->bsf", x, p["w_in"], precision=hi) + p["b_in"][0]
    q, k, v = qkv[..., :E], qkv[..., E:2 * E], qkv[..., 2 * E:]

    def heads(t):
        return t.reshape(x.shape[0], x.shape[1], NH, HD).transpose(0, 2, 1, 3)

    qh, kh, vh = heads(q), heads(k), heads(v)
    sc = jnp.einsum("bhqd,bhkd->bhqk", qh, kh, precision=hi) / math.sqrt(HD)
    p_attn = jax.nn.softmax(sc, axis=-1)
    out = jnp.einsum("bhqk,bhkd->bhqd", p_attn, vh, precision=hi)
    out = out.transpose(0, 2, 1, 3).reshape(x.shape)
    out = jnp.einsum("bse,fe->bsf", out, p["w_out"], precision=hi) + p["b_out"][0]
    attn_w = p_attn.mean(axis=1)

    def ln(t, g, b):
        mu = t.mean(-1, keepdims=True)
        var = ((t - mu) ** 2).mean(-1, keepdims=True)
        return (t - mu) * jax.lax.rsqrt(var + EPS) * g[0] + b[0]

    h1 = ln(x + out, p["g1"], p["beta1"])
    ff = jnp.maximum(
        jnp.einsum("bse,fe->bsf", h1, p["w1"], precision=hi) + p["b1"][0], 0.0)
    ff = jnp.einsum("bsf,ef->bse", ff, p["w2"], precision=hi) + p["b2"][0]
    h2 = ln(h1 + ff, p["g2"], p["beta2"])
    return h2, attn_w


def _ref_encoder(src, layer_params, final_norm_params):
    out, attn = src, None
    for p in layer_params:
        out, attn = _ref_layer(out, p)
    if final_norm_params is not None:
        g, b = final_norm_params
        mu = out.mean(-1, keepdims=True)
        var = ((out - mu) ** 2).mean(-1, keepdims=True)
        out = (out - mu) * jax.lax.rsqrt(var + EPS) * g[0] + b[0]
    return out, attn


# ---------------------------------- main ------------------------------------
def make_layer_params(key):
    ks = jax.random.split(key, 8)
    s = 0.05
    return {
        "w_in":  jax.random.normal(ks[0], (3 * E, E), jnp.float32) * s,
        "b_in":  jax.random.normal(ks[1], (1, 3 * E), jnp.float32) * s,
        "w_out": jax.random.normal(ks[2], (E, E), jnp.float32) * s,
        "b_out": jax.random.normal(ks[3], (1, E), jnp.float32) * s,
        "w1":    jax.random.normal(ks[4], (FF, E), jnp.float32) * s,
        "b1":    jax.random.normal(ks[5], (1, FF), jnp.float32) * s,
        "w2":    jax.random.normal(ks[6], (E, FF), jnp.float32) * s,
        "b2":    jax.random.normal(ks[7], (1, E), jnp.float32) * s,
        "g1":    jnp.ones((1, E), jnp.float32),
        "beta1": jnp.zeros((1, E), jnp.float32),
        "g2":    jnp.ones((1, E), jnp.float32),
        "beta2": jnp.zeros((1, E), jnp.float32),
    }


if __name__ == "__main__":
    root = jax.random.PRNGKey(0)
    k_src, *k_layers = jax.random.split(root, NUM_LAYERS + 1)

    src = jax.random.normal(k_src, (B, S, E), jnp.float32)
    layer_params = [make_layer_params(k) for k in k_layers]
    final_norm_params = (jnp.ones((1, E), jnp.float32),
                         jnp.zeros((1, E), jnp.float32))

    out, attn = spatial_msm_encoder(src, layer_params, final_norm_params)
    out = jax.block_until_ready(out)
    attn = jax.block_until_ready(attn)

    ref_out, ref_attn = _ref_encoder(src, layer_params, final_norm_params)
    assert out.shape == (B, S, E) and attn.shape == (B, S, S)
    assert jnp.allclose(out, ref_out, rtol=5e-3, atol=5e-3), "output mismatch"
    assert jnp.allclose(attn, ref_attn, rtol=5e-3, atol=5e-3), "attn mismatch"

    print("KERNEL_OK")
</pallas_src>

<mosaic_0001>
module attributes {stable_mosaic.version = 11 : i64} {
  func.func @fused_encoder_kernel(%arg0: memref<16x32xf32, #tpu.memory_space<vmem>>, %arg1: memref<2x32x96xf32, #tpu.memory_space<vmem>>, %arg2: memref<2x96xf32, #tpu.memory_space<vmem>>, %arg3: memref<2x32x32xf32, #tpu.memory_space<vmem>>, %arg4: memref<2x32xf32, #tpu.memory_space<vmem>>, %arg5: memref<2x32x64xf32, #tpu.memory_space<vmem>>, %arg6: memref<2x64xf32, #tpu.memory_space<vmem>>, %arg7: memref<2x64x32xf32, #tpu.memory_space<vmem>>, %arg8: memref<2x32xf32, #tpu.memory_space<vmem>>, %arg9: memref<2x32xf32, #tpu.memory_space<vmem>>, %arg10: memref<2x32xf32, #tpu.memory_space<vmem>>, %arg11: memref<2x32xf32, #tpu.memory_space<vmem>>, %arg12: memref<2x32xf32, #tpu.memory_space<vmem>>, %arg13: memref<1x32xf32, #tpu.memory_space<vmem>>, %arg14: memref<1x32xf32, #tpu.memory_space<vmem>>, %arg15: memref<16x32xf32, #tpu.memory_space<vmem>>, %arg16: memref<2x8x8xf32, #tpu.memory_space<vmem>>) attributes {dimension_semantics = [], scalar_prefetch = 0 : i64, scratch_operands = 0 : i64, tpu.core_type = #tpu.core_type<tc>} {
    %c0 = arith.constant 0 : index
    %c0_0 = arith.constant 0 : index
    %0 = vector.load %arg0[%c0, %c0_0] : memref<16x32xf32, #tpu.memory_space<vmem>>, vector<16x32xf32>
    %c0_1 = arith.constant 0 : index
    %c0_2 = arith.constant 0 : index
    %c0_3 = arith.constant 0 : index
    %1 = vector.load %arg1[%c0_1, %c0_2, %c0_3] : memref<2x32x96xf32, #tpu.memory_space<vmem>>, vector<1x32x96xf32>
    %2 = vector.shape_cast %1 : vector<1x32x96xf32> to vector<32x96xf32>
    %cst = arith.constant dense<0.000000e+00> : vector<16x96xf32>
    %3 = tpu.matmul %0, %2, %cst {dimension_numbers = #tpu.dot_dimension_numbers<[1], [0], [0], [1], [0, 0, 1, 1], [], []>} : vector<16x32xf32>, vector<32x96xf32>, vector<16x96xf32> -> vector<16x96xf32>
    %c0_4 = arith.constant 0 : index
    %c0_5 = arith.constant 0 : index
    %4 = vector.load %arg2[%c0_4, %c0_5] : memref<2x96xf32, #tpu.memory_space<vmem>>, vector<1x96xf32>
    %5 = vector.broadcast %4 : vector<1x96xf32> to vector<16x96xf32>
    %6 = arith.addf %3, %5 : vector<16x96xf32>
    %7 = vector.extract_strided_slice %6 {offsets = [0, 0], sizes = [16, 32], strides = [1, 1]} : vector<16x96xf32> to vector<16x32xf32>
    %8 = vector.shape_cast %7 : vector<16x32xf32> to vector<2x8x32xf32>
    %9 = vector.extract_strided_slice %6 {offsets = [0, 32], sizes = [16, 32], strides = [1, 1]} : vector<16x96xf32> to vector<16x32xf32>
    %10 = vector.shape_cast %9 : vector<16x32xf32> to vector<2x8x32xf32>
    %11 = vector.extract_strided_slice %6 {offsets = [0, 64], sizes = [16, 32], strides = [1, 1]} : vector<16x96xf32> to vector<16x32xf32>
    %12 = vector.shape_cast %11 : vector<16x32xf32> to vector<2x8x32xf32>
    %13 = vector.extract_strided_slice %8 {offsets = [0, 0, 0], sizes = [2, 8, 8], strides = [1, 1, 1]} : vector<2x8x32xf32> to vector<2x8x8xf32>
    %14 = vector.extract_strided_slice %10 {offsets = [0, 0, 0], sizes = [2, 8, 8], strides = [1, 1, 1]} : vector<2x8x32xf32> to vector<2x8x8xf32>
    "tpu.trace_start"() <{level = 10 : i32, message = "bqd,bkd->bqk"}> : () -> ()
    %cst_6 = arith.constant dense<0.000000e+00> : vector<2x8x8xf32>
    %15 = tpu.matmul %13, %14, %cst_6 {dimension_numbers = #tpu.dot_dimension_numbers<[2], [2], [1], [1], [0, 0, 0, 1, 1, 1], [0], [0]>} : vector<2x8x8xf32>, vector<2x8x8xf32>, vector<2x8x8xf32> -> vector<2x8x8xf32>
    "tpu.trace_stop"() : () -> ()
    %16 = vector.extract_strided_slice %8 {offsets = [0, 0, 8], sizes = [2, 8, 8], strides = [1, 1, 1]} : vector<2x8x32xf32> to vector<2x8x8xf32>
    %17 = vector.extract_strided_slice %10 {offsets = [0, 0, 8], sizes = [2, 8, 8], strides = [1, 1, 1]} : vector<2x8x32xf32> to vector<2x8x8xf32>
    "tpu.trace_start"() <{level = 10 : i32, message = "bqd,bkd->bqk"}> : () -> ()
    %cst_7 = arith.constant dense<0.000000e+00> : vector<2x8x8xf32>
    %18 = tpu.matmul %16, %17, %cst_7 {dimension_numbers = #tpu.dot_dimension_numbers<[2], [2], [1], [1], [0, 0, 0, 1, 1, 1], [0], [0]>} : vector<2x8x8xf32>, vector<2x8x8xf32>, vector<2x8x8xf32> -> vector<2x8x8xf32>
    "tpu.trace_stop"() : () -> ()
    %19 = vector.extract_strided_slice %8 {offsets = [0, 0, 16], sizes = [2, 8, 8], strides = [1, 1, 1]} : vector<2x8x32xf32> to vector<2x8x8xf32>
    %20 = vector.extract_strided_slice %10 {offsets = [0, 0, 16], sizes = [2, 8, 8], strides = [1, 1, 1]} : vector<2x8x32xf32> to vector<2x8x8xf32>
    "tpu.trace_start"() <{level = 10 : i32, message = "bqd,bkd->bqk"}> : () -> ()
    %cst_8 = arith.constant dense<0.000000e+00> : vector<2x8x8xf32>
    %21 = tpu.matmul %19, %20, %cst_8 {dimension_numbers = #tpu.dot_dimension_numbers<[2], [2], [1], [1], [0, 0, 0, 1, 1, 1], [0], [0]>} : vector<2x8x8xf32>, vector<2x8x8xf32>, vector<2x8x8xf32> -> vector<2x8x8xf32>
    "tpu.trace_stop"() : () -> ()
    %22 = vector.extract_strided_slice %8 {offsets = [0, 0, 24], sizes = [2, 8, 8], strides = [1, 1, 1]} : vector<2x8x32xf32> to vector<2x8x8xf32>
    %23 = vector.extract_strided_slice %10 {offsets = [0, 0, 24], sizes = [2, 8, 8], strides = [1, 1, 1]} : vector<2x8x32xf32> to vector<2x8x8xf32>
    "tpu.trace_start"() <{level = 10 : i32, message = "bqd,bkd->bqk"}> : () -> ()
    %cst_9 = arith.constant dense<0.000000e+00> : vector<2x8x8xf32>
    %24 = tpu.matmul %22, %23, %cst_9 {dimension_numbers = #tpu.dot_dimension_numbers<[2], [2], [1], [1], [0, 0, 0, 1, 1, 1], [0], [0]>} : vector<2x8x8xf32>, vector<2x8x8xf32>, vector<2x8x8xf32> -> vector<2x8x8xf32>
    "tpu.trace_stop"() : () -> ()
    %25 = tpu.concatenate %15, %18, %21, %24 in 0 : vector<2x8x8xf32>, vector<2x8x8xf32>, vector<2x8x8xf32>, vector<2x8x8xf32> -> vector<8x8x8xf32>
    %cst_10 = arith.constant dense<0xFF800000> : vector<8x8xf32>
    %26 = vector.multi_reduction <maximumf>, %25, %cst_10 [2] : vector<8x8x8xf32> to vector<8x8xf32>
    %27 = vector.shape_cast %26 : vector<8x8xf32> to vector<8x8x1xf32>
    %28 = vector.broadcast %27 : vector<8x8x1xf32> to vector<8x8x8xf32>
    %29 = arith.subf %25, %28 : vector<8x8x8xf32>
    %30 = math.exp %29 : vector<8x8x8xf32>
    %cst_11 = arith.constant dense<0.000000e+00> : vector<8x8xf32>
    %31 = vector.multi_reduction <add>, %30, %cst_11 [2] : vector<8x8x8xf32> to vector<8x8xf32>
    %32 = vector.shape_cast %31 : vector<8x8xf32> to vector<8x8x1xf32>
    %33 = tpu.reciprocal %32 {approx = true} : vector<8x8x1xf32> -> vector<8x8x1xf32>
    %34 = vector.broadcast %33 : vector<8x8x1xf32> to vector<8x8x8xf32>
    %35 = arith.mulf %30, %34 : vector<8x8x8xf32>
    %36 = vector.extract_strided_slice %35 {offsets = [0, 0, 0], sizes = [2, 8, 8], strides = [1, 1, 1]} : vector<8x8x8xf32> to vector<2x8x8xf32>
    %37 = vector.extract_strided_slice %12 {offsets = [0, 0, 0], sizes = [2, 8, 8], strides = [1, 1, 1]} : vector<2x8x32xf32> to vector<2x8x8xf32>
    "tpu.trace_start"() <{level = 10 : i32, message = "bqk,bkd->bqd"}> : () -> ()
    %cst_12 = arith.constant dense<0.000000e+00> : vector<2x8x8xf32>
    %38 = tpu.matmul %36, %37, %cst_12 {dimension_numbers = #tpu.dot_dimension_numbers<[2], [1], [1], [2], [0, 0, 0, 1, 1, 2], [0], [0]>} : vector<2x8x8xf32>, vector<2x8x8xf32>, vector<2x8x8xf32> -> vector<2x8x8xf32>
    "tpu.trace_stop"() : () -> ()
    %39 = vector.extract_strided_slice %35 {offsets = [2, 0, 0], sizes = [2, 8, 8], strides = [1, 1, 1]} : vector<8x8x8xf32> to vector<2x8x8xf32>
    %40 = vector.extract_strided_slice %12 {offsets = [0, 0, 8], sizes = [2, 8, 8], strides = [1, 1, 1]} : vector<2x8x32xf32> to vector<2x8x8xf32>
    "tpu.trace_start"() <{level = 10 : i32, message = "bqk,bkd->bqd"}> : () -> ()
    %cst_13 = arith.constant dense<0.000000e+00> : vector<2x8x8xf32>
    %41 = tpu.matmul %39, %40, %cst_13 {dimension_numbers = #tpu.dot_dimension_numbers<[2], [1], [1], [2], [0, 0, 0, 1, 1, 2], [0], [0]>} : vector<2x8x8xf32>, vector<2x8x8xf32>, vector<2x8x8xf32> -> vector<2x8x8xf32>
    "tpu.trace_stop"() : () -> ()
    %42 = vector.extract_strided_slice %35 {offsets = [4, 0, 0], sizes = [2, 8, 8], strides = [1, 1, 1]} : vector<8x8x8xf32> to vector<2x8x8xf32>
    %43 = vector.extract_strided_slice %12 {offsets = [0, 0, 16], sizes = [2, 8, 8], strides = [1, 1, 1]} : vector<2x8x32xf32> to vector<2x8x8xf32>
    "tpu.trace_start"() <{level = 10 : i32, message = "bqk,bkd->bqd"}> : () -> ()
    %cst_14 = arith.constant dense<0.000000e+00> : vector<2x8x8xf32>
    %44 = tpu.matmul %42, %43, %cst_14 {dimension_numbers = #tpu.dot_dimension_numbers<[2], [1], [1], [2], [0, 0, 0, 1, 1, 2], [0], [0]>} : vector<2x8x8xf32>, vector<2x8x8xf32>, vector<2x8x8xf32> -> vector<2x8x8xf32>
    "tpu.trace_stop"() : () -> ()
    %45 = vector.extract_strided_slice %35 {offsets = [6, 0, 0], sizes = [2, 8, 8], strides = [1, 1, 1]} : vector<8x8x8xf32> to vector<2x8x8xf32>
    %46 = vector.extract_strided_slice %12 {offsets = [0, 0, 24], sizes = [2, 8, 8], strides = [1, 1, 1]} : vector<2x8x32xf32> to vector<2x8x8xf32>
    "tpu.trace_start"() <{level = 10 : i32, message = "bqk,bkd->bqd"}> : () -> ()
    %cst_15 = arith.constant dense<0.000000e+00> : vector<2x8x8xf32>
    %47 = tpu.matmul %45, %46, %cst_15 {dimension_numbers = #tpu.dot_dimension_numbers<[2], [1], [1], [2], [0, 0, 0, 1, 1, 2], [0], [0]>} : vector<2x8x8xf32>, vector<2x8x8xf32>, vector<2x8x8xf32> -> vector<2x8x8xf32>
    "tpu.trace_stop"() : () -> ()
    %48 = tpu.concatenate %38, %41, %44, %47 in 2 : vector<2x8x8xf32>, vector<2x8x8xf32>, vector<2x8x8xf32>, vector<2x8x8xf32> -> vector<2x8x32xf32>
    %49 = vector.shape_cast %48 : vector<2x8x32xf32> to vector<16x32xf32>
    %c0_16 = arith.constant 0 : index
    %c0_17 = arith.constant 0 : index
    %c0_18 = arith.constant 0 : index
    %50 = vector.load %arg3[%c0_16, %c0_17, %c0_18] : memref<2x32x32xf32, #tpu.memory_space<vmem>>, vector<1x32x32xf32>
    %51 = vector.shape_cast %50 : vector<1x32x32xf32> to vector<32x32xf32>
    %cst_19 = arith.constant dense<0.000000e+00> : vector<16x32xf32>
    %52 = tpu.matmul %49, %51, %cst_19 {dimension_numbers = #tpu.dot_dimension_numbers<[1], [0], [0], [1], [0, 0, 1, 1], [], []>} : vector<16x32xf32>, vector<32x32xf32>, vector<16x32xf32> -> vector<16x32xf32>
    %c0_20 = arith.constant 0 : index
    %c0_21 = arith.constant 0 : index
    %53 = vector.load %arg4[%c0_20, %c0_21] : memref<2x32xf32, #tpu.memory_space<vmem>>, vector<1x32xf32>
    %54 = vector.broadcast %53 : vector<1x32xf32> to vector<16x32xf32>
    %55 = arith.addf %52, %54 : vector<16x32xf32>
    %56 = arith.addf %0, %55 : vector<16x32xf32>
    %c0_22 = arith.constant 0 : index
    %c0_23 = arith.constant 0 : index
    %57 = vector.load %arg9[%c0_22, %c0_23] : memref<2x32xf32, #tpu.memory_space<vmem>>, vector<1x32xf32>
    %c0_24 = arith.constant 0 : index
    %c0_25 = arith.constant 0 : index
    %58 = vector.load %arg10[%c0_24, %c0_25] : memref<2x32xf32, #tpu.memory_space<vmem>>, vector<1x32xf32>
    %cst_26 = arith.constant dense<0.000000e+00> : vector<16xf32>
    %59 = vector.multi_reduction <add>, %56, %cst_26 [1] : vector<16x32xf32> to vector<16xf32>
    %60 = vector.shape_cast %59 : vector<16xf32> to vector<16x1xf32>
    %cst_27 = arith.constant 3.200000e+01 : f32
    %61 = vector.broadcast %cst_27 : f32 to vector<16x1xf32>
    %62 = arith.divf %60, %61 : vector<16x1xf32>
    %63 = vector.broadcast %62 : vector<16x1xf32> to vector<16x32xf32>
    %64 = arith.subf %56, %63 : vector<16x32xf32>
    %65 = arith.mulf %64, %64 : vector<16x32xf32>
    %cst_28 = arith.constant dense<0.000000e+00> : vector<16xf32>
    %66 = vector.multi_reduction <add>, %65, %cst_28 [1] : vector<16x32xf32> to vector<16xf32>
    %67 = vector.shape_cast %66 : vector<16xf32> to vector<16x1xf32>
    %cst_29 = arith.constant 3.200000e+01 : f32
    %68 = vector.broadcast %cst_29 : f32 to vector<16x1xf32>
    %69 = arith.divf %67, %68 : vector<16x1xf32>
    %cst_30 = arith.constant 9.99999974E-6 : f32
    %70 = vector.broadcast %cst_30 : f32 to vector<16x1xf32>
    %71 = arith.addf %69, %70 : vector<16x1xf32>
    %72 = math.rsqrt %71 : vector<16x1xf32>
    %73 = vector.broadcast %72 : vector<16x1xf32> to vector<16x32xf32>
    %74 = arith.mulf %64, %73 : vector<16x32xf32>
    %75 = vector.broadcast %57 : vector<1x32xf32> to vector<16x32xf32>
    %76 = arith.mulf %74, %75 : vector<16x32xf32>
    %77 = vector.broadcast %58 : vector<1x32xf32> to vector<16x32xf32>
    %78 = arith.addf %76, %77 : vector<16x32xf32>
    %c0_31 = arith.constant 0 : index
    %c0_32 = arith.constant 0 : index
    %c0_33 = arith.constant 0 : index
    %79 = vector.load %arg5[%c0_31, %c0_32, %c0_33] : memref<2x32x64xf32, #tpu.memory_space<vmem>>, vector<1x32x64xf32>
    %80 = vector.shape_cast %79 : vector<1x32x64xf32> to vector<32x64xf32>
    %cst_34 = arith.constant dense<0.000000e+00> : vector<16x64xf32>
    %81 = tpu.matmul %78, %80, %cst_34 {dimension_numbers = #tpu.dot_dimension_numbers<[1], [0], [0], [1], [0, 0, 1, 1], [], []>} : vector<16x32xf32>, vector<32x64xf32>, vector<16x64xf32> -> vector<16x64xf32>
    %c0_35 = arith.constant 0 : index
    %c0_36 = arith.constant 0 : index
    %82 = vector.load %arg6[%c0_35, %c0_36] : memref<2x64xf32, #tpu.memory_space<vmem>>, vector<1x64xf32>
    %83 = vector.broadcast %82 : vector<1x64xf32> to vector<16x64xf32>
    %84 = arith.addf %81, %83 : vector<16x64xf32>
    %cst_37 = arith.constant 0.000000e+00 : f32
    %85 = vector.broadcast %cst_37 : f32 to vector<16x64xf32>
    %86 = arith.maximumf %84, %85 : vector<16x64xf32>
    %c0_38 = arith.constant 0 : index
    %c0_39 = arith.constant 0 : index
    %c0_40 = arith.constant 0 : index
    %87 = vector.load %arg7[%c0_38, %c0_39, %c0_40] : memref<2x64x32xf32, #tpu.memory_space<vmem>>, vector<1x64x32xf32>
    %88 = vector.shape_cast %87 : vector<1x64x32xf32> to vector<64x32xf32>
    %cst_41 = arith.constant dense<0.000000e+00> : vector<16x32xf32>
    %89 = tpu.matmul %86, %88, %cst_41 {dimension_numbers = #tpu.dot_dimension_numbers<[1], [0], [0], [1], [0, 0, 1, 1], [], []>} : vector<16x64xf32>, vector<64x32xf32>, vector<16x32xf32> -> vector<16x32xf32>
    %c0_42 = arith.constant 0 : index
    %c0_43 = arith.constant 0 : index
    %90 = vector.load %arg8[%c0_42, %c0_43] : memref<2x32xf32, #tpu.memory_space<vmem>>, vector<1x32xf32>
    %91 = vector.broadcast %90 : vector<1x32xf32> to vector<16x32xf32>
    %92 = arith.addf %89, %91 : vector<16x32xf32>
    %93 = arith.addf %78, %92 : vector<16x32xf32>
    %c0_44 = arith.constant 0 : index
    %c0_45 = arith.constant 0 : index
    %94 = vector.load %arg11[%c0_44, %c0_45] : memref<2x32xf32, #tpu.memory_space<vmem>>, vector<1x32xf32>
    %c0_46 = arith.constant 0 : index
    %c0_47 = arith.constant 0 : index
    %95 = vector.load %arg12[%c0_46, %c0_47] : memref<2x32xf32, #tpu.memory_space<vmem>>, vector<1x32xf32>
    %cst_48 = arith.constant dense<0.000000e+00> : vector<16xf32>
    %96 = vector.multi_reduction <add>, %93, %cst_48 [1] : vector<16x32xf32> to vector<16xf32>
    %97 = vector.shape_cast %96 : vector<16xf32> to vector<16x1xf32>
    %cst_49 = arith.constant 3.200000e+01 : f32
    %98 = vector.broadcast %cst_49 : f32 to vector<16x1xf32>
    %99 = arith.divf %97, %98 : vector<16x1xf32>
    %100 = vector.broadcast %99 : vector<16x1xf32> to vector<16x32xf32>
    %101 = arith.subf %93, %100 : vector<16x32xf32>
    %102 = arith.mulf %101, %101 : vector<16x32xf32>
    %cst_50 = arith.constant dense<0.000000e+00> : vector<16xf32>
    %103 = vector.multi_reduction <add>, %102, %cst_50 [1] : vector<16x32xf32> to vector<16xf32>
    %104 = vector.shape_cast %103 : vector<16xf32> to vector<16x1xf32>
    %cst_51 = arith.constant 3.200000e+01 : f32
    %105 = vector.broadcast %cst_51 : f32 to vector<16x1xf32>
    %106 = arith.divf %104, %105 : vector<16x1xf32>
    %cst_52 = arith.constant 9.99999974E-6 : f32
    %107 = vector.broadcast %cst_52 : f32 to vector<16x1xf32>
    %108 = arith.addf %106, %107 : vector<16x1xf32>
    %109 = math.rsqrt %108 : vector<16x1xf32>
    %110 = vector.broadcast %109 : vector<16x1xf32> to vector<16x32xf32>
    %111 = arith.mulf %101, %110 : vector<16x32xf32>
    %112 = vector.broadcast %94 : vector<1x32xf32> to vector<16x32xf32>
    %113 = arith.mulf %111, %112 : vector<16x32xf32>
    %114 = vector.broadcast %95 : vector<1x32xf32> to vector<16x32xf32>
    %115 = arith.addf %113, %114 : vector<16x32xf32>
    %c1 = arith.constant 1 : index
    %c0_53 = arith.constant 0 : index
    %c0_54 = arith.constant 0 : index
    %116 = vector.load %arg1[%c1, %c0_53, %c0_54] : memref<2x32x96xf32, #tpu.memory_space<vmem>>, vector<1x32x96xf32>
    %117 = vector.shape_cast %116 : vector<1x32x96xf32> to vector<32x96xf32>
    %cst_55 = arith.constant dense<0.000000e+00> : vector<16x96xf32>
    %118 = tpu.matmul %115, %117, %cst_55 {dimension_numbers = #tpu.dot_dimension_numbers<[1], [0], [0], [1], [0, 0, 1, 1], [], []>} : vector<16x32xf32>, vector<32x96xf32>, vector<16x96xf32> -> vector<16x96xf32>
    %c1_56 = arith.constant 1 : index
    %c0_57 = arith.constant 0 : index
    %119 = vector.load %arg2[%c1_56, %c0_57] : memref<2x96xf32, #tpu.memory_space<vmem>>, vector<1x96xf32>
    %120 = vector.broadcast %119 : vector<1x96xf32> to vector<16x96xf32>
    %121 = arith.addf %118, %120 : vector<16x96xf32>
    %122 = vector.extract_strided_slice %121 {offsets = [0, 0], sizes = [16, 32], strides = [1, 1]} : vector<16x96xf32> to vector<16x32xf32>
    %123 = vector.shape_cast %122 : vector<16x32xf32> to vector<2x8x32xf32>
    %124 = vector.extract_strided_slice %121 {offsets = [0, 32], sizes = [16, 32], strides = [1, 1]} : vector<16x96xf32> to vector<16x32xf32>
    %125 = vector.shape_cast %124 : vector<16x32xf32> to vector<2x8x32xf32>
    %126 = vector.extract_strided_slice %121 {offsets = [0, 64], sizes = [16, 32], strides = [1, 1]} : vector<16x96xf32> to vector<16x32xf32>
    %127 = vector.shape_cast %126 : vector<16x32xf32> to vector<2x8x32xf32>
    %128 = vector.extract_strided_slice %123 {offsets = [0, 0, 0], sizes = [2, 8, 8], strides = [1, 1, 1]} : vector<2x8x32xf32> to vector<2x8x8xf32>
    %129 = vector.extract_strided_slice %125 {offsets = [0, 0, 0], sizes = [2, 8, 8], strides = [1, 1, 1]} : vector<2x8x32xf32> to vector<2x8x8xf32>
    "tpu.trace_start"() <{level = 10 : i32, message = "bqd,bkd->bqk"}> : () -> ()
    %cst_58 = arith.constant dense<0.000000e+00> : vector<2x8x8xf32>
    %130 = tpu.matmul %128, %129, %cst_58 {dimension_numbers = #tpu.dot_dimension_numbers<[2], [2], [1], [1], [0, 0, 0, 1, 1, 1], [0], [0]>} : vector<2x8x8xf32>, vector<2x8x8xf32>, vector<2x8x8xf32> -> vector<2x8x8xf32>
    "tpu.trace_stop"() : () -> ()
    %131 = vector.extract_strided_slice %123 {offsets = [0, 0, 8], sizes = [2, 8, 8], strides = [1, 1, 1]} : vector<2x8x32xf32> to vector<2x8x8xf32>
    %132 = vector.extract_strided_slice %125 {offsets = [0, 0, 8], sizes = [2, 8, 8], strides = [1, 1, 1]} : vector<2x8x32xf32> to vector<2x8x8xf32>
    "tpu.trace_start"() <{level = 10 : i32, message = "bqd,bkd->bqk"}> : () -> ()
    %cst_59 = arith.constant dense<0.000000e+00> : vector<2x8x8xf32>
    %133 = tpu.matmul %131, %132, %cst_59 {dimension_numbers = #tpu.dot_dimension_numbers<[2], [2], [1], [1], [0, 0, 0, 1, 1, 1], [0], [0]>} : vector<2x8x8xf32>, vector<2x8x8xf32>, vector<2x8x8xf32> -> vector<2x8x8xf32>
    "tpu.trace_stop"() : () -> ()
    %134 = vector.extract_strided_slice %123 {offsets = [0, 0, 16], sizes = [2, 8, 8], strides = [1, 1, 1]} : vector<2x8x32xf32> to vector<2x8x8xf32>
    %135 = vector.extract_strided_slice %125 {offsets = [0, 0, 16], sizes = [2, 8, 8], strides = [1, 1, 1]} : vector<2x8x32xf32> to vector<2x8x8xf32>
    "tpu.trace_start"() <{level = 10 : i32, message = "bqd,bkd->bqk"}> : () -> ()
    %cst_60 = arith.constant dense<0.000000e+00> : vector<2x8x8xf32>
    %136 = tpu.matmul %134, %135, %cst_60 {dimension_numbers = #tpu.dot_dimension_numbers<[2], [2], [1], [1], [0, 0, 0, 1, 1, 1], [0], [0]>} : vector<2x8x8xf32>, vector<2x8x8xf32>, vector<2x8x8xf32> -> vector<2x8x8xf32>
    "tpu.trace_stop"() : () -> ()
    %137 = vector.extract_strided_slice %123 {offsets = [0, 0, 24], sizes = [2, 8, 8], strides = [1, 1, 1]} : vector<2x8x32xf32> to vector<2x8x8xf32>
    %138 = vector.extract_strided_slice %125 {offsets = [0, 0, 24], sizes = [2, 8, 8], strides = [1, 1, 1]} : vector<2x8x32xf32> to vector<2x8x8xf32>
    "tpu.trace_start"() <{level = 10 : i32, message = "bqd,bkd->bqk"}> : () -> ()
    %cst_61 = arith.constant dense<0.000000e+00> : vector<2x8x8xf32>
    %139 = tpu.matmul %137, %138, %cst_61 {dimension_numbers = #tpu.dot_dimension_numbers<[2], [2], [1], [1], [0, 0, 0, 1, 1, 1], [0], [0]>} : vector<2x8x8xf32>, vector<2x8x8xf32>, vector<2x8x8xf32> -> vector<2x8x8xf32>
    "tpu.trace_stop"() : () -> ()
    %140 = tpu.concatenate %130, %133, %136, %139 in 0 : vector<2x8x8xf32>, vector<2x8x8xf32>, vector<2x8x8xf32>, vector<2x8x8xf32> -> vector<8x8x8xf32>
    %cst_62 = arith.constant dense<0xFF800000> : vector<8x8xf32>
    %141 = vector.multi_reduction <maximumf>, %140, %cst_62 [2] : vector<8x8x8xf32> to vector<8x8xf32>
    %142 = vector.shape_cast %141 : vector<8x8xf32> to vector<8x8x1xf32>
    %143 = vector.broadcast %142 : vector<8x8x1xf32> to vector<8x8x8xf32>
    %144 = arith.subf %140, %143 : vector<8x8x8xf32>
    %145 = math.exp %144 : vector<8x8x8xf32>
    %cst_63 = arith.constant dense<0.000000e+00> : vector<8x8xf32>
    %146 = vector.multi_reduction <add>, %145, %cst_63 [2] : vector<8x8x8xf32> to vector<8x8xf32>
    %147 = vector.shape_cast %146 : vector<8x8xf32> to vector<8x8x1xf32>
    %148 = vector.broadcast %147 : vector<8x8x1xf32> to vector<8x8x8xf32>
    %149 = arith.divf %145, %148 : vector<8x8x8xf32>
    %150 = vector.shape_cast %149 : vector<8x8x8xf32> to vector<4x2x8x8xf32>
    %cst_64 = arith.constant dense<0.000000e+00> : vector<2x8x8xf32>
    %151 = vector.multi_reduction <add>, %150, %cst_64 [0] : vector<4x2x8x8xf32> to vector<2x8x8xf32>
    %cst_65 = arith.constant 2.500000e-01 : f32
    %152 = vector.broadcast %cst_65 : f32 to vector<2x8x8xf32>
    %153 = arith.mulf %151, %152 : vector<2x8x8xf32>
    %154 = vector.extract_strided_slice %149 {offsets = [0, 0, 0], sizes = [2, 8, 8], strides = [1, 1, 1]} : vector<8x8x8xf32> to vector<2x8x8xf32>
    %155 = vector.extract_strided_slice %127 {offsets = [0, 0, 0], sizes = [2, 8, 8], strides = [1, 1, 1]} : vector<2x8x32xf32> to vector<2x8x8xf32>
    "tpu.trace_start"() <{level = 10 : i32, message = "bqk,bkd->bqd"}> : () -> ()
    %cst_66 = arith.constant dense<0.000000e+00> : vector<2x8x8xf32>
    %156 = tpu.matmul %154, %155, %cst_66 {dimension_numbers = #tpu.dot_dimension_numbers<[2], [1], [1], [2], [0, 0, 0, 1, 1, 2], [0], [0]>} : vector<2x8x8xf32>, vector<2x8x8xf32>, vector<2x8x8xf32> -> vector<2x8x8xf32>
    "tpu.trace_stop"() : () -> ()
    %157 = vector.extract_strided_slice %149 {offsets = [2, 0, 0], sizes = [2, 8, 8], strides = [1, 1, 1]} : vector<8x8x8xf32> to vector<2x8x8xf32>
    %158 = vector.extract_strided_slice %127 {offsets = [0, 0, 8], sizes = [2, 8, 8], strides = [1, 1, 1]} : vector<2x8x32xf32> to vector<2x8x8xf32>
    "tpu.trace_start"() <{level = 10 : i32, message = "bqk,bkd->bqd"}> : () -> ()
    %cst_67 = arith.constant dense<0.000000e+00> : vector<2x8x8xf32>
    %159 = tpu.matmul %157, %158, %cst_67 {dimension_numbers = #tpu.dot_dimension_numbers<[2], [1], [1], [2], [0, 0, 0, 1, 1, 2], [0], [0]>} : vector<2x8x8xf32>, vector<2x8x8xf32>, vector<2x8x8xf32> -> vector<2x8x8xf32>
    "tpu.trace_stop"() : () -> ()
    %160 = vector.extract_strided_slice %149 {offsets = [4, 0, 0], sizes = [2, 8, 8], strides = [1, 1, 1]} : vector<8x8x8xf32> to vector<2x8x8xf32>
    %161 = vector.extract_strided_slice %127 {offsets = [0, 0, 16], sizes = [2, 8, 8], strides = [1, 1, 1]} : vector<2x8x32xf32> to vector<2x8x8xf32>
    "tpu.trace_start"() <{level = 10 : i32, message = "bqk,bkd->bqd"}> : () -> ()
    %cst_68 = arith.constant dense<0.000000e+00> : vector<2x8x8xf32>
    %162 = tpu.matmul %160, %161, %cst_68 {dimension_numbers = #tpu.dot_dimension_numbers<[2], [1], [1], [2], [0, 0, 0, 1, 1, 2], [0], [0]>} : vector<2x8x8xf32>, vector<2x8x8xf32>, vector<2x8x8xf32> -> vector<2x8x8xf32>
    "tpu.trace_stop"() : () -> ()
    %163 = vector.extract_strided_slice %149 {offsets = [6, 0, 0], sizes = [2, 8, 8], strides = [1, 1, 1]} : vector<8x8x8xf32> to vector<2x8x8xf32>
    %164 = vector.extract_strided_slice %127 {offsets = [0, 0, 24], sizes = [2, 8, 8], strides = [1, 1, 1]} : vector<2x8x32xf32> to vector<2x8x8xf32>
    "tpu.trace_start"() <{level = 10 : i32, message = "bqk,bkd->bqd"}> : () -> ()
    %cst_69 = arith.constant dense<0.000000e+00> : vector<2x8x8xf32>
    %165 = tpu.matmul %163, %164, %cst_69 {dimension_numbers = #tpu.dot_dimension_numbers<[2], [1], [1], [2], [0, 0, 0, 1, 1, 2], [0], [0]>} : vector<2x8x8xf32>, vector<2x8x8xf32>, vector<2x8x8xf32> -> vector<2x8x8xf32>
    "tpu.trace_stop"() : () -> ()
    %166 = tpu.concatenate %156, %159, %162, %165 in 2 : vector<2x8x8xf32>, vector<2x8x8xf32>, vector<2x8x8xf32>, vector<2x8x8xf32> -> vector<2x8x32xf32>
    %167 = vector.shape_cast %166 : vector<2x8x32xf32> to vector<16x32xf32>
    %c1_70 = arith.constant 1 : index
    %c0_71 = arith.constant 0 : index
    %c0_72 = arith.constant 0 : index
    %168 = vector.load %arg3[%c1_70, %c0_71, %c0_72] : memref<2x32x32xf32, #tpu.memory_space<vmem>>, vector<1x32x32xf32>
    %169 = vector.shape_cast %168 : vector<1x32x32xf32> to vector<32x32xf32>
    %cst_73 = arith.constant dense<0.000000e+00> : vector<16x32xf32>
    %170 = tpu.matmul %167, %169, %cst_73 {dimension_numbers = #tpu.dot_dimension_numbers<[1], [0], [0], [1], [0, 0, 1, 1], [], []>} : vector<16x32xf32>, vector<32x32xf32>, vector<16x32xf32> -> vector<16x32xf32>
    %c1_74 = arith.constant 1 : index
    %c0_75 = arith.constant 0 : index
    %171 = vector.load %arg4[%c1_74, %c0_75] : memref<2x32xf32, #tpu.memory_space<vmem>>, vector<1x32xf32>
    %172 = vector.broadcast %171 : vector<1x32xf32> to vector<16x32xf32>
    %173 = arith.addf %170, %172 : vector<16x32xf32>
    %174 = arith.addf %115, %173 : vector<16x32xf32>
    %c1_76 = arith.constant 1 : index
    %c0_77 = arith.constant 0 : index
    %175 = vector.load %arg9[%c1_76, %c0_77] : memref<2x32xf32, #tpu.memory_space<vmem>>, vector<1x32xf32>
    %c1_78 = arith.constant 1 : index
    %c0_79 = arith.constant 0 : index
    %176 = vector.load %arg10[%c1_78, %c0_79] : memref<2x32xf32, #tpu.memory_space<vmem>>, vector<1x32xf32>
    %cst_80 = arith.constant dense<0.000000e+00> : vector<16xf32>
    %177 = vector.multi_reduction <add>, %174, %cst_80 [1] : vector<16x32xf32> to vector<16xf32>
    %178 = vector.shape_cast %177 : vector<16xf32> to vector<16x1xf32>
    %cst_81 = arith.constant 3.200000e+01 : f32
    %179 = vector.broadcast %cst_81 : f32 to vector<16x1xf32>
    %180 = arith.divf %178, %179 : vector<16x1xf32>
    %181 = vector.broadcast %180 : vector<16x1xf32> to vector<16x32xf32>
    %182 = arith.subf %174, %181 : vector<16x32xf32>
    %183 = arith.mulf %182, %182 : vector<16x32xf32>
    %cst_82 = arith.constant dense<0.000000e+00> : vector<16xf32>
    %184 = vector.multi_reduction <add>, %183, %cst_82 [1] : vector<16x32xf32> to vector<16xf32>
    %185 = vector.shape_cast %184 : vector<16xf32> to vector<16x1xf32>
    %cst_83 = arith.constant 3.200000e+01 : f32
    %186 = vector.broadcast %cst_83 : f32 to vector<16x1xf32>
    %187 = arith.divf %185, %186 : vector<16x1xf32>
    %cst_84 = arith.constant 9.99999974E-6 : f32
    %188 = vector.broadcast %cst_84 : f32 to vector<16x1xf32>
    %189 = arith.addf %187, %188 : vector<16x1xf32>
    %190 = math.rsqrt %189 : vector<16x1xf32>
    %191 = vector.broadcast %190 : vector<16x1xf32> to vector<16x32xf32>
    %192 = arith.mulf %182, %191 : vector<16x32xf32>
    %193 = vector.broadcast %175 : vector<1x32xf32> to vector<16x32xf32>
    %194 = arith.mulf %192, %193 : vector<16x32xf32>
    %195 = vector.broadcast %176 : vector<1x32xf32> to vector<16x32xf32>
    %196 = arith.addf %194, %195 : vector<16x32xf32>
    %c1_85 = arith.constant 1 : index
    %c0_86 = arith.constant 0 : index
    %c0_87 = arith.constant 0 : index
    %197 = vector.load %arg5[%c1_85, %c0_86, %c0_87] : memref<2x32x64xf32, #tpu.memory_space<vmem>>, vector<1x32x64xf32>
    %198 = vector.shape_cast %197 : vector<1x32x64xf32> to vector<32x64xf32>
    %cst_88 = arith.constant dense<0.000000e+00> : vector<16x64xf32>
    %199 = tpu.matmul %196, %198, %cst_88 {dimension_numbers = #tpu.dot_dimension_numbers<[1], [0], [0], [1], [0, 0, 1, 1], [], []>} : vector<16x32xf32>, vector<32x64xf32>, vector<16x64xf32> -> vector<16x64xf32>
    %c1_89 = arith.constant 1 : index
    %c0_90 = arith.constant 0 : index
    %200 = vector.load %arg6[%c1_89, %c0_90] : memref<2x64xf32, #tpu.memory_space<vmem>>, vector<1x64xf32>
    %201 = vector.broadcast %200 : vector<1x64xf32> to vector<16x64xf32>
    %202 = arith.addf %199, %201 : vector<16x64xf32>
    %cst_91 = arith.constant 0.000000e+00 : f32
    %203 = vector.broadcast %cst_91 : f32 to vector<16x64xf32>
    %204 = arith.maximumf %202, %203 : vector<16x64xf32>
    %c1_92 = arith.constant 1 : index
    %c0_93 = arith.constant 0 : index
    %c0_94 = arith.constant 0 : index
    %205 = vector.load %arg7[%c1_92, %c0_93, %c0_94] : memref<2x64x32xf32, #tpu.memory_space<vmem>>, vector<1x64x32xf32>
    %206 = vector.shape_cast %205 : vector<1x64x32xf32> to vector<64x32xf32>
    %cst_95 = arith.constant dense<0.000000e+00> : vector<16x32xf32>
    %207 = tpu.matmul %204, %206, %cst_95 {dimension_numbers = #tpu.dot_dimension_numbers<[1], [0], [0], [1], [0, 0, 1, 1], [], []>} : vector<16x64xf32>, vector<64x32xf32>, vector<16x32xf32> -> vector<16x32xf32>
    %c1_96 = arith.constant 1 : index
    %c0_97 = arith.constant 0 : index
    %208 = vector.load %arg8[%c1_96, %c0_97] : memref<2x32xf32, #tpu.memory_space<vmem>>, vector<1x32xf32>
    %209 = vector.broadcast %208 : vector<1x32xf32> to vector<16x32xf32>
    %210 = arith.addf %207, %209 : vector<16x32xf32>
    %211 = arith.addf %196, %210 : vector<16x32xf32>
    %c1_98 = arith.constant 1 : index
    %c0_99 = arith.constant 0 : index
    %212 = vector.load %arg11[%c1_98, %c0_99] : memref<2x32xf32, #tpu.memory_space<vmem>>, vector<1x32xf32>
    %c1_100 = arith.constant 1 : index
    %c0_101 = arith.constant 0 : index
    %213 = vector.load %arg12[%c1_100, %c0_101] : memref<2x32xf32, #tpu.memory_space<vmem>>, vector<1x32xf32>
    %cst_102 = arith.constant dense<0.000000e+00> : vector<16xf32>
    %214 = vector.multi_reduction <add>, %211, %cst_102 [1] : vector<16x32xf32> to vector<16xf32>
    %215 = vector.shape_cast %214 : vector<16xf32> to vector<16x1xf32>
    %cst_103 = arith.constant 3.200000e+01 : f32
    %216 = vector.broadcast %cst_103 : f32 to vector<16x1xf32>
    %217 = arith.divf %215, %216 : vector<16x1xf32>
    %218 = vector.broadcast %217 : vector<16x1xf32> to vector<16x32xf32>
    %219 = arith.subf %211, %218 : vector<16x32xf32>
    %220 = arith.mulf %219, %219 : vector<16x32xf32>
    %cst_104 = arith.constant dense<0.000000e+00> : vector<16xf32>
    %221 = vector.multi_reduction <add>, %220, %cst_104 [1] : vector<16x32xf32> to vector<16xf32>
    %222 = vector.shape_cast %221 : vector<16xf32> to vector<16x1xf32>
    %cst_105 = arith.constant 3.200000e+01 : f32
    %223 = vector.broadcast %cst_105 : f32 to vector<16x1xf32>
    %224 = arith.divf %222, %223 : vector<16x1xf32>
    %cst_106 = arith.constant 9.99999974E-6 : f32
    %225 = vector.broadcast %cst_106 : f32 to vector<16x1xf32>
    %226 = arith.addf %224, %225 : vector<16x1xf32>
    %227 = math.rsqrt %226 : vector<16x1xf32>
    %228 = vector.broadcast %227 : vector<16x1xf32> to vector<16x32xf32>
    %229 = arith.mulf %219, %228 : vector<16x32xf32>
    %230 = vector.broadcast %212 : vector<1x32xf32> to vector<16x32xf32>
    %231 = arith.mulf %229, %230 : vector<16x32xf32>
    %232 = vector.broadcast %213 : vector<1x32xf32> to vector<16x32xf32>
    %233 = arith.addf %231, %232 : vector<16x32xf32>
    %c0_107 = arith.constant 0 : index
    %c0_108 = arith.constant 0 : index
    %234 = vector.load %arg13[%c0_107, %c0_108] : memref<1x32xf32, #tpu.memory_space<vmem>>, vector<1x32xf32>
    %c0_109 = arith.constant 0 : index
    %c0_110 = arith.constant 0 : index
    %235 = vector.load %arg14[%c0_109, %c0_110] : memref<1x32xf32, #tpu.memory_space<vmem>>, vector<1x32xf32>
    %cst_111 = arith.constant dense<0.000000e+00> : vector<16xf32>
    %236 = vector.multi_reduction <add>, %233, %cst_111 [1] : vector<16x32xf32> to vector<16xf32>
    %237 = vector.shape_cast %236 : vector<16xf32> to vector<16x1xf32>
    %cst_112 = arith.constant 3.200000e+01 : f32
    %238 = vector.broadcast %cst_112 : f32 to vector<16x1xf32>
    %239 = arith.divf %237, %238 : vector<16x1xf32>
    %240 = vector.broadcast %239 : vector<16x1xf32> to vector<16x32xf32>
    %241 = arith.subf %233, %240 : vector<16x32xf32>
    %242 = arith.mulf %241, %241 : vector<16x32xf32>
    %cst_113 = arith.constant dense<0.000000e+00> : vector<16xf32>
    %243 = vector.multi_reduction <add>, %242, %cst_113 [1] : vector<16x32xf32> to vector<16xf32>
    %244 = vector.shape_cast %243 : vector<16xf32> to vector<16x1xf32>
    %cst_114 = arith.constant 3.200000e+01 : f32
    %245 = vector.broadcast %cst_114 : f32 to vector<16x1xf32>
    %246 = arith.divf %244, %245 : vector<16x1xf32>
    %cst_115 = arith.constant 9.99999974E-6 : f32
    %247 = vector.broadcast %cst_115 : f32 to vector<16x1xf32>
    %248 = arith.addf %246, %247 : vector<16x1xf32>
    %249 = math.rsqrt %248 : vector<16x1xf32>
    %250 = vector.broadcast %249 : vector<16x1xf32> to vector<16x32xf32>
    %251 = arith.mulf %241, %250 : vector<16x32xf32>
    %252 = vector.broadcast %234 : vector<1x32xf32> to vector<16x32xf32>
    %253 = arith.mulf %251, %252 : vector<16x32xf32>
    %254 = vector.broadcast %235 : vector<1x32xf32> to vector<16x32xf32>
    %255 = arith.addf %253, %254 : vector<16x32xf32>
    %c0_116 = arith.constant 0 : index
    %c0_117 = arith.constant 0 : index
    %256 = vector.load %arg15[%c0_116, %c0_117] : memref<16x32xf32, #tpu.memory_space<vmem>>, vector<16x32xf32>
    tpu.vector_store %arg15[%c0_116, %c0_117], %255 {strides = array<i32>} : memref<16x32xf32, #tpu.memory_space<vmem>>, vector<16x32xf32>,
    %c0_118 = arith.constant 0 : index
    %c0_119 = arith.constant 0 : index
    %c0_120 = arith.constant 0 : index
    %257 = vector.load %arg16[%c0_118, %c0_119, %c0_120] : memref<2x8x8xf32, #tpu.memory_space<vmem>>, vector<2x8x8xf32>
    tpu.vector_store %arg16[%c0_118, %c0_119, %c0_120], %153 {strides = array<i32>} : memref<2x8x8xf32, #tpu.memory_space<vmem>>, vector<2x8x8xf32>,
    return
  }
}

</mosaic_0001>

<llo_original>
// kernel: tpu_custom_call.1
$region0: #{tpu_custom_call.1}
  #allocation0 [shape = 'u32[]', space=smem, size = 0x4, offset = 0x4, fixed_abs, tag = 'smem constant byte address 0x4 - core index']
  #allocation1 [shape = 'u32[144,128]{1,0:T(1,128)}', space=vmem, size = 0x12000, scoped, tag = 'internal scratch']
  %s0 = inlined_call_operand.hbm [shape: f32[16,32], index: 0, kind: input, shape index: {}]
  %s1 = inlined_call_operand.vmem [shape: f32[2,32,96], index: 1, kind: input, shape index: {}]
  %s2 = inlined_call_operand.vmem [shape: f32[2,96], index: 2, kind: input, shape index: {}]
  %s3 = inlined_call_operand.vmem [shape: f32[2,32,32], index: 3, kind: input, shape index: {}]
  %s4 = inlined_call_operand.vmem [shape: f32[2,32], index: 4, kind: input, shape index: {}]
  %s5 = inlined_call_operand.vmem [shape: f32[2,32,64], index: 5, kind: input, shape index: {}]
  %s6 = inlined_call_operand.vmem [shape: f32[2,64], index: 6, kind: input, shape index: {}]
  %s7 = inlined_call_operand.vmem [shape: f32[2,64,32], index: 7, kind: input, shape index: {}]
  %s8 = inlined_call_operand.vmem [shape: f32[2,32], index: 8, kind: input, shape index: {}]
  %s9 = inlined_call_operand.vmem [shape: f32[2,32], index: 9, kind: input, shape index: {}]
  %s10 = inlined_call_operand.vmem [shape: f32[2,32], index: 10, kind: input, shape index: {}]
  %s11 = inlined_call_operand.vmem [shape: f32[2,32], index: 11, kind: input, shape index: {}]
  %s12 = inlined_call_operand.vmem [shape: f32[2,32], index: 12, kind: input, shape index: {}]
  %s13 = inlined_call_operand.vmem [shape: f32[1,32], index: 13, kind: input, shape index: {}]
  %s14 = inlined_call_operand.vmem [shape: f32[1,32], index: 14, kind: input, shape index: {}]
  %s15 = inlined_call_operand.hbm [shape: f32[16,32], index: 15, kind: output, shape index: {0}]
  %s16 = inlined_call_operand.hbm [shape: f32[2,8,8], index: 16, kind: output, shape index: {1}]
  %17 = xla_tuple %s15, %s16
  %s18 = sld [smem:[#allocation0]]
  $region82: #{tpu_custom_call.1} parent=0
    _
  %s20 = ssub.s32 1, %s18
  %s21 = scalar_select 0, %s20, %s18
  $region1: #{tpu_custom_call.1} parent=0
    #allocation2 [shape = 'u8[8192]{0}', space=vmem, size = 0x2000, scoped, tag = 'input window, operand 0, single buffered']
    #allocation3 [shape = 's32[1]{0}', space=sflag, size = 0x4, scoped, tag = 'scoped memory for tpu_custom_call.1']
    #allocation4 [shape = 's32[1]{0}', space=sflag, size = 0x4, scoped, tag = 'scoped memory for tpu_custom_call.1']
    #allocation5 [shape = 'u8[8192]{0}', space=vmem, size = 0x2000, scoped, tag = 'output window, operand 0, single buffered']
    #allocation6 [shape = 'u8[8192]{0}', space=vmem, size = 0x2000, scoped, tag = 'output window, operand 1, single buffered']
    #allocation7 [shape = 's32[1]{0}', space=sflag, size = 0x4, scoped, tag = 'scoped memory for tpu_custom_call.1']
    %22 = vsyncpa [#allocation3], 0
    %23 = vsyncpa [#allocation4], 0
    %24 = vsyncpa [#allocation7], 0
    // Predicated region
    $region2: #{tpu_custom_call.1} parent=1 // pred_check
      _
    $region3: #{tpu_custom_call.1} parent=1 // pred_check_branch
      %26 = sbr.rel (0) target = $region5
    $region4: #{tpu_custom_call.1} parent=1 // pred_region
      %s28 = ssub.s32 256, 256
      %29 = vsyncadd [#allocation3], %s28
      %s30 = sshll.u32 [#allocation2], 4
      %s31 = int_to_ptr.vmem [resolvable:$true] %s30
      %36 = dma.hbm_to_vmem [thread:$0]  %s0, 256, %s31, [#allocation3], 128, 128, 8
    $region5: #{tpu_custom_call.1} parent=1 // pred_fallthru
      _
    // Predicated region
    $region6: #{tpu_custom_call.1} parent=1 // pred_check
      _
    $region7: #{tpu_custom_call.1} parent=1 // pred_check_branch
      %38 = sbr.rel (0) target = $region9
    $region8: #{tpu_custom_call.1} parent=1 // pred_region
      _
    $region9: #{tpu_custom_call.1} parent=1 // pred_fallthru
      _
    // Predicated region
    $region10: #{tpu_custom_call.1} parent=1 // pred_check
      _
    $region11: #{tpu_custom_call.1} parent=1 // pred_check_branch
      %40 = sbr.rel (0) target = $region13
    $region12: #{tpu_custom_call.1} parent=1 // pred_region
      _
    $region13: #{tpu_custom_call.1} parent=1 // pred_fallthru
      _
    // Predicated region
    $region14: #{tpu_custom_call.1} parent=1 // pred_check
      _
    $region15: #{tpu_custom_call.1} parent=1 // pred_check_branch
      %42 = sbr.rel (0) target = $region17
    $region16: #{tpu_custom_call.1} parent=1 // pred_region
      _
    $region17: #{tpu_custom_call.1} parent=1 // pred_fallthru
      _
    // Predicated region
    $region18: #{tpu_custom_call.1} parent=1 // pred_check
      _
    $region19: #{tpu_custom_call.1} parent=1 // pred_check_branch
      %44 = sbr.rel (0) target = $region21
    $region20: #{tpu_custom_call.1} parent=1 // pred_region
      _
    $region21: #{tpu_custom_call.1} parent=1 // pred_fallthru
      _
    // Predicated region
    $region22: #{tpu_custom_call.1} parent=1 // pred_check
      _
    $region23: #{tpu_custom_call.1} parent=1 // pred_check_branch
      %46 = sbr.rel (0) target = $region25
    $region24: #{tpu_custom_call.1} parent=1 // pred_region
      _
    $region25: #{tpu_custom_call.1} parent=1 // pred_fallthru
      _
    // Predicated region
    $region26: #{tpu_custom_call.1} parent=1 // pred_check
      _
    $region27: #{tpu_custom_call.1} parent=1 // pred_check_branch
      %48 = sbr.rel (0) target = $region29
    $region28: #{tpu_custom_call.1} parent=1 // pred_region
      _
    $region29: #{tpu_custom_call.1} parent=1 // pred_fallthru
      _
    // Predicated region
    $region30: #{tpu_custom_call.1} parent=1 // pred_check
      _
    $region31: #{tpu_custom_call.1} parent=1 // pred_check_branch
      %50 = sbr.rel (0) target = $region33
    $region32: #{tpu_custom_call.1} parent=1 // pred_region
      _
    $region33: #{tpu_custom_call.1} parent=1 // pred_fallthru
      _
    // Predicated region
    $region34: #{tpu_custom_call.1} parent=1 // pred_check
      _
    $region35: #{tpu_custom_call.1} parent=1 // pred_check_branch
      %52 = sbr.rel (0) target = $region37
    $region36: #{tpu_custom_call.1} parent=1 // pred_region
      _
    $region37: #{tpu_custom_call.1} parent=1 // pred_fallthru
      _
    // Predicated region
    $region38: #{tpu_custom_call.1} parent=1 // pred_check
      _
    $region39: #{tpu_custom_call.1} parent=1 // pred_check_branch
      %54 = sbr.rel (0) target = $region41
    $region40: #{tpu_custom_call.1} parent=1 // pred_region
      _
    $region41: #{tpu_custom_call.1} parent=1 // pred_fallthru
      _
    // Predicated region
    $region42: #{tpu_custom_call.1} parent=1 // pred_check
      _
    $region43: #{tpu_custom_call.1} parent=1 // pred_check_branch
      %56 = sbr.rel (0) target = $region45
    $region44: #{tpu_custom_call.1} parent=1 // pred_region
      _
    $region45: #{tpu_custom_call.1} parent=1 // pred_fallthru
      _
    // Predicated region
    $region46: #{tpu_custom_call.1} parent=1 // pred_check
      _
    $region47: #{tpu_custom_call.1} parent=1 // pred_check_branch
      %58 = sbr.rel (0) target = $region49
    $region48: #{tpu_custom_call.1} parent=1 // pred_region
      _
    $region49: #{tpu_custom_call.1} parent=1 // pred_fallthru
      _
    // Predicated region
    $region50: #{tpu_custom_call.1} parent=1 // pred_check
      _
    $region51: #{tpu_custom_call.1} parent=1 // pred_check_branch
      %60 = sbr.rel (0) target = $region53
    $region52: #{tpu_custom_call.1} parent=1 // pred_region
      _
    $region53: #{tpu_custom_call.1} parent=1 // pred_fallthru
      _
    // Predicated region
    $region54: #{tpu_custom_call.1} parent=1 // pred_check
      _
    $region55: #{tpu_custom_call.1} parent=1 // pred_check_branch
      %62 = sbr.rel (0) target = $region57
    $region56: #{tpu_custom_call.1} parent=1 // pred_region
      _
    $region57: #{tpu_custom_call.1} parent=1 // pred_fallthru
      _
    // Predicated region
    $region58: #{tpu_custom_call.1} parent=1 // pred_check
      _
    $region59: #{tpu_custom_call.1} parent=1 // pred_check_branch
      %64 = sbr.rel (0) target = $region61
    $region60: #{tpu_custom_call.1} parent=1 // pred_region
      _
    $region61: #{tpu_custom_call.1} parent=1 // pred_fallthru
      _
    // Predicated region
    $region62: #{tpu_custom_call.1} parent=1 // pred_check
      _
    $region63: #{tpu_custom_call.1} parent=1 // pred_check_branch
      %66 = sbr.rel (0) target = $region65
    $region64: #{tpu_custom_call.1} parent=1 // pred_region
      %67 = dma.done [#allocation3], 256
    $region65: #{tpu_custom_call.1} parent=1 // pred_fallthru
      _
    %v68 = vld [vmem:[#allocation2] sm:$0xff]
    %v69 = vld [vmem:[#allocation2 + $0x8] sm:$0xff]
    %v70 = vld [vmem:[%s1] sm:$0xff]
    %v71 = vld [vmem:[%s1 + $0x8] sm:$0xff]
    %v72 = vld [vmem:[%s1 + $0x10] sm:$0xff]
    %v73 = vld [vmem:[%s1 + $0x18] sm:$0xff]
    %v74 = vld [vmem:[%s2] sm:$0x1]
    %v75 = vlaneseq
    %v76 = vshrl.u32 %v75, 7
    %v77 = vsub.s32 0, %v76
    %v78 = vrot.slane %v74, %v77
    %vm79 = vcmask 261120
    %v81 = vsel %vm79, %v68, 0
    %v84 = vsel %vm79, %v69, 0
    %86 = vmatprep.subr.mxu0 0.0
    %87 = vmatpush1.msra.mxu0 0.0
    %88 = vmatprep.subr.mxu0 0.0
    %89 = vmatpush1.msra.mxu0 0.0
    %90 = vmatprep.subr.mxu0 0.0
    %91 = vmatpush1.msra.mxu0 0.0
    %92 = vmatprep.subr.mxu0 0.0
    %93 = vmatpush1.msra.mxu0 0.0
    %94 = vmatprep.subr.mxu0 0.0
    %95 = vmatpush1.msra.mxu0 0.0
    %96 = vmatprep.subr.mxu0 0.0
    %97 = vmatpush1.msra.mxu0 0.0
    %98 = vmatprep.subr.mxu0 0.0
    %99 = vmatpush1.msra.mxu0 0.0
    %100 = vmatprep.subr.mxu0 0.0
    %101 = vmatpush1.msra.mxu0 0.0
    %102 = vmatprep.subr.mxu0 0.0
    %103 = vmatpush1.msra.mxu0 0.0
    %104 = vmatprep.subr.mxu0 0.0
    %105 = vmatpush1.msra.mxu0 0.0
    %106 = vmatprep.subr.mxu0 0.0
    %107 = vmatpush1.msra.mxu0 0.0
    %108 = vmatprep.subr.mxu0 0.0
    %109 = vmatpush1.msra.mxu0 0.0
    %110 = vmatprep.subr.mxu0 0.0
    %111 = vmatpush1.msra.mxu0 %v73
    %112 = vmatprep.subr.mxu0 0.0
    %113 = vmatpush1.msra.mxu0 %v72
    %114 = vmatprep.subr.mxu0 0.0
    %115 = vmatpush1.msra.mxu0 %v71
    %116 = vmatprep.subr.mxu0 0.0
    %117 = vmatpush1.msra.mxu0 %v70
    %118 = vmatprep.subr.mxu0 0.0
    %119 = vmatpush2.msra.mxu0 0.0
    %120 = vmatprep.subr.mxu0 0.0
    %121 = vmatpush2.msra.mxu0 0.0
    %122 = vmatprep.subr.mxu0 0.0
    %123 = vmatpush2.msra.mxu0 0.0
    %124 = vmatprep.subr.mxu0 0.0
    %125 = vmatpush2.msra.mxu0 0.0
    %126 = vmatprep.subr.mxu0 0.0
    %127 = vmatpush2.msra.mxu0 0.0
    %128 = vmatprep.subr.mxu0 0.0
    %129 = vmatpush2.msra.mxu0 0.0
    %130 = vmatprep.subr.mxu0 0.0
    %131 = vmatpush2.msra.mxu0 0.0
    %132 = vmatprep.subr.mxu0 0.0
    %133 = vmatpush2.msra.mxu0 0.0
    %134 = vmatprep.subr.mxu0 0.0
    %135 = vmatpush2.msra.mxu0 0.0
    %136 = vmatprep.subr.mxu0 0.0
    %137 = vmatpush2.msra.mxu0 0.0
    %138 = vmatprep.subr.mxu0 0.0
    %139 = vmatpush2.msra.mxu0 0.0
    %140 = vmatprep.subr.mxu0 0.0
    %141 = vmatpush2.msra.mxu0 0.0
    %142 = vmatprep.subr.mxu0 0.0
    %143 = vmatpush2.msra.mxu0 0.0
    %144 = vmatprep.subr.mxu0 0.0
    %145 = vmatpush2.msra.mxu0 0.0
    %146 = vmatprep.subr.mxu0 0.0
    %147 = vmatpush2.msra.mxu0 0.0
    %148 = vmatprep.subr.mxu0 0.0
    %149 = vmatpush2.msra.mxu0 0.0
    %150 = vmatprep.mubr.f32.mxu0 0.0
    %151 = vmatmul.mubr.f32.gmra.mxu0 %v81
    %v152 = vpop.f32.mrf.mxu0
    %v153 = vadd.f32 %v78, %v152
    %v154 = vpop.f32.mrf.mxu0
    %155 = vmatprep.mubr.f32.mxu0 0.0
    %156 = vmatmul.mubr.f32.gmra.mxu0 %v84
    %v157 = vpop.f32.mrf.mxu0
    %v158 = vadd.f32 %v78, %v157
    %v159 = vpop.f32.mrf.mxu0
    %160 = vdwg.mxu0
    %162 = vrot.lane.b32.xlu0 %v153, 96
    %v163 = vpop.permute.xlu0 %162
    %vm164 = vcmask 64512
    %v165 = vsel %vm164, %v153, 0
    %v167 = vsel %vm164, %v163, 0
    %169 = vmatprep.subr.mxu0 0.0
    %170 = vmatpush1.xpose.msra.mxu0 0.0
    %171 = vmatprep.subr.mxu0 0.0
    %172 = vmatpush1.xpose.msra.mxu0 0.0
    %173 = vmatprep.subr.mxu0 0.0
    %174 = vmatpush1.xpose.msra.mxu0 0.0
    %175 = vmatprep.subr.mxu0 0.0
    %176 = vmatpush1.xpose.msra.mxu0 0.0
    %177 = vmatprep.subr.mxu0 0.0
    %178 = vmatpush1.xpose.msra.mxu0 0.0
    %179 = vmatprep.subr.mxu0 0.0
    %180 = vmatpush1.xpose.msra.mxu0 0.0
    %181 = vmatprep.subr.mxu0 0.0
    %182 = vmatpush1.xpose.msra.mxu0 0.0
    %183 = vmatprep.subr.mxu0 0.0
    %184 = vmatpush1.xpose.msra.mxu0 0.0
    %185 = vmatprep.subr.mxu0 0.0
    %186 = vmatpush1.xpose.msra.mxu0 0.0
    %187 = vmatprep.subr.mxu0 0.0
    %188 = vmatpush1.xpose.msra.mxu0 0.0
    %189 = vmatprep.subr.mxu0 0.0
    %190 = vmatpush1.xpose.msra.mxu0 0.0
    %191 = vmatprep.subr.mxu0 0.0
    %192 = vmatpush1.xpose.msra.mxu0 0.0
    %193 = vmatprep.subr.mxu0 0.0
    %194 = vmatpush1.xpose.msra.mxu0 0.0
    %195 = vmatprep.subr.mxu0 0.0
    %196 = vmatpush1.xpose.msra.mxu0 0.0
    %197 = vmatprep.subr.mxu0 0.0
    %198 = vmatpush1.xpose.msra.mxu0 0.0
    %199 = vmatprep.subr.mxu0 0.0
    %200 = vmatpush1.xpose.msra.mxu0 %v167
    %201 = vmatprep.subr.mxu0 0.0
    %202 = vmatpush2.xpose.msra.mxu0 0.0
    %203 = vmatprep.subr.mxu0 0.0
    %204 = vmatpush2.xpose.msra.mxu0 0.0
    %205 = vmatprep.subr.mxu0 0.0
    %206 = vmatpush2.xpose.msra.mxu0 0.0
    %207 = vmatprep.subr.mxu0 0.0
    %208 = vmatpush2.xpose.msra.mxu0 0.0
    %209 = vmatprep.subr.mxu0 0.0
    %210 = vmatpush2.xpose.msra.mxu0 0.0
    %211 = vmatprep.subr.mxu0 0.0
    %212 = vmatpush2.xpose.msra.mxu0 0.0
    %213 = vmatprep.subr.mxu0 0.0
    %214 = vmatpush2.xpose.msra.mxu0 0.0
    %215 = vmatprep.subr.mxu0 0.0
    %216 = vmatpush2.xpose.msra.mxu0 0.0
    %217 = vmatprep.subr.mxu0 0.0
    %218 = vmatpush2.xpose.msra.mxu0 0.0
    %219 = vmatprep.subr.mxu0 0.0
    %220 = vmatpush2.xpose.msra.mxu0 0.0
    %221 = vmatprep.subr.mxu0 0.0
    %222 = vmatpush2.xpose.msra.mxu0 0.0
    %223 = vmatprep.subr.mxu0 0.0
    %224 = vmatpush2.xpose.msra.mxu0 0.0
    %225 = vmatprep.subr.mxu0 0.0
    %226 = vmatpush2.xpose.msra.mxu0 0.0
    %227 = vmatprep.subr.mxu0 0.0
    %228 = vmatpush2.xpose.msra.mxu0 0.0
    %229 = vmatprep.subr.mxu0 0.0
    %230 = vmatpush2.xpose.msra.mxu0 0.0
    %231 = vmatprep.subr.mxu0 0.0
    %232 = vmatpush2.xpose.msra.mxu0 0.0
    %233 = vmatprep.mubr.f32.mxu0 0.0
    %234 = vmatmul.mubr.f32.gmra.mxu0 %v165
    %v235 = vpop.f32.mrf.mxu0
    %v236 = vadd.f32 0.0, %v235
    %v237 = vpop.f32.mrf.mxu0
    %238 = vdwg.mxu0
    %240 = vrot.lane.b32.xlu0 %v158, 96
    %v241 = vpop.permute.xlu0 %240
    %v242 = vsel %vm164, %v158, 0
    %v244 = vsel %vm164, %v241, 0
    %246 = vmatprep.subr.mxu0 0.0
    %247 = vmatpush1.xpose.msra.mxu0 0.0
    %248 = vmatprep.subr.mxu0 0.0
    %249 = vmatpush1.xpose.msra.mxu0 0.0
    %250 = vmatprep.subr.mxu0 0.0
    %251 = vmatpush1.xpose.msra.mxu0 0.0
    %252 = vmatprep.subr.mxu0 0.0
    %253 = vmatpush1.xpose.msra.mxu0 0.0
    %254 = vmatprep.subr.mxu0 0.0
    %255 = vmatpush1.xpose.msra.mxu0 0.0
    %256 = vmatprep.subr.mxu0 0.0
    %257 = vmatpush1.xpose.msra.mxu0 0.0
    %258 = vmatprep.subr.mxu0 0.0
    %259 = vmatpush1.xpose.msra.mxu0 0.0
    %260 = vmatprep.subr.mxu0 0.0
    %261 = vmatpush1.xpose.msra.mxu0 0.0
    %262 = vmatprep.subr.mxu0 0.0
    %263 = vmatpush1.xpose.msra.mxu0 0.0
    %264 = vmatprep.subr.mxu0 0.0
    %265 = vmatpush1.xpose.msra.mxu0 0.0
    %266 = vmatprep.subr.mxu0 0.0
    %267 = vmatpush1.xpose.msra.mxu0 0.0
    %268 = vmatprep.subr.mxu0 0.0
    %269 = vmatpush1.xpose.msra.mxu0 0.0
    %270 = vmatprep.subr.mxu0 0.0
    %271 = vmatpush1.xpose.msra.mxu0 0.0
    %272 = vmatprep.subr.mxu0 0.0
    %273 = vmatpush1.xpose.msra.mxu0 0.0
    %274 = vmatprep.subr.mxu0 0.0
    %275 = vmatpush1.xpose.msra.mxu0 0.0
    %276 = vmatprep.subr.mxu0 0.0
    %277 = vmatpush1.xpose.msra.mxu0 %v244
    %278 = vmatprep.subr.mxu0 0.0
    %279 = vmatpush2.xpose.msra.mxu0 0.0
    %280 = vmatprep.subr.mxu0 0.0
    %281 = vmatpush2.xpose.msra.mxu0 0.0
    %282 = vmatprep.subr.mxu0 0.0
    %283 = vmatpush2.xpose.msra.mxu0 0.0
    %284 = vmatprep.subr.mxu0 0.0
    %285 = vmatpush2.xpose.msra.mxu0 0.0
    %286 = vmatprep.subr.mxu0 0.0
    %287 = vmatpush2.xpose.msra.mxu0 0.0
    %288 = vmatprep.subr.mxu0 0.0
    %289 = vmatpush2.xpose.msra.mxu0 0.0
    %290 = vmatprep.subr.mxu0 0.0
    %291 = vmatpush2.xpose.msra.mxu0 0.0
    %292 = vmatprep.subr.mxu0 0.0
    %293 = vmatpush2.xpose.msra.mxu0 0.0
    %294 = vmatprep.subr.mxu0 0.0
    %295 = vmatpush2.xpose.msra.mxu0 0.0
    %296 = vmatprep.subr.mxu0 0.0
    %297 = vmatpush2.xpose.msra.mxu0 0.0
    %298 = vmatprep.subr.mxu0 0.0
    %299 = vmatpush2.xpose.msra.mxu0 0.0
    %300 = vmatprep.subr.mxu0 0.0
    %301 = vmatpush2.xpose.msra.mxu0 0.0
    %302 = vmatprep.subr.mxu0 0.0
    %303 = vmatpush2.xpose.msra.mxu0 0.0
    %304 = vmatprep.subr.mxu0 0.0
    %305 = vmatpush2.xpose.msra.mxu0 0.0
    %306 = vmatprep.subr.mxu0 0.0
    %307 = vmatpush2.xpose.msra.mxu0 0.0
    %308 = vmatprep.subr.mxu0 0.0
    %309 = vmatpush2.xpose.msra.mxu0 0.0
    %310 = vmatprep.mubr.f32.mxu0 0.0
    %311 = vmatmul.mubr.f32.gmra.mxu0 %v242
    %v312 = vpop.f32.mrf.mxu0
    %v313 = vadd.f32 0.0, %v312
    %v314 = vpop.f32.mrf.mxu0
    %315 = vdwg.mxu0
    %316 = vrot.lane.b32.xlu0 %v153, 120
    %v317 = vpop.permute.xlu0 %316
    %318 = vrot.lane.b32.xlu0 %v153, 88
    %v319 = vpop.permute.xlu0 %318
    %v320 = vsel %vm164, %v317, 0
    %v322 = vsel %vm164, %v319, 0
    %324 = vmatprep.subr.mxu0 0.0
    %325 = vmatpush1.xpose.msra.mxu0 0.0
    %326 = vmatprep.subr.mxu0 0.0
    %327 = vmatpush1.xpose.msra.mxu0 0.0
    %328 = vmatprep.subr.mxu0 0.0
    %329 = vmatpush1.xpose.msra.mxu0 0.0
    %330 = vmatprep.subr.mxu0 0.0
    %331 = vmatpush1.xpose.msra.mxu0 0.0
    %332 = vmatprep.subr.mxu0 0.0
    %333 = vmatpush1.xpose.msra.mxu0 0.0
    %334 = vmatprep.subr.mxu0 0.0
    %335 = vmatpush1.xpose.msra.mxu0 0.0
    %336 = vmatprep.subr.mxu0 0.0
    %337 = vmatpush1.xpose.msra.mxu0 0.0
    %338 = vmatprep.subr.mxu0 0.0
    %339 = vmatpush1.xpose.msra.mxu0 0.0
    %340 = vmatprep.subr.mxu0 0.0
    %341 = vmatpush1.xpose.msra.mxu0 0.0
    %342 = vmatprep.subr.mxu0 0.0
    %343 = vmatpush1.xpose.msra.mxu0 0.0
    %344 = vmatprep.subr.mxu0 0.0
    %345 = vmatpush1.xpose.msra.mxu0 0.0
    %346 = vmatprep.subr.mxu0 0.0
    %347 = vmatpush1.xpose.msra.mxu0 0.0
    %348 = vmatprep.subr.mxu0 0.0
    %349 = vmatpush1.xpose.msra.mxu0 0.0
    %350 = vmatprep.subr.mxu0 0.0
    %351 = vmatpush1.xpose.msra.mxu0 0.0
    %352 = vmatprep.subr.mxu0 0.0
    %353 = vmatpush1.xpose.msra.mxu0 0.0
    %354 = vmatprep.subr.mxu0 0.0
    %355 = vmatpush1.xpose.msra.mxu0 %v322
    %356 = vmatprep.subr.mxu0 0.0
    %357 = vmatpush2.xpose.msra.mxu0 0.0
    %358 = vmatprep.subr.mxu0 0.0
    %359 = vmatpush2.xpose.msra.mxu0 0.0
    %360 = vmatprep.subr.mxu0 0.0
    %361 = vmatpush2.xpose.msra.mxu0 0.0
    %362 = vmatprep.subr.mxu0 0.0
    %363 = vmatpush2.xpose.msra.mxu0 0.0
    %364 = vmatprep.subr.mxu0 0.0
    %365 = vmatpush2.xpose.msra.mxu0 0.0
    %366 = vmatprep.subr.mxu0 0.0
    %367 = vmatpush2.xpose.msra.mxu0 0.0
    %368 = vmatprep.subr.mxu0 0.0
    %369 = vmatpush2.xpose.msra.mxu0 0.0
    %370 = vmatprep.subr.mxu0 0.0
    %371 = vmatpush2.xpose.msra.mxu0 0.0
    %372 = vmatprep.subr.mxu0 0.0
    %373 = vmatpush2.xpose.msra.mxu0 0.0
    %374 = vmatprep.subr.mxu0 0.0
    %375 = vmatpush2.xpose.msra.mxu0 0.0
    %376 = vmatprep.subr.mxu0 0.0
    %377 = vmatpush2.xpose.msra.mxu0 0.0
    %378 = vmatprep.subr.mxu0 0.0
    %379 = vmatpush2.xpose.msra.mxu0 0.0
    %380 = vmatprep.subr.mxu0 0.0
    %381 = vmatpush2.xpose.msra.mxu0 0.0
    %382 = vmatprep.subr.mxu0 0.0
    %383 = vmatpush2.xpose.msra.mxu0 0.0
    %384 = vmatprep.subr.mxu0 0.0
    %385 = vmatpush2.xpose.msra.mxu0 0.0
    %386 = vmatprep.subr.mxu0 0.0
    %387 = vmatpush2.xpose.msra.mxu0 0.0
    %388 = vmatprep.mubr.f32.mxu0 0.0
    %389 = vmatmul.mubr.f32.gmra.mxu0 %v320
    %v390 = vpop.f32.mrf.mxu0
    %v391 = vadd.f32 0.0, %v390
    %v392 = vpop.f32.mrf.mxu0
    %393 = vdwg.mxu0
    %394 = vrot.lane.b32.xlu0 %v158, 120
    %v395 = vpop.permute.xlu0 %394
    %396 = vrot.lane.b32.xlu0 %v158, 88
    %v397 = vpop.permute.xlu0 %396
    %v398 = vsel %vm164, %v395, 0
    %v400 = vsel %vm164, %v397, 0
    %402 = vmatprep.subr.mxu0 0.0
    %403 = vmatpush1.xpose.msra.mxu0 0.0
    %404 = vmatprep.subr.mxu0 0.0
    %405 = vmatpush1.xpose.msra.mxu0 0.0
    %406 = vmatprep.subr.mxu0 0.0
    %407 = vmatpush1.xpose.msra.mxu0 0.0
    %408 = vmatprep.subr.mxu0 0.0
    %409 = vmatpush1.xpose.msra.mxu0 0.0
    %410 = vmatprep.subr.mxu0 0.0
    %411 = vmatpush1.xpose.msra.mxu0 0.0
    %412 = vmatprep.subr.mxu0 0.0
    %413 = vmatpush1.xpose.msra.mxu0 0.0
    %414 = vmatprep.subr.mxu0 0.0
    %415 = vmatpush1.xpose.msra.mxu0 0.0
    %416 = vmatprep.subr.mxu0 0.0
    %417 = vmatpush1.xpose.msra.mxu0 0.0
    %418 = vmatprep.subr.mxu0 0.0
    %419 = vmatpush1.xpose.msra.mxu0 0.0
    %420 = vmatprep.subr.mxu0 0.0
    %421 = vmatpush1.xpose.msra.mxu0 0.0
    %422 = vmatprep.subr.mxu0 0.0
    %423 = vmatpush1.xpose.msra.mxu0 0.0
    %424 = vmatprep.subr.mxu0 0.0
    %425 = vmatpush1.xpose.msra.mxu0 0.0
    %426 = vmatprep.subr.mxu0 0.0
    %427 = vmatpush1.xpose.msra.mxu0 0.0
    %428 = vmatprep.subr.mxu0 0.0
    %429 = vmatpush1.xpose.msra.mxu0 0.0
    %430 = vmatprep.subr.mxu0 0.0
    %431 = vmatpush1.xpose.msra.mxu0 0.0
    %432 = vmatprep.subr.mxu0 0.0
    %433 = vmatpush1.xpose.msra.mxu0 %v400
    %434 = vmatprep.subr.mxu0 0.0
    %435 = vmatpush2.xpose.msra.mxu0 0.0
    %436 = vmatprep.subr.mxu0 0.0
    %437 = vmatpush2.xpose.msra.mxu0 0.0
    %438 = vmatprep.subr.mxu0 0.0
    %439 = vmatpush2.xpose.msra.mxu0 0.0
    %440 = vmatprep.subr.mxu0 0.0
    %441 = vmatpush2.xpose.msra.mxu0 0.0
    %442 = vmatprep.subr.mxu0 0.0
    %443 = vmatpush2.xpose.msra.mxu0 0.0
    %444 = vmatprep.subr.mxu0 0.0
    %445 = vmatpush2.xpose.msra.mxu0 0.0
    %446 = vmatprep.subr.mxu0 0.0
    %447 = vmatpush2.xpose.msra.mxu0 0.0
    %448 = vmatprep.subr.mxu0 0.0
    %449 = vmatpush2.xpose.msra.mxu0 0.0
    %450 = vmatprep.subr.mxu0 0.0
    %451 = vmatpush2.xpose.msra.mxu0 0.0
    %452 = vmatprep.subr.mxu0 0.0
    %453 = vmatpush2.xpose.msra.mxu0 0.0
    %454 = vmatprep.subr.mxu0 0.0
    %455 = vmatpush2.xpose.msra.mxu0 0.0
    %456 = vmatprep.subr.mxu0 0.0
    %457 = vmatpush2.xpose.msra.mxu0 0.0
    %458 = vmatprep.subr.mxu0 0.0
    %459 = vmatpush2.xpose.msra.mxu0 0.0
    %460 = vmatprep.subr.mxu0 0.0
    %461 = vmatpush2.xpose.msra.mxu0 0.0
    %462 = vmatprep.subr.mxu0 0.0
    %463 = vmatpush2.xpose.msra.mxu0 0.0
    %464 = vmatprep.subr.mxu0 0.0
    %465 = vmatpush2.xpose.msra.mxu0 0.0
    %466 = vmatprep.mubr.f32.mxu0 0.0
    %467 = vmatmul.mubr.f32.gmra.mxu0 %v398
    %v468 = vpop.f32.mrf.mxu0
    %v469 = vadd.f32 0.0, %v468
    %v470 = vpop.f32.mrf.mxu0
    %471 = vdwg.mxu0
    %472 = vrot.lane.b32.xlu0 %v153, 112
    %v473 = vpop.permute.xlu0 %472
    %474 = vrot.lane.b32.xlu0 %v153, 80
    %v475 = vpop.permute.xlu0 %474
    %v476 = vsel %vm164, %v473, 0
    %v478 = vsel %vm164, %v475, 0
    %480 = vmatprep.subr.mxu0 0.0
    %481 = vmatpush1.xpose.msra.mxu0 0.0
    %482 = vmatprep.subr.mxu0 0.0
    %483 = vmatpush1.xpose.msra.mxu0 0.0
    %484 = vmatprep.subr.mxu0 0.0
    %485 = vmatpush1.xpose.msra.mxu0 0.0
    %486 = vmatprep.subr.mxu0 0.0
    %487 = vmatpush1.xpose.msra.mxu0 0.0
    %488 = vmatprep.subr.mxu0 0.0
    %489 = vmatpush1.xpose.msra.mxu0 0.0
    %490 = vmatprep.subr.mxu0 0.0
    %491 = vmatpush1.xpose.msra.mxu0 0.0
    %492 = vmatprep.subr.mxu0 0.0
    %493 = vmatpush1.xpose.msra.mxu0 0.0
    %494 = vmatprep.subr.mxu0 0.0
    %495 = vmatpush1.xpose.msra.mxu0 0.0
    %496 = vmatprep.subr.mxu0 0.0
    %497 = vmatpush1.xpose.msra.mxu0 0.0
    %498 = vmatprep.subr.mxu0 0.0
    %499 = vmatpush1.xpose.msra.mxu0 0.0
    %500 = vmatprep.subr.mxu0 0.0
    %501 = vmatpush1.xpose.msra.mxu0 0.0
    %502 = vmatprep.subr.mxu0 0.0
    %503 = vmatpush1.xpose.msra.mxu0 0.0
    %504 = vmatprep.subr.mxu0 0.0
    %505 = vmatpush1.xpose.msra.mxu0 0.0
    %506 = vmatprep.subr.mxu0 0.0
    %507 = vmatpush1.xpose.msra.mxu0 0.0
    %508 = vmatprep.subr.mxu0 0.0
    %509 = vmatpush1.xpose.msra.mxu0 0.0
    %510 = vmatprep.subr.mxu0 0.0
    %511 = vmatpush1.xpose.msra.mxu0 %v478
    %512 = vmatprep.subr.mxu0 0.0
    %513 = vmatpush2.xpose.msra.mxu0 0.0
    %514 = vmatprep.subr.mxu0 0.0
    %515 = vmatpush2.xpose.msra.mxu0 0.0
    %516 = vmatprep.subr.mxu0 0.0
    %517 = vmatpush2.xpose.msra.mxu0 0.0
    %518 = vmatprep.subr.mxu0 0.0
    %519 = vmatpush2.xpose.msra.mxu0 0.0
    %520 = vmatprep.subr.mxu0 0.0
    %521 = vmatpush2.xpose.msra.mxu0 0.0
    %522 = vmatprep.subr.mxu0 0.0
    %523 = vmatpush2.xpose.msra.mxu0 0.0
    %524 = vmatprep.subr.mxu0 0.0
    %525 = vmatpush2.xpose.msra.mxu0 0.0
    %526 = vmatprep.subr.mxu0 0.0
    %527 = vmatpush2.xpose.msra.mxu0 0.0
    %528 = vmatprep.subr.mxu0 0.0
    %529 = vmatpush2.xpose.msra.mxu0 0.0
    %530 = vmatprep.subr.mxu0 0.0
    %531 = vmatpush2.xpose.msra.mxu0 0.0
    %532 = vmatprep.subr.mxu0 0.0
    %533 = vmatpush2.xpose.msra.mxu0 0.0
    %534 = vmatprep.subr.mxu0 0.0
    %535 = vmatpush2.xpose.msra.mxu0 0.0
    %536 = vmatprep.subr.mxu0 0.0
    %537 = vmatpush2.xpose.msra.mxu0 0.0
    %538 = vmatprep.subr.mxu0 0.0
    %539 = vmatpush2.xpose.msra.mxu0 0.0
    %540 = vmatprep.subr.mxu0 0.0
    %541 = vmatpush2.xpose.msra.mxu0 0.0
    %542 = vmatprep.subr.mxu0 0.0
    %543 = vmatpush2.xpose.msra.mxu0 0.0
    %544 = vmatprep.mubr.f32.mxu0 0.0
    %545 = vmatmul.mubr.f32.gmra.mxu0 %v476
    %v546 = vpop.f32.mrf.mxu0
    %v547 = vadd.f32 0.0, %v546
    %v548 = vpop.f32.mrf.mxu0
    %549 = vdwg.mxu0
    %550 = vrot.lane.b32.xlu0 %v158, 112
    %v551 = vpop.permute.xlu0 %550
    %552 = vrot.lane.b32.xlu0 %v158, 80
    %v553 = vpop.permute.xlu0 %552
    %v554 = vsel %vm164, %v551, 0
    %v556 = vsel %vm164, %v553, 0
    %558 = vmatprep.subr.mxu0 0.0
    %559 = vmatpush1.xpose.msra.mxu0 0.0
    %560 = vmatprep.subr.mxu0 0.0
    %561 = vmatpush1.xpose.msra.mxu0 0.0
    %562 = vmatprep.subr.mxu0 0.0
    %563 = vmatpush1.xpose.msra.mxu0 0.0
    %564 = vmatprep.subr.mxu0 0.0
    %565 = vmatpush1.xpose.msra.mxu0 0.0
    %566 = vmatprep.subr.mxu0 0.0
    %567 = vmatpush1.xpose.msra.mxu0 0.0
    %568 = vmatprep.subr.mxu0 0.0
    %569 = vmatpush1.xpose.msra.mxu0 0.0
    %570 = vmatprep.subr.mxu0 0.0
    %571 = vmatpush1.xpose.msra.mxu0 0.0
    %572 = vmatprep.subr.mxu0 0.0
    %573 = vmatpush1.xpose.msra.mxu0 0.0
    %574 = vmatprep.subr.mxu0 0.0
    %575 = vmatpush1.xpose.msra.mxu0 0.0
    %576 = vmatprep.subr.mxu0 0.0
    %577 = vmatpush1.xpose.msra.mxu0 0.0
    %578 = vmatprep.subr.mxu0 0.0
    %579 = vmatpush1.xpose.msra.mxu0 0.0
    %580 = vmatprep.subr.mxu0 0.0
    %581 = vmatpush1.xpose.msra.mxu0 0.0
    %582 = vmatprep.subr.mxu0 0.0
    %583 = vmatpush1.xpose.msra.mxu0 0.0
    %584 = vmatprep.subr.mxu0 0.0
    %585 = vmatpush1.xpose.msra.mxu0 0.0
    %586 = vmatprep.subr.mxu0 0.0
    %587 = vmatpush1.xpose.msra.mxu0 0.0
    %588 = vmatprep.subr.mxu0 0.0
    %589 = vmatpush1.xpose.msra.mxu0 %v556
    %590 = vmatprep.subr.mxu0 0.0
    %591 = vmatpush2.xpose.msra.mxu0 0.0
    %592 = vmatprep.subr.mxu0 0.0
    %593 = vmatpush2.xpose.msra.mxu0 0.0
    %594 = vmatprep.subr.mxu0 0.0
    %595 = vmatpush2.xpose.msra.mxu0 0.0
    %596 = vmatprep.subr.mxu0 0.0
    %597 = vmatpush2.xpose.msra.mxu0 0.0
    %598 = vmatprep.subr.mxu0 0.0
    %599 = vmatpush2.xpose.msra.mxu0 0.0
    %600 = vmatprep.subr.mxu0 0.0
    %601 = vmatpush2.xpose.msra.mxu0 0.0
    %602 = vmatprep.subr.mxu0 0.0
    %603 = vmatpush2.xpose.msra.mxu0 0.0
    %604 = vmatprep.subr.mxu0 0.0
    %605 = vmatpush2.xpose.msra.mxu0 0.0
    %606 = vmatprep.subr.mxu0 0.0
    %607 = vmatpush2.xpose.msra.mxu0 0.0
    %608 = vmatprep.subr.mxu0 0.0
    %609 = vmatpush2.xpose.msra.mxu0 0.0
    %610 = vmatprep.subr.mxu0 0.0
    %611 = vmatpush2.xpose.msra.mxu0 0.0
    %612 = vmatprep.subr.mxu0 0.0
    %613 = vmatpush2.xpose.msra.mxu0 0.0
    %614 = vmatprep.subr.mxu0 0.0
    %615 = vmatpush2.xpose.msra.mxu0 0.0
    %616 = vmatprep.subr.mxu0 0.0
    %617 = vmatpush2.xpose.msra.mxu0 0.0
    %618 = vmatprep.subr.mxu0 0.0
    %619 = vmatpush2.xpose.msra.mxu0 0.0
    %620 = vmatprep.subr.mxu0 0.0
    %621 = vmatpush2.xpose.msra.mxu0 0.0
    %622 = vmatprep.mubr.f32.mxu0 0.0
    %623 = vmatmul.mubr.f32.gmra.mxu0 %v554
    %v624 = vpop.f32.mrf.mxu0
    %v625 = vadd.f32 0.0, %v624
    %v626 = vpop.f32.mrf.mxu0
    %627 = vdwg.mxu0
    %628 = vrot.lane.b32.xlu0 %v153, 104
    %v629 = vpop.permute.xlu0 %628
    %630 = vrot.lane.b32.xlu0 %v153, 72
    %v631 = vpop.permute.xlu0 %630
    %v632 = vsel %vm164, %v629, 0
    %v634 = vsel %vm164, %v631, 0
    %636 = vmatprep.subr.mxu0 0.0
    %637 = vmatpush1.xpose.msra.mxu0 0.0
    %638 = vmatprep.subr.mxu0 0.0
    %639 = vmatpush1.xpose.msra.mxu0 0.0
    %640 = vmatprep.subr.mxu0 0.0
    %641 = vmatpush1.xpose.msra.mxu0 0.0
    %642 = vmatprep.subr.mxu0 0.0
    %643 = vmatpush1.xpose.msra.mxu0 0.0
    %644 = vmatprep.subr.mxu0 0.0
    %645 = vmatpush1.xpose.msra.mxu0 0.0
    %646 = vmatprep.subr.mxu0 0.0
    %647 = vmatpush1.xpose.msra.mxu0 0.0
    %648 = vmatprep.subr.mxu0 0.0
    %649 = vmatpush1.xpose.msra.mxu0 0.0
    %650 = vmatprep.subr.mxu0 0.0
    %651 = vmatpush1.xpose.msra.mxu0 0.0
    %652 = vmatprep.subr.mxu0 0.0
    %653 = vmatpush1.xpose.msra.mxu0 0.0
    %654 = vmatprep.subr.mxu0 0.0
    %655 = vmatpush1.xpose.msra.mxu0 0.0
    %656 = vmatprep.subr.mxu0 0.0
    %657 = vmatpush1.xpose.msra.mxu0 0.0
    %658 = vmatprep.subr.mxu0 0.0
    %659 = vmatpush1.xpose.msra.mxu0 0.0
    %660 = vmatprep.subr.mxu0 0.0
    %661 = vmatpush1.xpose.msra.mxu0 0.0
    %662 = vmatprep.subr.mxu0 0.0
    %663 = vmatpush1.xpose.msra.mxu0 0.0
    %664 = vmatprep.subr.mxu0 0.0
    %665 = vmatpush1.xpose.msra.mxu0 0.0
    %666 = vmatprep.subr.mxu0 0.0
    %667 = vmatpush1.xpose.msra.mxu0 %v634
    %668 = vmatprep.subr.mxu0 0.0
    %669 = vmatpush2.xpose.msra.mxu0 0.0
    %670 = vmatprep.subr.mxu0 0.0
    %671 = vmatpush2.xpose.msra.mxu0 0.0
    %672 = vmatprep.subr.mxu0 0.0
    %673 = vmatpush2.xpose.msra.mxu0 0.0
    %674 = vmatprep.subr.mxu0 0.0
    %675 = vmatpush2.xpose.msra.mxu0 0.0
    %676 = vmatprep.subr.mxu0 0.0
    %677 = vmatpush2.xpose.msra.mxu0 0.0
    %678 = vmatprep.subr.mxu0 0.0
    %679 = vmatpush2.xpose.msra.mxu0 0.0
    %680 = vmatprep.subr.mxu0 0.0
    %681 = vmatpush2.xpose.msra.mxu0 0.0
    %682 = vmatprep.subr.mxu0 0.0
    %683 = vmatpush2.xpose.msra.mxu0 0.0
    %684 = vmatprep.subr.mxu0 0.0
    %685 = vmatpush2.xpose.msra.mxu0 0.0
    %686 = vmatprep.subr.mxu0 0.0
    %687 = vmatpush2.xpose.msra.mxu0 0.0
    %688 = vmatprep.subr.mxu0 0.0
    %689 = vmatpush2.xpose.msra.mxu0 0.0
    %690 = vmatprep.subr.mxu0 0.0
    %691 = vmatpush2.xpose.msra.mxu0 0.0
    %692 = vmatprep.subr.mxu0 0.0
    %693 = vmatpush2.xpose.msra.mxu0 0.0
    %694 = vmatprep.subr.mxu0 0.0
    %695 = vmatpush2.xpose.msra.mxu0 0.0
    %696 = vmatprep.subr.mxu0 0.0
    %697 = vmatpush2.xpose.msra.mxu0 0.0
    %698 = vmatprep.subr.mxu0 0.0
    %699 = vmatpush2.xpose.msra.mxu0 0.0
    %700 = vmatprep.mubr.f32.mxu0 0.0
    %701 = vmatmul.mubr.f32.gmra.mxu0 %v632
    %v702 = vpop.f32.mrf.mxu0
    %v703 = vadd.f32 0.0, %v702
    %v704 = vpop.f32.mrf.mxu0
    %705 = vdwg.mxu0
    %706 = vrot.lane.b32.xlu0 %v158, 104
    %v707 = vpop.permute.xlu0 %706
    %708 = vrot.lane.b32.xlu0 %v158, 72
    %v709 = vpop.permute.xlu0 %708
    %v710 = vsel %vm164, %v707, 0
    %v712 = vsel %vm164, %v709, 0
    %714 = vmatprep.subr.mxu0 0.0
    %715 = vmatpush1.xpose.msra.mxu0 0.0
    %716 = vmatprep.subr.mxu0 0.0
    %717 = vmatpush1.xpose.msra.mxu0 0.0
    %718 = vmatprep.subr.mxu0 0.0
    %719 = vmatpush1.xpose.msra.mxu0 0.0
    %720 = vmatprep.subr.mxu0 0.0
    %721 = vmatpush1.xpose.msra.mxu0 0.0
    %722 = vmatprep.subr.mxu0 0.0
    %723 = vmatpush1.xpose.msra.mxu0 0.0
    %724 = vmatprep.subr.mxu0 0.0
    %725 = vmatpush1.xpose.msra.mxu0 0.0
    %726 = vmatprep.subr.mxu0 0.0
    %727 = vmatpush1.xpose.msra.mxu0 0.0
    %728 = vmatprep.subr.mxu0 0.0
    %729 = vmatpush1.xpose.msra.mxu0 0.0
    %730 = vmatprep.subr.mxu0 0.0
    %731 = vmatpush1.xpose.msra.mxu0 0.0
    %732 = vmatprep.subr.mxu0 0.0
    %733 = vmatpush1.xpose.msra.mxu0 0.0
    %734 = vmatprep.subr.mxu0 0.0
    %735 = vmatpush1.xpose.msra.mxu0 0.0
    %736 = vmatprep.subr.mxu0 0.0
    %737 = vmatpush1.xpose.msra.mxu0 0.0
    %738 = vmatprep.subr.mxu0 0.0
    %739 = vmatpush1.xpose.msra.mxu0 0.0
    %740 = vmatprep.subr.mxu0 0.0
    %741 = vmatpush1.xpose.msra.mxu0 0.0
    %742 = vmatprep.subr.mxu0 0.0
    %743 = vmatpush1.xpose.msra.mxu0 0.0
    %744 = vmatprep.subr.mxu0 0.0
    %745 = vmatpush1.xpose.msra.mxu0 %v712
    %746 = vmatprep.subr.mxu0 0.0
    %747 = vmatpush2.xpose.msra.mxu0 0.0
    %748 = vmatprep.subr.mxu0 0.0
    %749 = vmatpush2.xpose.msra.mxu0 0.0
    %750 = vmatprep.subr.mxu0 0.0
    %751 = vmatpush2.xpose.msra.mxu0 0.0
    %752 = vmatprep.subr.mxu0 0.0
    %753 = vmatpush2.xpose.msra.mxu0 0.0
    %754 = vmatprep.subr.mxu0 0.0
    %755 = vmatpush2.xpose.msra.mxu0 0.0
    %756 = vmatprep.subr.mxu0 0.0
    %757 = vmatpush2.xpose.msra.mxu0 0.0
    %758 = vmatprep.subr.mxu0 0.0
    %759 = vmatpush2.xpose.msra.mxu0 0.0
    %760 = vmatprep.subr.mxu0 0.0
    %761 = vmatpush2.xpose.msra.mxu0 0.0
    %762 = vmatprep.subr.mxu0 0.0
    %763 = vmatpush2.xpose.msra.mxu0 0.0
    %764 = vmatprep.subr.mxu0 0.0
    %765 = vmatpush2.xpose.msra.mxu0 0.0
    %766 = vmatprep.subr.mxu0 0.0
    %767 = vmatpush2.xpose.msra.mxu0 0.0
    %768 = vmatprep.subr.mxu0 0.0
    %769 = vmatpush2.xpose.msra.mxu0 0.0
    %770 = vmatprep.subr.mxu0 0.0
    %771 = vmatpush2.xpose.msra.mxu0 0.0
    %772 = vmatprep.subr.mxu0 0.0
    %773 = vmatpush2.xpose.msra.mxu0 0.0
    %774 = vmatprep.subr.mxu0 0.0
    %775 = vmatpush2.xpose.msra.mxu0 0.0
    %776 = vmatprep.subr.mxu0 0.0
    %777 = vmatpush2.xpose.msra.mxu0 0.0
    %778 = vmatprep.mubr.f32.mxu0 0.0
    %779 = vmatmul.mubr.f32.gmra.mxu0 %v710
    %v780 = vpop.f32.mrf.mxu0
    %v781 = vadd.f32 0.0, %v780
    %v782 = vpop.f32.mrf.mxu0
    %783 = vdwg.mxu0
    %v784 = vsel %vm164, %v236, -inf
    %785 = vmax.xlane.f32.xlu0 %v784
    %v786 = vpop.xlane.xlu0 %785
    %v787 = vsel %vm164, %v313, -inf
    %788 = vmax.xlane.f32.xlu0 %v787
    %v789 = vpop.xlane.xlu0 %788
    %v790 = vsel %vm164, %v391, -inf
    %791 = vmax.xlane.f32.xlu0 %v790
    %v792 = vpop.xlane.xlu0 %791
    %v793 = vsel %vm164, %v469, -inf
    %794 = vmax.xlane.f32.xlu0 %v793
    %v795 = vpop.xlane.xlu0 %794
    %v796 = vsel %vm164, %v547, -inf
    %797 = vmax.xlane.f32.xlu0 %v796
    %v798 = vpop.xlane.xlu0 %797
    %v799 = vsel %vm164, %v625, -inf
    %800 = vmax.xlane.f32.xlu0 %v799
    %v801 = vpop.xlane.xlu0 %800
    %v802 = vsel %vm164, %v703, -inf
    %803 = vmax.xlane.f32.xlu0 %v802
    %v804 = vpop.xlane.xlu0 %803
    %v805 = vsel %vm164, %v781, -inf
    %806 = vmax.xlane.f32.xlu0 %v805
    %v807 = vpop.xlane.xlu0 %806
    %v808 = vsub.f32 %v236, %v786
    %v809 = vsub.f32 %v313, %v789
    %v810 = vsub.f32 %v391, %v792
    %v811 = vsub.f32 %v469, %v795
    %v812 = vsub.f32 %v547, %v798
    %v813 = vsub.f32 %v625, %v801
    %v814 = vsub.f32 %v703, %v804
    %v815 = vsub.f32 %v781, %v807
    %v816 = vmul.f32 %v808, 1.442695
    %v817 = vpow.pop %v816
    %v818 = vmul.f32 %v809, 1.442695
    %v819 = vpow.pop %v818
    %v820 = vmul.f32 %v810, 1.442695
    %v821 = vpow.pop %v820
    %v822 = vmul.f32 %v811, 1.442695
    %v823 = vpow.pop %v822
    %v824 = vmul.f32 %v812, 1.442695
    %v825 = vpow.pop %v824
    %v826 = vmul.f32 %v813, 1.442695
    %v827 = vpow.pop %v826
    %v828 = vmul.f32 %v814, 1.442695
    %v829 = vpow.pop %v828
    %v830 = vmul.f32 %v815, 1.442695
    %v831 = vpow.pop %v830
    %v832 = vsel %vm164, %v817, 0.0
    %833 = vadd.xlane.f32.xlu0 %v832
    %v834 = vpop.xlane.xlu0 %833
    %v835 = vsel %vm164, %v819, 0.0
    %836 = vadd.xlane.f32.xlu0 %v835
    %v837 = vpop.xlane.xlu0 %836
    %v838 = vsel %vm164, %v821, 0.0
    %839 = vadd.xlane.f32.xlu0 %v838
    %v840 = vpop.xlane.xlu0 %839
    %v841 = vsel %vm164, %v823, 0.0
    %842 = vadd.xlane.f32.xlu0 %v841
    %v843 = vpop.xlane.xlu0 %842
    %v844 = vsel %vm164, %v825, 0.0
    %845 = vadd.xlane.f32.xlu0 %v844
    %v846 = vpop.xlane.xlu0 %845
    %v847 = vsel %vm164, %v827, 0.0
    %848 = vadd.xlane.f32.xlu0 %v847
    %v849 = vpop.xlane.xlu0 %848
    %v850 = vsel %vm164, %v829, 0.0
    %851 = vadd.xlane.f32.xlu0 %v850
    %v852 = vpop.xlane.xlu0 %851
    %v853 = vsel %vm164, %v831, 0.0
    %854 = vadd.xlane.f32.xlu0 %v853
    %v855 = vpop.xlane.xlu0 %854
    %v856 = vrcp.pop %v834
    %v857 = vrcp.pop %v837
    %v858 = vrcp.pop %v840
    %v859 = vrcp.pop %v843
    %v860 = vrcp.pop %v846
    %v861 = vrcp.pop %v849
    %v862 = vrcp.pop %v852
    %v863 = vrcp.pop %v855
    %v864 = vmul.f32 %v817, %v856
    %v865 = vmul.f32 %v819, %v857
    %v866 = vmul.f32 %v821, %v858
    %v867 = vmul.f32 %v823, %v859
    %v868 = vmul.f32 %v825, %v860
    %v869 = vmul.f32 %v827, %v861
    %v870 = vmul.f32 %v829, %v862
    %v871 = vmul.f32 %v831, %v863
    %872 = vrot.lane.b32.xlu0 %v153, 64
    %v873 = vpop.permute.xlu0 %872
    %v876 = vsel %vm164, %v864, 0
    %878 = vmatprep.subr.mxu0 0.0
    %879 = vmatpush1.msra.mxu0 0.0
    %880 = vmatprep.subr.mxu0 0.0
    %881 = vmatpush1.msra.mxu0 0.0
    %882 = vmatprep.subr.mxu0 0.0
    %883 = vmatpush1.msra.mxu0 0.0
    %884 = vmatprep.subr.mxu0 0.0
    %885 = vmatpush1.msra.mxu0 0.0
    %886 = vmatprep.subr.mxu0 0.0
    %887 = vmatpush1.msra.mxu0 0.0
    %888 = vmatprep.subr.mxu0 0.0
    %889 = vmatpush1.msra.mxu0 0.0
    %890 = vmatprep.subr.mxu0 0.0
    %891 = vmatpush1.msra.mxu0 0.0
    %892 = vmatprep.subr.mxu0 0.0
    %893 = vmatpush1.msra.mxu0 0.0
    %894 = vmatprep.subr.mxu0 0.0
    %895 = vmatpush1.msra.mxu0 0.0
    %896 = vmatprep.subr.mxu0 0.0
    %897 = vmatpush1.msra.mxu0 0.0
    %898 = vmatprep.subr.mxu0 0.0
    %899 = vmatpush1.msra.mxu0 0.0
    %900 = vmatprep.subr.mxu0 0.0
    %901 = vmatpush1.msra.mxu0 0.0
    %902 = vmatprep.subr.mxu0 0.0
    %903 = vmatpush1.msra.mxu0 0.0
    %904 = vmatprep.subr.mxu0 0.0
    %905 = vmatpush1.msra.mxu0 0.0
    %906 = vmatprep.subr.mxu0 0.0
    %907 = vmatpush1.msra.mxu0 0.0
    %908 = vmatprep.subr.mxu0 0.0
    %909 = vmatpush1.msra.mxu0 %v873
    %910 = vmatprep.subr.mxu0 0.0
    %911 = vmatpush2.msra.mxu0 0.0
    %912 = vmatprep.subr.mxu0 0.0
    %913 = vmatpush2.msra.mxu0 0.0
    %914 = vmatprep.subr.mxu0 0.0
    %915 = vmatpush2.msra.mxu0 0.0
    %916 = vmatprep.subr.mxu0 0.0
    %917 = vmatpush2.msra.mxu0 0.0
    %918 = vmatprep.subr.mxu0 0.0
    %919 = vmatpush2.msra.mxu0 0.0
    %920 = vmatprep.subr.mxu0 0.0
    %921 = vmatpush2.msra.mxu0 0.0
    %922 = vmatprep.subr.mxu0 0.0
    %923 = vmatpush2.msra.mxu0 0.0
    %924 = vmatprep.subr.mxu0 0.0
    %925 = vmatpush2.msra.mxu0 0.0
    %926 = vmatprep.subr.mxu0 0.0
    %927 = vmatpush2.msra.mxu0 0.0
    %928 = vmatprep.subr.mxu0 0.0
    %929 = vmatpush2.msra.mxu0 0.0
    %930 = vmatprep.subr.mxu0 0.0
    %931 = vmatpush2.msra.mxu0 0.0
    %932 = vmatprep.subr.mxu0 0.0
    %933 = vmatpush2.msra.mxu0 0.0
    %934 = vmatprep.subr.mxu0 0.0
    %935 = vmatpush2.msra.mxu0 0.0
    %936 = vmatprep.subr.mxu0 0.0
    %937 = vmatpush2.msra.mxu0 0.0
    %938 = vmatprep.subr.mxu0 0.0
    %939 = vmatpush2.msra.mxu0 0.0
    %940 = vmatprep.subr.mxu0 0.0
    %941 = vmatpush2.msra.mxu0 0.0
    %942 = vmatprep.mubr.f32.mxu0 0.0
    %943 = vmatmul.mubr.f32.gmra.mxu0 %v876
    %v944 = vpop.f32.mrf.mxu0
    %v945 = vadd.f32 0.0, %v944
    %v946 = vpop.f32.mrf.mxu0
    %947 = vdwg.mxu0
    %948 = vrot.lane.b32.xlu0 %v158, 64
    %v949 = vpop.permute.xlu0 %948
    %v952 = vsel %vm164, %v865, 0
    %954 = vmatprep.subr.mxu0 0.0
    %955 = vmatpush1.msra.mxu0 0.0
    %956 = vmatprep.subr.mxu0 0.0
    %957 = vmatpush1.msra.mxu0 0.0
    %958 = vmatprep.subr.mxu0 0.0
    %959 = vmatpush1.msra.mxu0 0.0
    %960 = vmatprep.subr.mxu0 0.0
    %961 = vmatpush1.msra.mxu0 0.0
    %962 = vmatprep.subr.mxu0 0.0
    %963 = vmatpush1.msra.mxu0 0.0
    %964 = vmatprep.subr.mxu0 0.0
    %965 = vmatpush1.msra.mxu0 0.0
    %966 = vmatprep.subr.mxu0 0.0
    %967 = vmatpush1.msra.mxu0 0.0
    %968 = vmatprep.subr.mxu0 0.0
    %969 = vmatpush1.msra.mxu0 0.0
    %970 = vmatprep.subr.mxu0 0.0
    %971 = vmatpush1.msra.mxu0 0.0
    %972 = vmatprep.subr.mxu0 0.0
    %973 = vmatpush1.msra.mxu0 0.0
    %974 = vmatprep.subr.mxu0 0.0
    %975 = vmatpush1.msra.mxu0 0.0
    %976 = vmatprep.subr.mxu0 0.0
    %977 = vmatpush1.msra.mxu0 0.0
    %978 = vmatprep.subr.mxu0 0.0
    %979 = vmatpush1.msra.mxu0 0.0
    %980 = vmatprep.subr.mxu0 0.0
    %981 = vmatpush1.msra.mxu0 0.0
    %982 = vmatprep.subr.mxu0 0.0
    %983 = vmatpush1.msra.mxu0 0.0
    %984 = vmatprep.subr.mxu0 0.0
    %985 = vmatpush1.msra.mxu0 %v949
    %986 = vmatprep.subr.mxu0 0.0
    %987 = vmatpush2.msra.mxu0 0.0
    %988 = vmatprep.subr.mxu0 0.0
    %989 = vmatpush2.msra.mxu0 0.0
    %990 = vmatprep.subr.mxu0 0.0
    %991 = vmatpush2.msra.mxu0 0.0
    %992 = vmatprep.subr.mxu0 0.0
    %993 = vmatpush2.msra.mxu0 0.0
    %994 = vmatprep.subr.mxu0 0.0
    %995 = vmatpush2.msra.mxu0 0.0
    %996 = vmatprep.subr.mxu0 0.0
    %997 = vmatpush2.msra.mxu0 0.0
    %998 = vmatprep.subr.mxu0 0.0
    %999 = vmatpush2.msra.mxu0 0.0
    %1000 = vmatprep.subr.mxu0 0.0
    %1001 = vmatpush2.msra.mxu0 0.0
    %1002 = vmatprep.subr.mxu0 0.0
    %1003 = vmatpush2.msra.mxu0 0.0
    %1004 = vmatprep.subr.mxu0 0.0
    %1005 = vmatpush2.msra.mxu0 0.0
    %1006 = vmatprep.subr.mxu0 0.0
    %1007 = vmatpush2.msra.mxu0 0.0
    %1008 = vmatprep.subr.mxu0 0.0
    %1009 = vmatpush2.msra.mxu0 0.0
    %1010 = vmatprep.subr.mxu0 0.0
    %1011 = vmatpush2.msra.mxu0 0.0
    %1012 = vmatprep.subr.mxu0 0.0
    %1013 = vmatpush2.msra.mxu0 0.0
    %1014 = vmatprep.subr.mxu0 0.0
    %1015 = vmatpush2.msra.mxu0 0.0
    %1016 = vmatprep.subr.mxu0 0.0
    %1017 = vmatpush2.msra.mxu0 0.0
    %1018 = vmatprep.mubr.f32.mxu0 0.0
    %1019 = vmatmul.mubr.f32.gmra.mxu0 %v952
    %v1020 = vpop.f32.mrf.mxu0
    %v1021 = vadd.f32 0.0, %v1020
    %v1022 = vpop.f32.mrf.mxu0
    %1023 = vdwg.mxu0
    %1024 = vrot.lane.b32.xlu0 %v153, 56
    %v1025 = vpop.permute.xlu0 %1024
    %v1028 = vsel %vm164, %v866, 0
    %1030 = vmatprep.subr.mxu0 0.0
    %1031 = vmatpush1.msra.mxu0 0.0
    %1032 = vmatprep.subr.mxu0 0.0
    %1033 = vmatpush1.msra.mxu0 0.0
    %1034 = vmatprep.subr.mxu0 0.0
    %1035 = vmatpush1.msra.mxu0 0.0
    %1036 = vmatprep.subr.mxu0 0.0
    %1037 = vmatpush1.msra.mxu0 0.0
    %1038 = vmatprep.subr.mxu0 0.0
    %1039 = vmatpush1.msra.mxu0 0.0
    %1040 = vmatprep.subr.mxu0 0.0
    %1041 = vmatpush1.msra.mxu0 0.0
    %1042 = vmatprep.subr.mxu0 0.0
    %1043 = vmatpush1.msra.mxu0 0.0
    %1044 = vmatprep.subr.mxu0 0.0
    %1045 = vmatpush1.msra.mxu0 0.0
    %1046 = vmatprep.subr.mxu0 0.0
    %1047 = vmatpush1.msra.mxu0 0.0
    %1048 = vmatprep.subr.mxu0 0.0
    %1049 = vmatpush1.msra.mxu0 0.0
    %1050 = vmatprep.subr.mxu0 0.0
    %1051 = vmatpush1.msra.mxu0 0.0
    %1052 = vmatprep.subr.mxu0 0.0
    %1053 = vmatpush1.msra.mxu0 0.0
    %1054 = vmatprep.subr.mxu0 0.0
    %1055 = vmatpush1.msra.mxu0 0.0
    %1056 = vmatprep.subr.mxu0 0.0
    %1057 = vmatpush1.msra.mxu0 0.0
    %1058 = vmatprep.subr.mxu0 0.0
    %1059 = vmatpush1.msra.mxu0 0.0
    %1060 = vmatprep.subr.mxu0 0.0
    %1061 = vmatpush1.msra.mxu0 %v1025
    %1062 = vmatprep.subr.mxu0 0.0
    %1063 = vmatpush2.msra.mxu0 0.0
    %1064 = vmatprep.subr.mxu0 0.0
    %1065 = vmatpush2.msra.mxu0 0.0
    %1066 = vmatprep.subr.mxu0 0.0
    %1067 = vmatpush2.msra.mxu0 0.0
    %1068 = vmatprep.subr.mxu0 0.0
    %1069 = vmatpush2.msra.mxu0 0.0
    %1070 = vmatprep.subr.mxu0 0.0
    %1071 = vmatpush2.msra.mxu0 0.0
    %1072 = vmatprep.subr.mxu0 0.0
    %1073 = vmatpush2.msra.mxu0 0.0
    %1074 = vmatprep.subr.mxu0 0.0
    %1075 = vmatpush2.msra.mxu0 0.0
    %1076 = vmatprep.subr.mxu0 0.0
    %1077 = vmatpush2.msra.mxu0 0.0
    %1078 = vmatprep.subr.mxu0 0.0
    %1079 = vmatpush2.msra.mxu0 0.0
    %1080 = vmatprep.subr.mxu0 0.0
    %1081 = vmatpush2.msra.mxu0 0.0
    %1082 = vmatprep.subr.mxu0 0.0
    %1083 = vmatpush2.msra.mxu0 0.0
    %1084 = vmatprep.subr.mxu0 0.0
    %1085 = vmatpush2.msra.mxu0 0.0
    %1086 = vmatprep.subr.mxu0 0.0
    %1087 = vmatpush2.msra.mxu0 0.0
    %1088 = vmatprep.subr.mxu0 0.0
    %1089 = vmatpush2.msra.mxu0 0.0
    %1090 = vmatprep.subr.mxu0 0.0
    %1091 = vmatpush2.msra.mxu0 0.0
    %1092 = vmatprep.subr.mxu0 0.0
    %1093 = vmatpush2.msra.mxu0 0.0
    %1094 = vmatprep.mubr.f32.mxu0 0.0
    %1095 = vmatmul.mubr.f32.gmra.mxu0 %v1028
    %v1096 = vpop.f32.mrf.mxu0
    %v1097 = vadd.f32 0.0, %v1096
    %v1098 = vpop.f32.mrf.mxu0
    %1099 = vdwg.mxu0
    %1100 = vrot.lane.b32.xlu0 %v158, 56
    %v1101 = vpop.permute.xlu0 %1100
    %v1104 = vsel %vm164, %v867, 0
    %1106 = vmatprep.subr.mxu0 0.0
    %1107 = vmatpush1.msra.mxu0 0.0
    %1108 = vmatprep.subr.mxu0 0.0
    %1109 = vmatpush1.msra.mxu0 0.0
    %1110 = vmatprep.subr.mxu0 0.0
    %1111 = vmatpush1.msra.mxu0 0.0
    %1112 = vmatprep.subr.mxu0 0.0
    %1113 = vmatpush1.msra.mxu0 0.0
    %1114 = vmatprep.subr.mxu0 0.0
    %1115 = vmatpush1.msra.mxu0 0.0
    %1116 = vmatprep.subr.mxu0 0.0
    %1117 = vmatpush1.msra.mxu0 0.0
    %1118 = vmatprep.subr.mxu0 0.0
    %1119 = vmatpush1.msra.mxu0 0.0
    %1120 = vmatprep.subr.mxu0 0.0
    %1121 = vmatpush1.msra.mxu0 0.0
    %1122 = vmatprep.subr.mxu0 0.0
    %1123 = vmatpush1.msra.mxu0 0.0
    %1124 = vmatprep.subr.mxu0 0.0
    %1125 = vmatpush1.msra.mxu0 0.0
    %1126 = vmatprep.subr.mxu0 0.0
    %1127 = vmatpush1.msra.mxu0 0.0
    %1128 = vmatprep.subr.mxu0 0.0
    %1129 = vmatpush1.msra.mxu0 0.0
    %1130 = vmatprep.subr.mxu0 0.0
    %1131 = vmatpush1.msra.mxu0 0.0
    %1132 = vmatprep.subr.mxu0 0.0
    %1133 = vmatpush1.msra.mxu0 0.0
    %1134 = vmatprep.subr.mxu0 0.0
    %1135 = vmatpush1.msra.mxu0 0.0
    %1136 = vmatprep.subr.mxu0 0.0
    %1137 = vmatpush1.msra.mxu0 %v1101
    %1138 = vmatprep.subr.mxu0 0.0
    %1139 = vmatpush2.msra.mxu0 0.0
    %1140 = vmatprep.subr.mxu0 0.0
    %1141 = vmatpush2.msra.mxu0 0.0
    %1142 = vmatprep.subr.mxu0 0.0
    %1143 = vmatpush2.msra.mxu0 0.0
    %1144 = vmatprep.subr.mxu0 0.0
    %1145 = vmatpush2.msra.mxu0 0.0
    %1146 = vmatprep.subr.mxu0 0.0
    %1147 = vmatpush2.msra.mxu0 0.0
    %1148 = vmatprep.subr.mxu0 0.0
    %1149 = vmatpush2.msra.mxu0 0.0
    %1150 = vmatprep.subr.mxu0 0.0
    %1151 = vmatpush2.msra.mxu0 0.0
    %1152 = vmatprep.subr.mxu0 0.0
    %1153 = vmatpush2.msra.mxu0 0.0
    %1154 = vmatprep.subr.mxu0 0.0
    %1155 = vmatpush2.msra.mxu0 0.0
    %1156 = vmatprep.subr.mxu0 0.0
    %1157 = vmatpush2.msra.mxu0 0.0
    %1158 = vmatprep.subr.mxu0 0.0
    %1159 = vmatpush2.msra.mxu0 0.0
    %1160 = vmatprep.subr.mxu0 0.0
    %1161 = vmatpush2.msra.mxu0 0.0
    %1162 = vmatprep.subr.mxu0 0.0
    %1163 = vmatpush2.msra.mxu0 0.0
    %1164 = vmatprep.subr.mxu0 0.0
    %1165 = vmatpush2.msra.mxu0 0.0
    %1166 = vmatprep.subr.mxu0 0.0
    %1167 = vmatpush2.msra.mxu0 0.0
    %1168 = vmatprep.subr.mxu0 0.0
    %1169 = vmatpush2.msra.mxu0 0.0
    %1170 = vmatprep.mubr.f32.mxu0 0.0
    %1171 = vmatmul.mubr.f32.gmra.mxu0 %v1104
    %v1172 = vpop.f32.mrf.mxu0
    %v1173 = vadd.f32 0.0, %v1172
    %v1174 = vpop.f32.mrf.mxu0
    %1175 = vdwg.mxu0
    %1176 = vrot.lane.b32.xlu0 %v153, 48
    %v1177 = vpop.permute.xlu0 %1176
    %v1180 = vsel %vm164, %v868, 0
    %1182 = vmatprep.subr.mxu0 0.0
    %1183 = vmatpush1.msra.mxu0 0.0
    %1184 = vmatprep.subr.mxu0 0.0
    %1185 = vmatpush1.msra.mxu0 0.0
    %1186 = vmatprep.subr.mxu0 0.0
    %1187 = vmatpush1.msra.mxu0 0.0
    %1188 = vmatprep.subr.mxu0 0.0
    %1189 = vmatpush1.msra.mxu0 0.0
    %1190 = vmatprep.subr.mxu0 0.0
    %1191 = vmatpush1.msra.mxu0 0.0
    %1192 = vmatprep.subr.mxu0 0.0
    %1193 = vmatpush1.msra.mxu0 0.0
    %1194 = vmatprep.subr.mxu0 0.0
    %1195 = vmatpush1.msra.mxu0 0.0
    %1196 = vmatprep.subr.mxu0 0.0
    %1197 = vmatpush1.msra.mxu0 0.0
    %1198 = vmatprep.subr.mxu0 0.0
    %1199 = vmatpush1.msra.mxu0 0.0
    %1200 = vmatprep.subr.mxu0 0.0
    %1201 = vmatpush1.msra.mxu0 0.0
    %1202 = vmatprep.subr.mxu0 0.0
    %1203 = vmatpush1.msra.mxu0 0.0
    %1204 = vmatprep.subr.mxu0 0.0
    %1205 = vmatpush1.msra.mxu0 0.0
    %1206 = vmatprep.subr.mxu0 0.0
    %1207 = vmatpush1.msra.mxu0 0.0
    %1208 = vmatprep.subr.mxu0 0.0
    %1209 = vmatpush1.msra.mxu0 0.0
    %1210 = vmatprep.subr.mxu0 0.0
    %1211 = vmatpush1.msra.mxu0 0.0
    %1212 = vmatprep.subr.mxu0 0.0
    %1213 = vmatpush1.msra.mxu0 %v1177
    %1214 = vmatprep.subr.mxu0 0.0
    %1215 = vmatpush2.msra.mxu0 0.0
    %1216 = vmatprep.subr.mxu0 0.0
    %1217 = vmatpush2.msra.mxu0 0.0
    %1218 = vmatprep.subr.mxu0 0.0
    %1219 = vmatpush2.msra.mxu0 0.0
    %1220 = vmatprep.subr.mxu0 0.0
    %1221 = vmatpush2.msra.mxu0 0.0
    %1222 = vmatprep.subr.mxu0 0.0
    %1223 = vmatpush2.msra.mxu0 0.0
    %1224 = vmatprep.subr.mxu0 0.0
    %1225 = vmatpush2.msra.mxu0 0.0
    %1226 = vmatprep.subr.mxu0 0.0
    %1227 = vmatpush2.msra.mxu0 0.0
    %1228 = vmatprep.subr.mxu0 0.0
    %1229 = vmatpush2.msra.mxu0 0.0
    %1230 = vmatprep.subr.mxu0 0.0
    %1231 = vmatpush2.msra.mxu0 0.0
    %1232 = vmatprep.subr.mxu0 0.0
    %1233 = vmatpush2.msra.mxu0 0.0
    %1234 = vmatprep.subr.mxu0 0.0
    %1235 = vmatpush2.msra.mxu0 0.0
    %1236 = vmatprep.subr.mxu0 0.0
    %1237 = vmatpush2.msra.mxu0 0.0
    %1238 = vmatprep.subr.mxu0 0.0
    %1239 = vmatpush2.msra.mxu0 0.0
    %1240 = vmatprep.subr.mxu0 0.0
    %1241 = vmatpush2.msra.mxu0 0.0
    %1242 = vmatprep.subr.mxu0 0.0
    %1243 = vmatpush2.msra.mxu0 0.0
    %1244 = vmatprep.subr.mxu0 0.0
    %1245 = vmatpush2.msra.mxu0 0.0
    %1246 = vmatprep.mubr.f32.mxu0 0.0
    %1247 = vmatmul.mubr.f32.gmra.mxu0 %v1180
    %v1248 = vpop.f32.mrf.mxu0
    %v1249 = vadd.f32 0.0, %v1248
    %v1250 = vpop.f32.mrf.mxu0
    %1251 = vdwg.mxu0
    %1252 = vrot.lane.b32.xlu0 %v158, 48
    %v1253 = vpop.permute.xlu0 %1252
    %v1256 = vsel %vm164, %v869, 0
    %1258 = vmatprep.subr.mxu0 0.0
    %1259 = vmatpush1.msra.mxu0 0.0
    %1260 = vmatprep.subr.mxu0 0.0
    %1261 = vmatpush1.msra.mxu0 0.0
    %1262 = vmatprep.subr.mxu0 0.0
    %1263 = vmatpush1.msra.mxu0 0.0
    %1264 = vmatprep.subr.mxu0 0.0
    %1265 = vmatpush1.msra.mxu0 0.0
    %1266 = vmatprep.subr.mxu0 0.0
    %1267 = vmatpush1.msra.mxu0 0.0
    %1268 = vmatprep.subr.mxu0 0.0
    %1269 = vmatpush1.msra.mxu0 0.0
    %1270 = vmatprep.subr.mxu0 0.0
    %1271 = vmatpush1.msra.mxu0 0.0
    %1272 = vmatprep.subr.mxu0 0.0
    %1273 = vmatpush1.msra.mxu0 0.0
    %1274 = vmatprep.subr.mxu0 0.0
    %1275 = vmatpush1.msra.mxu0 0.0
    %1276 = vmatprep.subr.mxu0 0.0
    %1277 = vmatpush1.msra.mxu0 0.0
    %1278 = vmatprep.subr.mxu0 0.0
    %1279 = vmatpush1.msra.mxu0 0.0
    %1280 = vmatprep.subr.mxu0 0.0
    %1281 = vmatpush1.msra.mxu0 0.0
    %1282 = vmatprep.subr.mxu0 0.0
    %1283 = vmatpush1.msra.mxu0 0.0
    %1284 = vmatprep.subr.mxu0 0.0
    %1285 = vmatpush1.msra.mxu0 0.0
    %1286 = vmatprep.subr.mxu0 0.0
    %1287 = vmatpush1.msra.mxu0 0.0
    %1288 = vmatprep.subr.mxu0 0.0
    %1289 = vmatpush1.msra.mxu0 %v1253
    %1290 = vmatprep.subr.mxu0 0.0
    %1291 = vmatpush2.msra.mxu0 0.0
    %1292 = vmatprep.subr.mxu0 0.0
    %1293 = vmatpush2.msra.mxu0 0.0
    %1294 = vmatprep.subr.mxu0 0.0
    %1295 = vmatpush2.msra.mxu0 0.0
    %1296 = vmatprep.subr.mxu0 0.0
    %1297 = vmatpush2.msra.mxu0 0.0
    %1298 = vmatprep.subr.mxu0 0.0
    %1299 = vmatpush2.msra.mxu0 0.0
    %1300 = vmatprep.subr.mxu0 0.0
    %1301 = vmatpush2.msra.mxu0 0.0
    %1302 = vmatprep.subr.mxu0 0.0
    %1303 = vmatpush2.msra.mxu0 0.0
    %1304 = vmatprep.subr.mxu0 0.0
    %1305 = vmatpush2.msra.mxu0 0.0
    %1306 = vmatprep.subr.mxu0 0.0
    %1307 = vmatpush2.msra.mxu0 0.0
    %1308 = vmatprep.subr.mxu0 0.0
    %1309 = vmatpush2.msra.mxu0 0.0
    %1310 = vmatprep.subr.mxu0 0.0
    %1311 = vmatpush2.msra.mxu0 0.0
    %1312 = vmatprep.subr.mxu0 0.0
    %1313 = vmatpush2.msra.mxu0 0.0
    %1314 = vmatprep.subr.mxu0 0.0
    %1315 = vmatpush2.msra.mxu0 0.0
    %1316 = vmatprep.subr.mxu0 0.0
    %1317 = vmatpush2.msra.mxu0 0.0
    %1318 = vmatprep.subr.mxu0 0.0
    %1319 = vmatpush2.msra.mxu0 0.0
    %1320 = vmatprep.subr.mxu0 0.0
    %1321 = vmatpush2.msra.mxu0 0.0
    %1322 = vmatprep.mubr.f32.mxu0 0.0
    %1323 = vmatmul.mubr.f32.gmra.mxu0 %v1256
    %v1324 = vpop.f32.mrf.mxu0
    %v1325 = vadd.f32 0.0, %v1324
    %v1326 = vpop.f32.mrf.mxu0
    %1327 = vdwg.mxu0
    %1328 = vrot.lane.b32.xlu0 %v153, 40
    %v1329 = vpop.permute.xlu0 %1328
    %v1332 = vsel %vm164, %v870, 0
    %1334 = vmatprep.subr.mxu0 0.0
    %1335 = vmatpush1.msra.mxu0 0.0
    %1336 = vmatprep.subr.mxu0 0.0
    %1337 = vmatpush1.msra.mxu0 0.0
    %1338 = vmatprep.subr.mxu0 0.0
    %1339 = vmatpush1.msra.mxu0 0.0
    %1340 = vmatprep.subr.mxu0 0.0
    %1341 = vmatpush1.msra.mxu0 0.0
    %1342 = vmatprep.subr.mxu0 0.0
    %1343 = vmatpush1.msra.mxu0 0.0
    %1344 = vmatprep.subr.mxu0 0.0
    %1345 = vmatpush1.msra.mxu0 0.0
    %1346 = vmatprep.subr.mxu0 0.0
    %1347 = vmatpush1.msra.mxu0 0.0
    %1348 = vmatprep.subr.mxu0 0.0
    %1349 = vmatpush1.msra.mxu0 0.0
    %1350 = vmatprep.subr.mxu0 0.0
    %1351 = vmatpush1.msra.mxu0 0.0
    %1352 = vmatprep.subr.mxu0 0.0
    %1353 = vmatpush1.msra.mxu0 0.0
    %1354 = vmatprep.subr.mxu0 0.0
    %1355 = vmatpush1.msra.mxu0 0.0
    %1356 = vmatprep.subr.mxu0 0.0
    %1357 = vmatpush1.msra.mxu0 0.0
    %1358 = vmatprep.subr.mxu0 0.0
    %1359 = vmatpush1.msra.mxu0 0.0
    %1360 = vmatprep.subr.mxu0 0.0
    %1361 = vmatpush1.msra.mxu0 0.0
    %1362 = vmatprep.subr.mxu0 0.0
    %1363 = vmatpush1.msra.mxu0 0.0
    %1364 = vmatprep.subr.mxu0 0.0
    %1365 = vmatpush1.msra.mxu0 %v1329
    %1366 = vmatprep.subr.mxu0 0.0
    %1367 = vmatpush2.msra.mxu0 0.0
    %1368 = vmatprep.subr.mxu0 0.0
    %1369 = vmatpush2.msra.mxu0 0.0
    %1370 = vmatprep.subr.mxu0 0.0
    %1371 = vmatpush2.msra.mxu0 0.0
    %1372 = vmatprep.subr.mxu0 0.0
    %1373 = vmatpush2.msra.mxu0 0.0
    %1374 = vmatprep.subr.mxu0 0.0
    %1375 = vmatpush2.msra.mxu0 0.0
    %1376 = vmatprep.subr.mxu0 0.0
    %1377 = vmatpush2.msra.mxu0 0.0
    %1378 = vmatprep.subr.mxu0 0.0
    %1379 = vmatpush2.msra.mxu0 0.0
    %1380 = vmatprep.subr.mxu0 0.0
    %1381 = vmatpush2.msra.mxu0 0.0
    %1382 = vmatprep.subr.mxu0 0.0
    %1383 = vmatpush2.msra.mxu0 0.0
    %1384 = vmatprep.subr.mxu0 0.0
    %1385 = vmatpush2.msra.mxu0 0.0
    %1386 = vmatprep.subr.mxu0 0.0
    %1387 = vmatpush2.msra.mxu0 0.0
    %1388 = vmatprep.subr.mxu0 0.0
    %1389 = vmatpush2.msra.mxu0 0.0
    %1390 = vmatprep.subr.mxu0 0.0
    %1391 = vmatpush2.msra.mxu0 0.0
    %1392 = vmatprep.subr.mxu0 0.0
    %1393 = vmatpush2.msra.mxu0 0.0
    %1394 = vmatprep.subr.mxu0 0.0
    %1395 = vmatpush2.msra.mxu0 0.0
    %1396 = vmatprep.subr.mxu0 0.0
    %1397 = vmatpush2.msra.mxu0 0.0
    %1398 = vmatprep.mubr.f32.mxu0 0.0
    %1399 = vmatmul.mubr.f32.gmra.mxu0 %v1332
    %v1400 = vpop.f32.mrf.mxu0
    %v1401 = vadd.f32 0.0, %v1400
    %v1402 = vpop.f32.mrf.mxu0
    %1403 = vdwg.mxu0
    %1404 = vrot.lane.b32.xlu0 %v158, 40
    %v1405 = vpop.permute.xlu0 %1404
    %v1408 = vsel %vm164, %v871, 0
    %1410 = vmatprep.subr.mxu0 0.0
    %1411 = vmatpush1.msra.mxu0 0.0
    %1412 = vmatprep.subr.mxu0 0.0
    %1413 = vmatpush1.msra.mxu0 0.0
    %1414 = vmatprep.subr.mxu0 0.0
    %1415 = vmatpush1.msra.mxu0 0.0
    %1416 = vmatprep.subr.mxu0 0.0
    %1417 = vmatpush1.msra.mxu0 0.0
    %1418 = vmatprep.subr.mxu0 0.0
    %1419 = vmatpush1.msra.mxu0 0.0
    %1420 = vmatprep.subr.mxu0 0.0
    %1421 = vmatpush1.msra.mxu0 0.0
    %1422 = vmatprep.subr.mxu0 0.0
    %1423 = vmatpush1.msra.mxu0 0.0
    %1424 = vmatprep.subr.mxu0 0.0
    %1425 = vmatpush1.msra.mxu0 0.0
    %1426 = vmatprep.subr.mxu0 0.0
    %1427 = vmatpush1.msra.mxu0 0.0
    %1428 = vmatprep.subr.mxu0 0.0
    %1429 = vmatpush1.msra.mxu0 0.0
    %1430 = vmatprep.subr.mxu0 0.0
    %1431 = vmatpush1.msra.mxu0 0.0
    %1432 = vmatprep.subr.mxu0 0.0
    %1433 = vmatpush1.msra.mxu0 0.0
    %1434 = vmatprep.subr.mxu0 0.0
    %1435 = vmatpush1.msra.mxu0 0.0
    %1436 = vmatprep.subr.mxu0 0.0
    %1437 = vmatpush1.msra.mxu0 0.0
    %1438 = vmatprep.subr.mxu0 0.0
    %1439 = vmatpush1.msra.mxu0 0.0
    %1440 = vmatprep.subr.mxu0 0.0
    %1441 = vmatpush1.msra.mxu0 %v1405
    %1442 = vmatprep.subr.mxu0 0.0
    %1443 = vmatpush2.msra.mxu0 0.0
    %1444 = vmatprep.subr.mxu0 0.0
    %1445 = vmatpush2.msra.mxu0 0.0
    %1446 = vmatprep.subr.mxu0 0.0
    %1447 = vmatpush2.msra.mxu0 0.0
    %1448 = vmatprep.subr.mxu0 0.0
    %1449 = vmatpush2.msra.mxu0 0.0
    %1450 = vmatprep.subr.mxu0 0.0
    %1451 = vmatpush2.msra.mxu0 0.0
    %1452 = vmatprep.subr.mxu0 0.0
    %1453 = vmatpush2.msra.mxu0 0.0
    %1454 = vmatprep.subr.mxu0 0.0
    %1455 = vmatpush2.msra.mxu0 0.0
    %1456 = vmatprep.subr.mxu0 0.0
    %1457 = vmatpush2.msra.mxu0 0.0
    %1458 = vmatprep.subr.mxu0 0.0
    %1459 = vmatpush2.msra.mxu0 0.0
    %1460 = vmatprep.subr.mxu0 0.0
    %1461 = vmatpush2.msra.mxu0 0.0
    %1462 = vmatprep.subr.mxu0 0.0
    %1463 = vmatpush2.msra.mxu0 0.0
    %1464 = vmatprep.subr.mxu0 0.0
    %1465 = vmatpush2.msra.mxu0 0.0
    %1466 = vmatprep.subr.mxu0 0.0
    %1467 = vmatpush2.msra.mxu0 0.0
    %1468 = vmatprep.subr.mxu0 0.0
    %1469 = vmatpush2.msra.mxu0 0.0
    %1470 = vmatprep.subr.mxu0 0.0
    %1471 = vmatpush2.msra.mxu0 0.0
    %1472 = vmatprep.subr.mxu0 0.0
    %1473 = vmatpush2.msra.mxu0 0.0
    %1474 = vmatprep.mubr.f32.mxu0 0.0
    %1475 = vmatmul.mubr.f32.gmra.mxu0 %v1408
    %v1476 = vpop.f32.mrf.mxu0
    %v1477 = vadd.f32 0.0, %v1476
    %v1478 = vpop.f32.mrf.mxu0
    %1479 = vdwg.mxu0
    %1482 = vrot.lane.b32.xlu0 %v1097, 8
    %v1483 = vpop.permute.xlu0 %1482
    %1484 = vrot.lane.b32.xlu0 %v1173, 8
    %v1485 = vpop.permute.xlu0 %1484
    %1490 = vrot.lane.b32.xlu0 %v1249, 16
    %v1491 = vpop.permute.xlu0 %1490
    %1492 = vrot.lane.b32.xlu0 %v1325, 16
    %v1493 = vpop.permute.xlu0 %1492
    %1498 = vrot.lane.b32.xlu0 %v1401, 24
    %v1499 = vpop.permute.xlu0 %1498
    %1500 = vrot.lane.b32.xlu0 %v1477, 24
    %v1501 = vpop.permute.xlu0 %1500
    %v1504 = vsel %vm164, %v945, %v1483
    %v1505 = vsel %vm164, %v1021, %v1485
    %vm1506 = vcmask 130048
    %v1507 = vsel %vm1506, %v1504, %v1491
    %v1508 = vsel %vm1506, %v1505, %v1493
    %vm1509 = vcmask 195584
    %v1510 = vsel %vm1509, %v1507, %v1499
    %v1511 = vsel %vm1509, %v1508, %v1501
    %v1512 = vld [vmem:[%s3] sm:$0xff]
    %v1513 = vld [vmem:[%s3 + $0x8] sm:$0xff]
    %v1514 = vld [vmem:[%s3 + $0x10] sm:$0xff]
    %v1515 = vld [vmem:[%s3 + $0x18] sm:$0xff]
    %v1516 = vld [vmem:[%s4] sm:$0x1]
    %v1517 = vlaneseq
    %v1518 = vshrl.u32 %v1517, 7
    %v1519 = vsub.s32 0, %v1518
    %v1520 = vrot.slane %v1516, %v1519
    %v1522 = vsel %vm79, %v1510, 0
    %v1525 = vsel %vm79, %v1511, 0
    %1527 = vmatprep.subr.mxu0 0.0
    %1528 = vmatpush1.msra.mxu0 0.0
    %1529 = vmatprep.subr.mxu0 0.0
    %1530 = vmatpush1.msra.mxu0 0.0
    %1531 = vmatprep.subr.mxu0 0.0
    %1532 = vmatpush1.msra.mxu0 0.0
    %1533 = vmatprep.subr.mxu0 0.0
    %1534 = vmatpush1.msra.mxu0 0.0
    %1535 = vmatprep.subr.mxu0 0.0
    %1536 = vmatpush1.msra.mxu0 0.0
    %1537 = vmatprep.subr.mxu0 0.0
    %1538 = vmatpush1.msra.mxu0 0.0
    %1539 = vmatprep.subr.mxu0 0.0
    %1540 = vmatpush1.msra.mxu0 0.0
    %1541 = vmatprep.subr.mxu0 0.0
    %1542 = vmatpush1.msra.mxu0 0.0
    %1543 = vmatprep.subr.mxu0 0.0
    %1544 = vmatpush1.msra.mxu0 0.0
    %1545 = vmatprep.subr.mxu0 0.0
    %1546 = vmatpush1.msra.mxu0 0.0
    %1547 = vmatprep.subr.mxu0 0.0
    %1548 = vmatpush1.msra.mxu0 0.0
    %1549 = vmatprep.subr.mxu0 0.0
    %1550 = vmatpush1.msra.mxu0 0.0
    %1551 = vmatprep.subr.mxu0 0.0
    %1552 = vmatpush1.msra.mxu0 %v1515
    %1553 = vmatprep.subr.mxu0 0.0
    %1554 = vmatpush1.msra.mxu0 %v1514
    %1555 = vmatprep.subr.mxu0 0.0
    %1556 = vmatpush1.msra.mxu0 %v1513
    %1557 = vmatprep.subr.mxu0 0.0
    %1558 = vmatpush1.msra.mxu0 %v1512
    %1559 = vmatprep.subr.mxu0 0.0
    %1560 = vmatpush2.msra.mxu0 0.0
    %1561 = vmatprep.subr.mxu0 0.0
    %1562 = vmatpush2.msra.mxu0 0.0
    %1563 = vmatprep.subr.mxu0 0.0
    %1564 = vmatpush2.msra.mxu0 0.0
    %1565 = vmatprep.subr.mxu0 0.0
    %1566 = vmatpush2.msra.mxu0 0.0
    %1567 = vmatprep.subr.mxu0 0.0
    %1568 = vmatpush2.msra.mxu0 0.0
    %1569 = vmatprep.subr.mxu0 0.0
    %1570 = vmatpush2.msra.mxu0 0.0
    %1571 = vmatprep.subr.mxu0 0.0
    %1572 = vmatpush2.msra.mxu0 0.0
    %1573 = vmatprep.subr.mxu0 0.0
    %1574 = vmatpush2.msra.mxu0 0.0
    %1575 = vmatprep.subr.mxu0 0.0
    %1576 = vmatpush2.msra.mxu0 0.0
    %1577 = vmatprep.subr.mxu0 0.0
    %1578 = vmatpush2.msra.mxu0 0.0
    %1579 = vmatprep.subr.mxu0 0.0
    %1580 = vmatpush2.msra.mxu0 0.0
    %1581 = vmatprep.subr.mxu0 0.0
    %1582 = vmatpush2.msra.mxu0 0.0
    %1583 = vmatprep.subr.mxu0 0.0
    %1584 = vmatpush2.msra.mxu0 0.0
    %1585 = vmatprep.subr.mxu0 0.0
    %1586 = vmatpush2.msra.mxu0 0.0
    %1587 = vmatprep.subr.mxu0 0.0
    %1588 = vmatpush2.msra.mxu0 0.0
    %1589 = vmatprep.subr.mxu0 0.0
    %1590 = vmatpush2.msra.mxu0 0.0
    %1591 = vmatprep.mubr.f32.mxu0 0.0
    %1592 = vmatmul.mubr.f32.gmra.mxu0 %v1522
    %v1593 = vpop.f32.mrf.mxu0
    %v1594 = vadd.f32 %v1520, %v1593
    %v1595 = vpop.f32.mrf.mxu0
    %1596 = vmatprep.mubr.f32.mxu0 0.0
    %1597 = vmatmul.mubr.f32.gmra.mxu0 %v1525
    %v1598 = vpop.f32.mrf.mxu0
    %v1599 = vadd.f32 %v1520, %v1598
    %v1600 = vpop.f32.mrf.mxu0
    %1601 = vdwg.mxu0
    %v1602 = vadd.f32 %v68, %v1594
    %v1603 = vadd.f32 %v69, %v1599
    %v1604 = vld [vmem:[%s9] sm:$0x1]
    %v1605 = vld [vmem:[%s10] sm:$0x1]
    %v1606 = vsel %vm79, %v1602, 0.0
    %1607 = vadd.xlane.f32.xlu0 %v1606
    %v1608 = vpop.xlane.xlu0 %1607
    %v1609 = vsel %vm79, %v1603, 0.0
    %1610 = vadd.xlane.f32.xlu0 %v1609
    %v1611 = vpop.xlane.xlu0 %1610
    %v1612 = vrcp.pop 32.0
    %v1613 = vmul.f32 %v1608, %v1612
    %v1614 = vmul.f32 %v1611, %v1612
    %v1615 = vsub.f32 %v1602, %v1613
    %v1616 = vsub.f32 %v1603, %v1614
    %v1617 = vmul.f32 %v1615, %v1615
    %v1618 = vmul.f32 %v1616, %v1616
    %v1619 = vsel %vm79, %v1617, 0.0
    %1620 = vadd.xlane.f32.xlu0 %v1619
    %v1621 = vpop.xlane.xlu0 %1620
    %v1622 = vsel %vm79, %v1618, 0.0
    %1623 = vadd.xlane.f32.xlu0 %v1622
    %v1624 = vpop.xlane.xlu0 %1623
    %v1625 = vmul.f32 %v1621, %v1612
    %v1626 = vmul.f32 %v1624, %v1612
    %v1627 = vadd.f32 %v1625, 1e-05
    %v1628 = vadd.f32 %v1626, 1e-05
    %v1629 = vrsqrt.pop %v1627
    %v1630 = vrsqrt.pop %v1628
    %v1631 = vmul.f32 %v1615, %v1629
    %v1632 = vmul.f32 %v1616, %v1630
    %v1633 = vlaneseq
    %v1634 = vshrl.u32 %v1633, 7
    %v1635 = vsub.s32 0, %v1634
    %v1636 = vrot.slane %v1604, %v1635
    %v1637 = vmul.f32 %v1631, %v1636
    %v1638 = vmul.f32 %v1632, %v1636
    %v1639 = vlaneseq
    %v1640 = vshrl.u32 %v1639, 7
    %v1641 = vsub.s32 0, %v1640
    %v1642 = vrot.slane %v1605, %v1641
    %v1643 = vadd.f32 %v1637, %v1642
    %v1644 = vadd.f32 %v1638, %v1642
    %v1645 = vld [vmem:[%s5] sm:$0xff]
    %v1646 = vld [vmem:[%s5 + $0x8] sm:$0xff]
    %v1647 = vld [vmem:[%s5 + $0x10] sm:$0xff]
    %v1648 = vld [vmem:[%s5 + $0x18] sm:$0xff]
    %v1649 = vld [vmem:[%s6] sm:$0x1]
    %v1650 = vlaneseq
    %v1651 = vshrl.u32 %v1650, 7
    %v1652 = vsub.s32 0, %v1651
    %v1653 = vrot.slane %v1649, %v1652
    %v1655 = vsel %vm79, %v1643, 0
    %v1658 = vsel %vm79, %v1644, 0
    %1660 = vmatprep.subr.mxu0 0.0
    %1661 = vmatpush1.msra.mxu0 0.0
    %1662 = vmatprep.subr.mxu0 0.0
    %1663 = vmatpush1.msra.mxu0 0.0
    %1664 = vmatprep.subr.mxu0 0.0
    %1665 = vmatpush1.msra.mxu0 0.0
    %1666 = vmatprep.subr.mxu0 0.0
    %1667 = vmatpush1.msra.mxu0 0.0
    %1668 = vmatprep.subr.mxu0 0.0
    %1669 = vmatpush1.msra.mxu0 0.0
    %1670 = vmatprep.subr.mxu0 0.0
    %1671 = vmatpush1.msra.mxu0 0.0
    %1672 = vmatprep.subr.mxu0 0.0
    %1673 = vmatpush1.msra.mxu0 0.0
    %1674 = vmatprep.subr.mxu0 0.0
    %1675 = vmatpush1.msra.mxu0 0.0
    %1676 = vmatprep.subr.mxu0 0.0
    %1677 = vmatpush1.msra.mxu0 0.0
    %1678 = vmatprep.subr.mxu0 0.0
    %1679 = vmatpush1.msra.mxu0 0.0
    %1680 = vmatprep.subr.mxu0 0.0
    %1681 = vmatpush1.msra.mxu0 0.0
    %1682 = vmatprep.subr.mxu0 0.0
    %1683 = vmatpush1.msra.mxu0 0.0
    %1684 = vmatprep.subr.mxu0 0.0
    %1685 = vmatpush1.msra.mxu0 %v1648
    %1686 = vmatprep.subr.mxu0 0.0
    %1687 = vmatpush1.msra.mxu0 %v1647
    %1688 = vmatprep.subr.mxu0 0.0
    %1689 = vmatpush1.msra.mxu0 %v1646
    %1690 = vmatprep.subr.mxu0 0.0
    %1691 = vmatpush1.msra.mxu0 %v1645
    %1692 = vmatprep.subr.mxu0 0.0
    %1693 = vmatpush2.msra.mxu0 0.0
    %1694 = vmatprep.subr.mxu0 0.0
    %1695 = vmatpush2.msra.mxu0 0.0
    %1696 = vmatprep.subr.mxu0 0.0
    %1697 = vmatpush2.msra.mxu0 0.0
    %1698 = vmatprep.subr.mxu0 0.0
    %1699 = vmatpush2.msra.mxu0 0.0
    %1700 = vmatprep.subr.mxu0 0.0
    %1701 = vmatpush2.msra.mxu0 0.0
    %1702 = vmatprep.subr.mxu0 0.0
    %1703 = vmatpush2.msra.mxu0 0.0
    %1704 = vmatprep.subr.mxu0 0.0
    %1705 = vmatpush2.msra.mxu0 0.0
    %1706 = vmatprep.subr.mxu0 0.0
    %1707 = vmatpush2.msra.mxu0 0.0
    %1708 = vmatprep.subr.mxu0 0.0
    %1709 = vmatpush2.msra.mxu0 0.0
    %1710 = vmatprep.subr.mxu0 0.0
    %1711 = vmatpush2.msra.mxu0 0.0
    %1712 = vmatprep.subr.mxu0 0.0
    %1713 = vmatpush2.msra.mxu0 0.0
    %1714 = vmatprep.subr.mxu0 0.0
    %1715 = vmatpush2.msra.mxu0 0.0
    %1716 = vmatprep.subr.mxu0 0.0
    %1717 = vmatpush2.msra.mxu0 0.0
    %1718 = vmatprep.subr.mxu0 0.0
    %1719 = vmatpush2.msra.mxu0 0.0
    %1720 = vmatprep.subr.mxu0 0.0
    %1721 = vmatpush2.msra.mxu0 0.0
    %1722 = vmatprep.subr.mxu0 0.0
    %1723 = vmatpush2.msra.mxu0 0.0
    %1724 = vmatprep.mubr.f32.mxu0 0.0
    %1725 = vmatmul.mubr.f32.gmra.mxu0 %v1655
    %v1726 = vpop.f32.mrf.mxu0
    %v1727 = vadd.f32 %v1653, %v1726
    %v1728 = vpop.f32.mrf.mxu0
    %1729 = vmatprep.mubr.f32.mxu0 0.0
    %1730 = vmatmul.mubr.f32.gmra.mxu0 %v1658
    %v1731 = vpop.f32.mrf.mxu0
    %v1732 = vadd.f32 %v1653, %v1731
    %v1733 = vpop.f32.mrf.mxu0
    %1734 = vdwg.mxu0
    %v1735 = vmax.f32 %v1727, 0.0
    %v1736 = vmax.f32 %v1732, 0.0
    %v1737 = vld [vmem:[%s7] sm:$0xff]
    %v1738 = vld [vmem:[%s7 + $0x8] sm:$0xff]
    %v1739 = vld [vmem:[%s7 + $0x10] sm:$0xff]
    %v1740 = vld [vmem:[%s7 + $0x18] sm:$0xff]
    %v1741 = vld [vmem:[%s7 + $0x20] sm:$0xff]
    %v1742 = vld [vmem:[%s7 + $0x28] sm:$0xff]
    %v1743 = vld [vmem:[%s7 + $0x30] sm:$0xff]
    %v1744 = vld [vmem:[%s7 + $0x38] sm:$0xff]
    %v1745 = vld [vmem:[%s8] sm:$0x1]
    %v1746 = vlaneseq
    %v1747 = vshrl.u32 %v1746, 7
    %v1748 = vsub.s32 0, %v1747
    %v1749 = vrot.slane %v1745, %v1748
    %vm1750 = vcmask 523264
    %v1752 = vsel %vm1750, %v1735, 0
    %v1755 = vsel %vm1750, %v1736, 0
    %1757 = vmatprep.subr.mxu0 0.0
    %1758 = vmatpush1.msra.mxu0 0.0
    %1759 = vmatprep.subr.mxu0 0.0
    %1760 = vmatpush1.msra.mxu0 0.0
    %1761 = vmatprep.subr.mxu0 0.0
    %1762 = vmatpush1.msra.mxu0 0.0
    %1763 = vmatprep.subr.mxu0 0.0
    %1764 = vmatpush1.msra.mxu0 0.0
    %1765 = vmatprep.subr.mxu0 0.0
    %1766 = vmatpush1.msra.mxu0 0.0
    %1767 = vmatprep.subr.mxu0 0.0
    %1768 = vmatpush1.msra.mxu0 0.0
    %1769 = vmatprep.subr.mxu0 0.0
    %1770 = vmatpush1.msra.mxu0 0.0
    %1771 = vmatprep.subr.mxu0 0.0
    %1772 = vmatpush1.msra.mxu0 0.0
    %1773 = vmatprep.subr.mxu0 0.0
    %1774 = vmatpush1.msra.mxu0 %v1744
    %1775 = vmatprep.subr.mxu0 0.0
    %1776 = vmatpush1.msra.mxu0 %v1743
    %1777 = vmatprep.subr.mxu0 0.0
    %1778 = vmatpush1.msra.mxu0 %v1742
    %1779 = vmatprep.subr.mxu0 0.0
    %1780 = vmatpush1.msra.mxu0 %v1741
    %1781 = vmatprep.subr.mxu0 0.0
    %1782 = vmatpush1.msra.mxu0 %v1740
    %1783 = vmatprep.subr.mxu0 0.0
    %1784 = vmatpush1.msra.mxu0 %v1739
    %1785 = vmatprep.subr.mxu0 0.0
    %1786 = vmatpush1.msra.mxu0 %v1738
    %1787 = vmatprep.subr.mxu0 0.0
    %1788 = vmatpush1.msra.mxu0 %v1737
    %1789 = vmatprep.subr.mxu0 0.0
    %1790 = vmatpush2.msra.mxu0 0.0
    %1791 = vmatprep.subr.mxu0 0.0
    %1792 = vmatpush2.msra.mxu0 0.0
    %1793 = vmatprep.subr.mxu0 0.0
    %1794 = vmatpush2.msra.mxu0 0.0
    %1795 = vmatprep.subr.mxu0 0.0
    %1796 = vmatpush2.msra.mxu0 0.0
    %1797 = vmatprep.subr.mxu0 0.0
    %1798 = vmatpush2.msra.mxu0 0.0
    %1799 = vmatprep.subr.mxu0 0.0
    %1800 = vmatpush2.msra.mxu0 0.0
    %1801 = vmatprep.subr.mxu0 0.0
    %1802 = vmatpush2.msra.mxu0 0.0
    %1803 = vmatprep.subr.mxu0 0.0
    %1804 = vmatpush2.msra.mxu0 0.0
    %1805 = vmatprep.subr.mxu0 0.0
    %1806 = vmatpush2.msra.mxu0 0.0
    %1807 = vmatprep.subr.mxu0 0.0
    %1808 = vmatpush2.msra.mxu0 0.0
    %1809 = vmatprep.subr.mxu0 0.0
    %1810 = vmatpush2.msra.mxu0 0.0
    %1811 = vmatprep.subr.mxu0 0.0
    %1812 = vmatpush2.msra.mxu0 0.0
    %1813 = vmatprep.subr.mxu0 0.0
    %1814 = vmatpush2.msra.mxu0 0.0
    %1815 = vmatprep.subr.mxu0 0.0
    %1816 = vmatpush2.msra.mxu0 0.0
    %1817 = vmatprep.subr.mxu0 0.0
    %1818 = vmatpush2.msra.mxu0 0.0
    %1819 = vmatprep.subr.mxu0 0.0
    %1820 = vmatpush2.msra.mxu0 0.0
    %1821 = vmatprep.mubr.f32.mxu0 0.0
    %1822 = vmatmul.mubr.f32.gmra.mxu0 %v1752
    %v1823 = vpop.f32.mrf.mxu0
    %v1824 = vadd.f32 %v1749, %v1823
    %v1825 = vpop.f32.mrf.mxu0
    %1826 = vmatprep.mubr.f32.mxu0 0.0
    %1827 = vmatmul.mubr.f32.gmra.mxu0 %v1755
    %v1828 = vpop.f32.mrf.mxu0
    %v1829 = vadd.f32 %v1749, %v1828
    %v1830 = vpop.f32.mrf.mxu0
    %1831 = vdwg.mxu0
    %v1832 = vadd.f32 %v1643, %v1824
    %v1833 = vadd.f32 %v1644, %v1829
    %v1834 = vld [vmem:[%s11] sm:$0x1]
    %v1835 = vld [vmem:[%s12] sm:$0x1]
    %v1836 = vsel %vm79, %v1832, 0.0
    %1837 = vadd.xlane.f32.xlu0 %v1836
    %v1838 = vpop.xlane.xlu0 %1837
    %v1839 = vsel %vm79, %v1833, 0.0
    %1840 = vadd.xlane.f32.xlu0 %v1839
    %v1841 = vpop.xlane.xlu0 %1840
    %v1842 = vmul.f32 %v1838, %v1612
    %v1843 = vmul.f32 %v1841, %v1612
    %v1844 = vsub.f32 %v1832, %v1842
    %v1845 = vsub.f32 %v1833, %v1843
    %v1846 = vmul.f32 %v1844, %v1844
    %v1847 = vmul.f32 %v1845, %v1845
    %v1848 = vsel %vm79, %v1846, 0.0
    %1849 = vadd.xlane.f32.xlu0 %v1848
    %v1850 = vpop.xlane.xlu0 %1849
    %v1851 = vsel %vm79, %v1847, 0.0
    %1852 = vadd.xlane.f32.xlu0 %v1851
    %v1853 = vpop.xlane.xlu0 %1852
    %v1854 = vmul.f32 %v1850, %v1612
    %v1855 = vmul.f32 %v1853, %v1612
    %v1856 = vadd.f32 %v1854, 1e-05
    %v1857 = vadd.f32 %v1855, 1e-05
    %v1858 = vrsqrt.pop %v1856
    %v1859 = vrsqrt.pop %v1857
    %v1860 = vmul.f32 %v1844, %v1858
    %v1861 = vmul.f32 %v1845, %v1859
    %v1862 = vlaneseq
    %v1863 = vshrl.u32 %v1862, 7
    %v1864 = vsub.s32 0, %v1863
    %v1865 = vrot.slane %v1834, %v1864
    %v1866 = vmul.f32 %v1860, %v1865
    %v1867 = vmul.f32 %v1861, %v1865
    %v1868 = vlaneseq
    %v1869 = vshrl.u32 %v1868, 7
    %v1870 = vsub.s32 0, %v1869
    %v1871 = vrot.slane %v1835, %v1870
    %v1872 = vadd.f32 %v1866, %v1871
    %v1873 = vadd.f32 %v1867, %v1871
    %s1874 = scalar_lea.vmem %s1, 32
    %v1875 = vld [vmem:[%s1874] sm:$0xff]
    %v1876 = vld [vmem:[%s1874 + $0x8] sm:$0xff]
    %v1877 = vld [vmem:[%s1874 + $0x10] sm:$0xff]
    %v1878 = vld [vmem:[%s1874 + $0x18] sm:$0xff]
    %v1879 = vld [vmem:[%s2 + $0x1] sm:$0x1]
    %v1880 = vlaneseq
    %v1881 = vshrl.u32 %v1880, 7
    %v1882 = vsub.s32 0, %v1881
    %v1883 = vrot.slane %v1879, %v1882
    %v1885 = vsel %vm79, %v1872, 0
    %v1888 = vsel %vm79, %v1873, 0
    %1890 = vmatprep.subr.mxu0 0.0
    %1891 = vmatpush1.msra.mxu0 0.0
    %1892 = vmatprep.subr.mxu0 0.0
    %1893 = vmatpush1.msra.mxu0 0.0
    %1894 = vmatprep.subr.mxu0 0.0
    %1895 = vmatpush1.msra.mxu0 0.0
    %1896 = vmatprep.subr.mxu0 0.0
    %1897 = vmatpush1.msra.mxu0 0.0
    %1898 = vmatprep.subr.mxu0 0.0
    %1899 = vmatpush1.msra.mxu0 0.0
    %1900 = vmatprep.subr.mxu0 0.0
    %1901 = vmatpush1.msra.mxu0 0.0
    %1902 = vmatprep.subr.mxu0 0.0
    %1903 = vmatpush1.msra.mxu0 0.0
    %1904 = vmatprep.subr.mxu0 0.0
    %1905 = vmatpush1.msra.mxu0 0.0
    %1906 = vmatprep.subr.mxu0 0.0
    %1907 = vmatpush1.msra.mxu0 0.0
    %1908 = vmatprep.subr.mxu0 0.0
    %1909 = vmatpush1.msra.mxu0 0.0
    %1910 = vmatprep.subr.mxu0 0.0
    %1911 = vmatpush1.msra.mxu0 0.0
    %1912 = vmatprep.subr.mxu0 0.0
    %1913 = vmatpush1.msra.mxu0 0.0
    %1914 = vmatprep.subr.mxu0 0.0
    %1915 = vmatpush1.msra.mxu0 %v1878
    %1916 = vmatprep.subr.mxu0 0.0
    %1917 = vmatpush1.msra.mxu0 %v1877
    %1918 = vmatprep.subr.mxu0 0.0
    %1919 = vmatpush1.msra.mxu0 %v1876
    %1920 = vmatprep.subr.mxu0 0.0
    %1921 = vmatpush1.msra.mxu0 %v1875
    %1922 = vmatprep.subr.mxu0 0.0
    %1923 = vmatpush2.msra.mxu0 0.0
    %1924 = vmatprep.subr.mxu0 0.0
    %1925 = vmatpush2.msra.mxu0 0.0
    %1926 = vmatprep.subr.mxu0 0.0
    %1927 = vmatpush2.msra.mxu0 0.0
    %1928 = vmatprep.subr.mxu0 0.0
    %1929 = vmatpush2.msra.mxu0 0.0
    %1930 = vmatprep.subr.mxu0 0.0
    %1931 = vmatpush2.msra.mxu0 0.0
    %1932 = vmatprep.subr.mxu0 0.0
    %1933 = vmatpush2.msra.mxu0 0.0
    %1934 = vmatprep.subr.mxu0 0.0
    %1935 = vmatpush2.msra.mxu0 0.0
    %1936 = vmatprep.subr.mxu0 0.0
    %1937 = vmatpush2.msra.mxu0 0.0
    %1938 = vmatprep.subr.mxu0 0.0
    %1939 = vmatpush2.msra.mxu0 0.0
    %1940 = vmatprep.subr.mxu0 0.0
    %1941 = vmatpush2.msra.mxu0 0.0
    %1942 = vmatprep.subr.mxu0 0.0
    %1943 = vmatpush2.msra.mxu0 0.0
    %1944 = vmatprep.subr.mxu0 0.0
    %1945 = vmatpush2.msra.mxu0 0.0
    %1946 = vmatprep.subr.mxu0 0.0
    %1947 = vmatpush2.msra.mxu0 0.0
    %1948 = vmatprep.subr.mxu0 0.0
    %1949 = vmatpush2.msra.mxu0 0.0
    %1950 = vmatprep.subr.mxu0 0.0
    %1951 = vmatpush2.msra.mxu0 0.0
    %1952 = vmatprep.subr.mxu0 0.0
    %1953 = vmatpush2.msra.mxu0 0.0
    %1954 = vmatprep.mubr.f32.mxu0 0.0
    %1955 = vmatmul.mubr.f32.gmra.mxu0 %v1885
    %v1956 = vpop.f32.mrf.mxu0
    %v1957 = vadd.f32 %v1883, %v1956
    %v1958 = vpop.f32.mrf.mxu0
    %1959 = vmatprep.mubr.f32.mxu0 0.0
    %1960 = vmatmul.mubr.f32.gmra.mxu0 %v1888
    %v1961 = vpop.f32.mrf.mxu0
    %v1962 = vadd.f32 %v1883, %v1961
    %v1963 = vpop.f32.mrf.mxu0
    %1964 = vdwg.mxu0
    %1966 = vrot.lane.b32.xlu0 %v1957, 96
    %v1967 = vpop.permute.xlu0 %1966
    %v1968 = vsel %vm164, %v1957, 0
    %v1970 = vsel %vm164, %v1967, 0
    %1972 = vmatprep.subr.mxu0 0.0
    %1973 = vmatpush1.xpose.msra.mxu0 0.0
    %1974 = vmatprep.subr.mxu0 0.0
    %1975 = vmatpush1.xpose.msra.mxu0 0.0
    %1976 = vmatprep.subr.mxu0 0.0
    %1977 = vmatpush1.xpose.msra.mxu0 0.0
    %1978 = vmatprep.subr.mxu0 0.0
    %1979 = vmatpush1.xpose.msra.mxu0 0.0
    %1980 = vmatprep.subr.mxu0 0.0
    %1981 = vmatpush1.xpose.msra.mxu0 0.0
    %1982 = vmatprep.subr.mxu0 0.0
    %1983 = vmatpush1.xpose.msra.mxu0 0.0
    %1984 = vmatprep.subr.mxu0 0.0
    %1985 = vmatpush1.xpose.msra.mxu0 0.0
    %1986 = vmatprep.subr.mxu0 0.0
    %1987 = vmatpush1.xpose.msra.mxu0 0.0
    %1988 = vmatprep.subr.mxu0 0.0
    %1989 = vmatpush1.xpose.msra.mxu0 0.0
    %1990 = vmatprep.subr.mxu0 0.0
    %1991 = vmatpush1.xpose.msra.mxu0 0.0
    %1992 = vmatprep.subr.mxu0 0.0
    %1993 = vmatpush1.xpose.msra.mxu0 0.0
    %1994 = vmatprep.subr.mxu0 0.0
    %1995 = vmatpush1.xpose.msra.mxu0 0.0
    %1996 = vmatprep.subr.mxu0 0.0
    %1997 = vmatpush1.xpose.msra.mxu0 0.0
    %1998 = vmatprep.subr.mxu0 0.0
    %1999 = vmatpush1.xpose.msra.mxu0 0.0
    %2000 = vmatprep.subr.mxu0 0.0
    %2001 = vmatpush1.xpose.msra.mxu0 0.0
    %2002 = vmatprep.subr.mxu0 0.0
    %2003 = vmatpush1.xpose.msra.mxu0 %v1970
    %2004 = vmatprep.subr.mxu0 0.0
    %2005 = vmatpush2.xpose.msra.mxu0 0.0
    %2006 = vmatprep.subr.mxu0 0.0
    %2007 = vmatpush2.xpose.msra.mxu0 0.0
    %2008 = vmatprep.subr.mxu0 0.0
    %2009 = vmatpush2.xpose.msra.mxu0 0.0
    %2010 = vmatprep.subr.mxu0 0.0
    %2011 = vmatpush2.xpose.msra.mxu0 0.0
    %2012 = vmatprep.subr.mxu0 0.0
    %2013 = vmatpush2.xpose.msra.mxu0 0.0
    %2014 = vmatprep.subr.mxu0 0.0
    %2015 = vmatpush2.xpose.msra.mxu0 0.0
    %2016 = vmatprep.subr.mxu0 0.0
    %2017 = vmatpush2.xpose.msra.mxu0 0.0
    %2018 = vmatprep.subr.mxu0 0.0
    %2019 = vmatpush2.xpose.msra.mxu0 0.0
    %2020 = vmatprep.subr.mxu0 0.0
    %2021 = vmatpush2.xpose.msra.mxu0 0.0
    %2022 = vmatprep.subr.mxu0 0.0
    %2023 = vmatpush2.xpose.msra.mxu0 0.0
    %2024 = vmatprep.subr.mxu0 0.0
    %2025 = vmatpush2.xpose.msra.mxu0 0.0
    %2026 = vmatprep.subr.mxu0 0.0
    %2027 = vmatpush2.xpose.msra.mxu0 0.0
    %2028 = vmatprep.subr.mxu0 0.0
    %2029 = vmatpush2.xpose.msra.mxu0 0.0
    %2030 = vmatprep.subr.mxu0 0.0
    %2031 = vmatpush2.xpose.msra.mxu0 0.0
    %2032 = vmatprep.subr.mxu0 0.0
    %2033 = vmatpush2.xpose.msra.mxu0 0.0
    %2034 = vmatprep.subr.mxu0 0.0
    %2035 = vmatpush2.xpose.msra.mxu0 0.0
    %2036 = vmatprep.mubr.f32.mxu0 0.0
    %2037 = vmatmul.mubr.f32.gmra.mxu0 %v1968
    %v2038 = vpop.f32.mrf.mxu0
    %v2039 = vadd.f32 0.0, %v2038
    %v2040 = vpop.f32.mrf.mxu0
    %2041 = vdwg.mxu0
    %2043 = vrot.lane.b32.xlu0 %v1962, 96
    %v2044 = vpop.permute.xlu0 %2043
    %v2045 = vsel %vm164, %v1962, 0
    %v2047 = vsel %vm164, %v2044, 0
    %2049 = vmatprep.subr.mxu0 0.0
    %2050 = vmatpush1.xpose.msra.mxu0 0.0
    %2051 = vmatprep.subr.mxu0 0.0
    %2052 = vmatpush1.xpose.msra.mxu0 0.0
    %2053 = vmatprep.subr.mxu0 0.0
    %2054 = vmatpush1.xpose.msra.mxu0 0.0
    %2055 = vmatprep.subr.mxu0 0.0
    %2056 = vmatpush1.xpose.msra.mxu0 0.0
    %2057 = vmatprep.subr.mxu0 0.0
    %2058 = vmatpush1.xpose.msra.mxu0 0.0
    %2059 = vmatprep.subr.mxu0 0.0
    %2060 = vmatpush1.xpose.msra.mxu0 0.0
    %2061 = vmatprep.subr.mxu0 0.0
    %2062 = vmatpush1.xpose.msra.mxu0 0.0
    %2063 = vmatprep.subr.mxu0 0.0
    %2064 = vmatpush1.xpose.msra.mxu0 0.0
    %2065 = vmatprep.subr.mxu0 0.0
    %2066 = vmatpush1.xpose.msra.mxu0 0.0
    %2067 = vmatprep.subr.mxu0 0.0
    %2068 = vmatpush1.xpose.msra.mxu0 0.0
    %2069 = vmatprep.subr.mxu0 0.0
    %2070 = vmatpush1.xpose.msra.mxu0 0.0
    %2071 = vmatprep.subr.mxu0 0.0
    %2072 = vmatpush1.xpose.msra.mxu0 0.0
    %2073 = vmatprep.subr.mxu0 0.0
    %2074 = vmatpush1.xpose.msra.mxu0 0.0
    %2075 = vmatprep.subr.mxu0 0.0
    %2076 = vmatpush1.xpose.msra.mxu0 0.0
    %2077 = vmatprep.subr.mxu0 0.0
    %2078 = vmatpush1.xpose.msra.mxu0 0.0
    %2079 = vmatprep.subr.mxu0 0.0
    %2080 = vmatpush1.xpose.msra.mxu0 %v2047
    %2081 = vmatprep.subr.mxu0 0.0
    %2082 = vmatpush2.xpose.msra.mxu0 0.0
    %2083 = vmatprep.subr.mxu0 0.0
    %2084 = vmatpush2.xpose.msra.mxu0 0.0
    %2085 = vmatprep.subr.mxu0 0.0
    %2086 = vmatpush2.xpose.msra.mxu0 0.0
    %2087 = vmatprep.subr.mxu0 0.0
    %2088 = vmatpush2.xpose.msra.mxu0 0.0
    %2089 = vmatprep.subr.mxu0 0.0
    %2090 = vmatpush2.xpose.msra.mxu0 0.0
    %2091 = vmatprep.subr.mxu0 0.0
    %2092 = vmatpush2.xpose.msra.mxu0 0.0
    %2093 = vmatprep.subr.mxu0 0.0
    %2094 = vmatpush2.xpose.msra.mxu0 0.0
    %2095 = vmatprep.subr.mxu0 0.0
    %2096 = vmatpush2.xpose.msra.mxu0 0.0
    %2097 = vmatprep.subr.mxu0 0.0
    %2098 = vmatpush2.xpose.msra.mxu0 0.0
    %2099 = vmatprep.subr.mxu0 0.0
    %2100 = vmatpush2.xpose.msra.mxu0 0.0
    %2101 = vmatprep.subr.mxu0 0.0
    %2102 = vmatpush2.xpose.msra.mxu0 0.0
    %2103 = vmatprep.subr.mxu0 0.0
    %2104 = vmatpush2.xpose.msra.mxu0 0.0
    %2105 = vmatprep.subr.mxu0 0.0
    %2106 = vmatpush2.xpose.msra.mxu0 0.0
    %2107 = vmatprep.subr.mxu0 0.0
    %2108 = vmatpush2.xpose.msra.mxu0 0.0
    %2109 = vmatprep.subr.mxu0 0.0
    %2110 = vmatpush2.xpose.msra.mxu0 0.0
    %2111 = vmatprep.subr.mxu0 0.0
    %2112 = vmatpush2.xpose.msra.mxu0 0.0
    %2113 = vmatprep.mubr.f32.mxu0 0.0
    %2114 = vmatmul.mubr.f32.gmra.mxu0 %v2045
    %v2115 = vpop.f32.mrf.mxu0
    %v2116 = vadd.f32 0.0, %v2115
    %v2117 = vpop.f32.mrf.mxu0
    %2118 = vdwg.mxu0
    %2119 = vrot.lane.b32.xlu0 %v1957, 120
    %v2120 = vpop.permute.xlu0 %2119
    %2121 = vrot.lane.b32.xlu0 %v1957, 88
    %v2122 = vpop.permute.xlu0 %2121
    %v2123 = vsel %vm164, %v2120, 0
    %v2125 = vsel %vm164, %v2122, 0
    %2127 = vmatprep.subr.mxu0 0.0
    %2128 = vmatpush1.xpose.msra.mxu0 0.0
    %2129 = vmatprep.subr.mxu0 0.0
    %2130 = vmatpush1.xpose.msra.mxu0 0.0
    %2131 = vmatprep.subr.mxu0 0.0
    %2132 = vmatpush1.xpose.msra.mxu0 0.0
    %2133 = vmatprep.subr.mxu0 0.0
    %2134 = vmatpush1.xpose.msra.mxu0 0.0
    %2135 = vmatprep.subr.mxu0 0.0
    %2136 = vmatpush1.xpose.msra.mxu0 0.0
    %2137 = vmatprep.subr.mxu0 0.0
    %2138 = vmatpush1.xpose.msra.mxu0 0.0
    %2139 = vmatprep.subr.mxu0 0.0
    %2140 = vmatpush1.xpose.msra.mxu0 0.0
    %2141 = vmatprep.subr.mxu0 0.0
    %2142 = vmatpush1.xpose.msra.mxu0 0.0
    %2143 = vmatprep.subr.mxu0 0.0
    %2144 = vmatpush1.xpose.msra.mxu0 0.0
    %2145 = vmatprep.subr.mxu0 0.0
    %2146 = vmatpush1.xpose.msra.mxu0 0.0
    %2147 = vmatprep.subr.mxu0 0.0
    %2148 = vmatpush1.xpose.msra.mxu0 0.0
    %2149 = vmatprep.subr.mxu0 0.0
    %2150 = vmatpush1.xpose.msra.mxu0 0.0
    %2151 = vmatprep.subr.mxu0 0.0
    %2152 = vmatpush1.xpose.msra.mxu0 0.0
    %2153 = vmatprep.subr.mxu0 0.0
    %2154 = vmatpush1.xpose.msra.mxu0 0.0
    %2155 = vmatprep.subr.mxu0 0.0
    %2156 = vmatpush1.xpose.msra.mxu0 0.0
    %2157 = vmatprep.subr.mxu0 0.0
    %2158 = vmatpush1.xpose.msra.mxu0 %v2125
    %2159 = vmatprep.subr.mxu0 0.0
    %2160 = vmatpush2.xpose.msra.mxu0 0.0
    %2161 = vmatprep.subr.mxu0 0.0
    %2162 = vmatpush2.xpose.msra.mxu0 0.0
    %2163 = vmatprep.subr.mxu0 0.0
    %2164 = vmatpush2.xpose.msra.mxu0 0.0
    %2165 = vmatprep.subr.mxu0 0.0
    %2166 = vmatpush2.xpose.msra.mxu0 0.0
    %2167 = vmatprep.subr.mxu0 0.0
    %2168 = vmatpush2.xpose.msra.mxu0 0.0
    %2169 = vmatprep.subr.mxu0 0.0
    %2170 = vmatpush2.xpose.msra.mxu0 0.0
    %2171 = vmatprep.subr.mxu0 0.0
    %2172 = vmatpush2.xpose.msra.mxu0 0.0
    %2173 = vmatprep.subr.mxu0 0.0
    %2174 = vmatpush2.xpose.msra.mxu0 0.0
    %2175 = vmatprep.subr.mxu0 0.0
    %2176 = vmatpush2.xpose.msra.mxu0 0.0
    %2177 = vmatprep.subr.mxu0 0.0
    %2178 = vmatpush2.xpose.msra.mxu0 0.0
    %2179 = vmatprep.subr.mxu0 0.0
    %2180 = vmatpush2.xpose.msra.mxu0 0.0
    %2181 = vmatprep.subr.mxu0 0.0
    %2182 = vmatpush2.xpose.msra.mxu0 0.0
    %2183 = vmatprep.subr.mxu0 0.0
    %2184 = vmatpush2.xpose.msra.mxu0 0.0
    %2185 = vmatprep.subr.mxu0 0.0
    %2186 = vmatpush2.xpose.msra.mxu0 0.0
    %2187 = vmatprep.subr.mxu0 0.0
    %2188 = vmatpush2.xpose.msra.mxu0 0.0
    %2189 = vmatprep.subr.mxu0 0.0
    %2190 = vmatpush2.xpose.msra.mxu0 0.0
    %2191 = vmatprep.mubr.f32.mxu0 0.0
    %2192 = vmatmul.mubr.f32.gmra.mxu0 %v2123
    %v2193 = vpop.f32.mrf.mxu0
    %v2194 = vadd.f32 0.0, %v2193
    %v2195 = vpop.f32.mrf.mxu0
    %2196 = vdwg.mxu0
    %2197 = vrot.lane.b32.xlu0 %v1962, 120
    %v2198 = vpop.permute.xlu0 %2197
    %2199 = vrot.lane.b32.xlu0 %v1962, 88
    %v2200 = vpop.permute.xlu0 %2199
    %v2201 = vsel %vm164, %v2198, 0
    %v2203 = vsel %vm164, %v2200, 0
    %2205 = vmatprep.subr.mxu0 0.0
    %2206 = vmatpush1.xpose.msra.mxu0 0.0
    %2207 = vmatprep.subr.mxu0 0.0
    %2208 = vmatpush1.xpose.msra.mxu0 0.0
    %2209 = vmatprep.subr.mxu0 0.0
    %2210 = vmatpush1.xpose.msra.mxu0 0.0
    %2211 = vmatprep.subr.mxu0 0.0
    %2212 = vmatpush1.xpose.msra.mxu0 0.0
    %2213 = vmatprep.subr.mxu0 0.0
    %2214 = vmatpush1.xpose.msra.mxu0 0.0
    %2215 = vmatprep.subr.mxu0 0.0
    %2216 = vmatpush1.xpose.msra.mxu0 0.0
    %2217 = vmatprep.subr.mxu0 0.0
    %2218 = vmatpush1.xpose.msra.mxu0 0.0
    %2219 = vmatprep.subr.mxu0 0.0
    %2220 = vmatpush1.xpose.msra.mxu0 0.0
    %2221 = vmatprep.subr.mxu0 0.0
    %2222 = vmatpush1.xpose.msra.mxu0 0.0
    %2223 = vmatprep.subr.mxu0 0.0
    %2224 = vmatpush1.xpose.msra.mxu0 0.0
    %2225 = vmatprep.subr.mxu0 0.0
    %2226 = vmatpush1.xpose.msra.mxu0 0.0
    %2227 = vmatprep.subr.mxu0 0.0
    %2228 = vmatpush1.xpose.msra.mxu0 0.0
    %2229 = vmatprep.subr.mxu0 0.0
    %2230 = vmatpush1.xpose.msra.mxu0 0.0
    %2231 = vmatprep.subr.mxu0 0.0
    %2232 = vmatpush1.xpose.msra.mxu0 0.0
    %2233 = vmatprep.subr.mxu0 0.0
    %2234 = vmatpush1.xpose.msra.mxu0 0.0
    %2235 = vmatprep.subr.mxu0 0.0
    %2236 = vmatpush1.xpose.msra.mxu0 %v2203
    %2237 = vmatprep.subr.mxu0 0.0
    %2238 = vmatpush2.xpose.msra.mxu0 0.0
    %2239 = vmatprep.subr.mxu0 0.0
    %2240 = vmatpush2.xpose.msra.mxu0 0.0
    %2241 = vmatprep.subr.mxu0 0.0
    %2242 = vmatpush2.xpose.msra.mxu0 0.0
    %2243 = vmatprep.subr.mxu0 0.0
    %2244 = vmatpush2.xpose.msra.mxu0 0.0
    %2245 = vmatprep.subr.mxu0 0.0
    %2246 = vmatpush2.xpose.msra.mxu0 0.0
    %2247 = vmatprep.subr.mxu0 0.0
    %2248 = vmatpush2.xpose.msra.mxu0 0.0
    %2249 = vmatprep.subr.mxu0 0.0
    %2250 = vmatpush2.xpose.msra.mxu0 0.0
    %2251 = vmatprep.subr.mxu0 0.0
    %2252 = vmatpush2.xpose.msra.mxu0 0.0
    %2253 = vmatprep.subr.mxu0 0.0
    %2254 = vmatpush2.xpose.msra.mxu0 0.0
    %2255 = vmatprep.subr.mxu0 0.0
    %2256 = vmatpush2.xpose.msra.mxu0 0.0
    %2257 = vmatprep.subr.mxu0 0.0
    %2258 = vmatpush2.xpose.msra.mxu0 0.0
    %2259 = vmatprep.subr.mxu0 0.0
    %2260 = vmatpush2.xpose.msra.mxu0 0.0
    %2261 = vmatprep.subr.mxu0 0.0
    %2262 = vmatpush2.xpose.msra.mxu0 0.0
    %2263 = vmatprep.subr.mxu0 0.0
    %2264 = vmatpush2.xpose.msra.mxu0 0.0
    %2265 = vmatprep.subr.mxu0 0.0
    %2266 = vmatpush2.xpose.msra.mxu0 0.0
    %2267 = vmatprep.subr.mxu0 0.0
    %2268 = vmatpush2.xpose.msra.mxu0 0.0
    %2269 = vmatprep.mubr.f32.mxu0 0.0
    %2270 = vmatmul.mubr.f32.gmra.mxu0 %v2201
    %v2271 = vpop.f32.mrf.mxu0
    %v2272 = vadd.f32 0.0, %v2271
    %v2273 = vpop.f32.mrf.mxu0
    %2274 = vdwg.mxu0
    %2275 = vrot.lane.b32.xlu0 %v1957, 112
    %v2276 = vpop.permute.xlu0 %2275
    %2277 = vrot.lane.b32.xlu0 %v1957, 80
    %v2278 = vpop.permute.xlu0 %2277
    %v2279 = vsel %vm164, %v2276, 0
    %v2281 = vsel %vm164, %v2278, 0
    %2283 = vmatprep.subr.mxu0 0.0
    %2284 = vmatpush1.xpose.msra.mxu0 0.0
    %2285 = vmatprep.subr.mxu0 0.0
    %2286 = vmatpush1.xpose.msra.mxu0 0.0
    %2287 = vmatprep.subr.mxu0 0.0
    %2288 = vmatpush1.xpose.msra.mxu0 0.0
    %2289 = vmatprep.subr.mxu0 0.0
    %2290 = vmatpush1.xpose.msra.mxu0 0.0
    %2291 = vmatprep.subr.mxu0 0.0
    %2292 = vmatpush1.xpose.msra.mxu0 0.0
    %2293 = vmatprep.subr.mxu0 0.0
    %2294 = vmatpush1.xpose.msra.mxu0 0.0
    %2295 = vmatprep.subr.mxu0 0.0
    %2296 = vmatpush1.xpose.msra.mxu0 0.0
    %2297 = vmatprep.subr.mxu0 0.0
    %2298 = vmatpush1.xpose.msra.mxu0 0.0
    %2299 = vmatprep.subr.mxu0 0.0
    %2300 = vmatpush1.xpose.msra.mxu0 0.0
    %2301 = vmatprep.subr.mxu0 0.0
    %2302 = vmatpush1.xpose.msra.mxu0 0.0
    %2303 = vmatprep.subr.mxu0 0.0
    %2304 = vmatpush1.xpose.msra.mxu0 0.0
    %2305 = vmatprep.subr.mxu0 0.0
    %2306 = vmatpush1.xpose.msra.mxu0 0.0
    %2307 = vmatprep.subr.mxu0 0.0
    %2308 = vmatpush1.xpose.msra.mxu0 0.0
    %2309 = vmatprep.subr.mxu0 0.0
    %2310 = vmatpush1.xpose.msra.mxu0 0.0
    %2311 = vmatprep.subr.mxu0 0.0
    %2312 = vmatpush1.xpose.msra.mxu0 0.0
    %2313 = vmatprep.subr.mxu0 0.0
    %2314 = vmatpush1.xpose.msra.mxu0 %v2281
    %2315 = vmatprep.subr.mxu0 0.0
    %2316 = vmatpush2.xpose.msra.mxu0 0.0
    %2317 = vmatprep.subr.mxu0 0.0
    %2318 = vmatpush2.xpose.msra.mxu0 0.0
    %2319 = vmatprep.subr.mxu0 0.0
    %2320 = vmatpush2.xpose.msra.mxu0 0.0
    %2321 = vmatprep.subr.mxu0 0.0
    %2322 = vmatpush2.xpose.msra.mxu0 0.0
    %2323 = vmatprep.subr.mxu0 0.0
    %2324 = vmatpush2.xpose.msra.mxu0 0.0
    %2325 = vmatprep.subr.mxu0 0.0
    %2326 = vmatpush2.xpose.msra.mxu0 0.0
    %2327 = vmatprep.subr.mxu0 0.0
    %2328 = vmatpush2.xpose.msra.mxu0 0.0
    %2329 = vmatprep.subr.mxu0 0.0
    %2330 = vmatpush2.xpose.msra.mxu0 0.0
    %2331 = vmatprep.subr.mxu0 0.0
    %2332 = vmatpush2.xpose.msra.mxu0 0.0
    %2333 = vmatprep.subr.mxu0 0.0
    %2334 = vmatpush2.xpose.msra.mxu0 0.0
    %2335 = vmatprep.subr.mxu0 0.0
    %2336 = vmatpush2.xpose.msra.mxu0 0.0
    %2337 = vmatprep.subr.mxu0 0.0
    %2338 = vmatpush2.xpose.msra.mxu0 0.0
    %2339 = vmatprep.subr.mxu0 0.0
    %2340 = vmatpush2.xpose.msra.mxu0 0.0
    %2341 = vmatprep.subr.mxu0 0.0
    %2342 = vmatpush2.xpose.msra.mxu0 0.0
    %2343 = vmatprep.subr.mxu0 0.0
    %2344 = vmatpush2.xpose.msra.mxu0 0.0
    %2345 = vmatprep.subr.mxu0 0.0
    %2346 = vmatpush2.xpose.msra.mxu0 0.0
    %2347 = vmatprep.mubr.f32.mxu0 0.0
    %2348 = vmatmul.mubr.f32.gmra.mxu0 %v2279
    %v2349 = vpop.f32.mrf.mxu0
    %v2350 = vadd.f32 0.0, %v2349
    %v2351 = vpop.f32.mrf.mxu0
    %2352 = vdwg.mxu0
    %2353 = vrot.lane.b32.xlu0 %v1962, 112
    %v2354 = vpop.permute.xlu0 %2353
    %2355 = vrot.lane.b32.xlu0 %v1962, 80
    %v2356 = vpop.permute.xlu0 %2355
    %v2357 = vsel %vm164, %v2354, 0
    %v2359 = vsel %vm164, %v2356, 0
    %2361 = vmatprep.subr.mxu0 0.0
    %2362 = vmatpush1.xpose.msra.mxu0 0.0
    %2363 = vmatprep.subr.mxu0 0.0
    %2364 = vmatpush1.xpose.msra.mxu0 0.0
    %2365 = vmatprep.subr.mxu0 0.0
    %2366 = vmatpush1.xpose.msra.mxu0 0.0
    %2367 = vmatprep.subr.mxu0 0.0
    %2368 = vmatpush1.xpose.msra.mxu0 0.0
    %2369 = vmatprep.subr.mxu0 0.0
    %2370 = vmatpush1.xpose.msra.mxu0 0.0
    %2371 = vmatprep.subr.mxu0 0.0
    %2372 = vmatpush1.xpose.msra.mxu0 0.0
    %2373 = vmatprep.subr.mxu0 0.0
    %2374 = vmatpush1.xpose.msra.mxu0 0.0
    %2375 = vmatprep.subr.mxu0 0.0
    %2376 = vmatpush1.xpose.msra.mxu0 0.0
    %2377 = vmatprep.subr.mxu0 0.0
    %2378 = vmatpush1.xpose.msra.mxu0 0.0
    %2379 = vmatprep.subr.mxu0 0.0
    %2380 = vmatpush1.xpose.msra.mxu0 0.0
    %2381 = vmatprep.subr.mxu0 0.0
    %2382 = vmatpush1.xpose.msra.mxu0 0.0
    %2383 = vmatprep.subr.mxu0 0.0
    %2384 = vmatpush1.xpose.msra.mxu0 0.0
    %2385 = vmatprep.subr.mxu0 0.0
    %2386 = vmatpush1.xpose.msra.mxu0 0.0
    %2387 = vmatprep.subr.mxu0 0.0
    %2388 = vmatpush1.xpose.msra.mxu0 0.0
    %2389 = vmatprep.subr.mxu0 0.0
    %2390 = vmatpush1.xpose.msra.mxu0 0.0
    %2391 = vmatprep.subr.mxu0 0.0
    %2392 = vmatpush1.xpose.msra.mxu0 %v2359
    %2393 = vmatprep.subr.mxu0 0.0
    %2394 = vmatpush2.xpose.msra.mxu0 0.0
    %2395 = vmatprep.subr.mxu0 0.0
    %2396 = vmatpush2.xpose.msra.mxu0 0.0
    %2397 = vmatprep.subr.mxu0 0.0
    %2398 = vmatpush2.xpose.msra.mxu0 0.0
    %2399 = vmatprep.subr.mxu0 0.0
    %2400 = vmatpush2.xpose.msra.mxu0 0.0
    %2401 = vmatprep.subr.mxu0 0.0
    %2402 = vmatpush2.xpose.msra.mxu0 0.0
    %2403 = vmatprep.subr.mxu0 0.0
    %2404 = vmatpush2.xpose.msra.mxu0 0.0
    %2405 = vmatprep.subr.mxu0 0.0
    %2406 = vmatpush2.xpose.msra.mxu0 0.0
    %2407 = vmatprep.subr.mxu0 0.0
    %2408 = vmatpush2.xpose.msra.mxu0 0.0
    %2409 = vmatprep.subr.mxu0 0.0
    %2410 = vmatpush2.xpose.msra.mxu0 0.0
    %2411 = vmatprep.subr.mxu0 0.0
    %2412 = vmatpush2.xpose.msra.mxu0 0.0
    %2413 = vmatprep.subr.mxu0 0.0
    %2414 = vmatpush2.xpose.msra.mxu0 0.0
    %2415 = vmatprep.subr.mxu0 0.0
    %2416 = vmatpush2.xpose.msra.mxu0 0.0
    %2417 = vmatprep.subr.mxu0 0.0
    %2418 = vmatpush2.xpose.msra.mxu0 0.0
    %2419 = vmatprep.subr.mxu0 0.0
    %2420 = vmatpush2.xpose.msra.mxu0 0.0
    %2421 = vmatprep.subr.mxu0 0.0
    %2422 = vmatpush2.xpose.msra.mxu0 0.0
    %2423 = vmatprep.subr.mxu0 0.0
    %2424 = vmatpush2.xpose.msra.mxu0 0.0
    %2425 = vmatprep.mubr.f32.mxu0 0.0
    %2426 = vmatmul.mubr.f32.gmra.mxu0 %v2357
    %v2427 = vpop.f32.mrf.mxu0
    %v2428 = vadd.f32 0.0, %v2427
    %v2429 = vpop.f32.mrf.mxu0
    %2430 = vdwg.mxu0
    %2431 = vrot.lane.b32.xlu0 %v1957, 104
    %v2432 = vpop.permute.xlu0 %2431
    %2433 = vrot.lane.b32.xlu0 %v1957, 72
    %v2434 = vpop.permute.xlu0 %2433
    %v2435 = vsel %vm164, %v2432, 0
    %v2437 = vsel %vm164, %v2434, 0
    %2439 = vmatprep.subr.mxu0 0.0
    %2440 = vmatpush1.xpose.msra.mxu0 0.0
    %2441 = vmatprep.subr.mxu0 0.0
    %2442 = vmatpush1.xpose.msra.mxu0 0.0
    %2443 = vmatprep.subr.mxu0 0.0
    %2444 = vmatpush1.xpose.msra.mxu0 0.0
    %2445 = vmatprep.subr.mxu0 0.0
    %2446 = vmatpush1.xpose.msra.mxu0 0.0
    %2447 = vmatprep.subr.mxu0 0.0
    %2448 = vmatpush1.xpose.msra.mxu0 0.0
    %2449 = vmatprep.subr.mxu0 0.0
    %2450 = vmatpush1.xpose.msra.mxu0 0.0
    %2451 = vmatprep.subr.mxu0 0.0
    %2452 = vmatpush1.xpose.msra.mxu0 0.0
    %2453 = vmatprep.subr.mxu0 0.0
    %2454 = vmatpush1.xpose.msra.mxu0 0.0
    %2455 = vmatprep.subr.mxu0 0.0
    %2456 = vmatpush1.xpose.msra.mxu0 0.0
    %2457 = vmatprep.subr.mxu0 0.0
    %2458 = vmatpush1.xpose.msra.mxu0 0.0
    %2459 = vmatprep.subr.mxu0 0.0
    %2460 = vmatpush1.xpose.msra.mxu0 0.0
    %2461 = vmatprep.subr.mxu0 0.0
    %2462 = vmatpush1.xpose.msra.mxu0 0.0
    %2463 = vmatprep.subr.mxu0 0.0
    %2464 = vmatpush1.xpose.msra.mxu0 0.0
    %2465 = vmatprep.subr.mxu0 0.0
    %2466 = vmatpush1.xpose.msra.mxu0 0.0
    %2467 = vmatprep.subr.mxu0 0.0
    %2468 = vmatpush1.xpose.msra.mxu0 0.0
    %2469 = vmatprep.subr.mxu0 0.0
    %2470 = vmatpush1.xpose.msra.mxu0 %v2437
    %2471 = vmatprep.subr.mxu0 0.0
    %2472 = vmatpush2.xpose.msra.mxu0 0.0
    %2473 = vmatprep.subr.mxu0 0.0
    %2474 = vmatpush2.xpose.msra.mxu0 0.0
    %2475 = vmatprep.subr.mxu0 0.0
    %2476 = vmatpush2.xpose.msra.mxu0 0.0
    %2477 = vmatprep.subr.mxu0 0.0
    %2478 = vmatpush2.xpose.msra.mxu0 0.0
    %2479 = vmatprep.subr.mxu0 0.0
    %2480 = vmatpush2.xpose.msra.mxu0 0.0
    %2481 = vmatprep.subr.mxu0 0.0
    %2482 = vmatpush2.xpose.msra.mxu0 0.0
    %2483 = vmatprep.subr.mxu0 0.0
    %2484 = vmatpush2.xpose.msra.mxu0 0.0
    %2485 = vmatprep.subr.mxu0 0.0
    %2486 = vmatpush2.xpose.msra.mxu0 0.0
    %2487 = vmatprep.subr.mxu0 0.0
    %2488 = vmatpush2.xpose.msra.mxu0 0.0
    %2489 = vmatprep.subr.mxu0 0.0
    %2490 = vmatpush2.xpose.msra.mxu0 0.0
    %2491 = vmatprep.subr.mxu0 0.0
    %2492 = vmatpush2.xpose.msra.mxu0 0.0
    %2493 = vmatprep.subr.mxu0 0.0
    %2494 = vmatpush2.xpose.msra.mxu0 0.0
    %2495 = vmatprep.subr.mxu0 0.0
    %2496 = vmatpush2.xpose.msra.mxu0 0.0
    %2497 = vmatprep.subr.mxu0 0.0
    %2498 = vmatpush2.xpose.msra.mxu0 0.0
    %2499 = vmatprep.subr.mxu0 0.0
    %2500 = vmatpush2.xpose.msra.mxu0 0.0
    %2501 = vmatprep.subr.mxu0 0.0
    %2502 = vmatpush2.xpose.msra.mxu0 0.0
    %2503 = vmatprep.mubr.f32.mxu0 0.0
    %2504 = vmatmul.mubr.f32.gmra.mxu0 %v2435
    %v2505 = vpop.f32.mrf.mxu0
    %v2506 = vadd.f32 0.0, %v2505
    %v2507 = vpop.f32.mrf.mxu0
    %2508 = vdwg.mxu0
    %2509 = vrot.lane.b32.xlu0 %v1962, 104
    %v2510 = vpop.permute.xlu0 %2509
    %2511 = vrot.lane.b32.xlu0 %v1962, 72
    %v2512 = vpop.permute.xlu0 %2511
    %v2513 = vsel %vm164, %v2510, 0
    %v2515 = vsel %vm164, %v2512, 0
    %2517 = vmatprep.subr.mxu0 0.0
    %2518 = vmatpush1.xpose.msra.mxu0 0.0
    %2519 = vmatprep.subr.mxu0 0.0
    %2520 = vmatpush1.xpose.msra.mxu0 0.0
    %2521 = vmatprep.subr.mxu0 0.0
    %2522 = vmatpush1.xpose.msra.mxu0 0.0
    %2523 = vmatprep.subr.mxu0 0.0
    %2524 = vmatpush1.xpose.msra.mxu0 0.0
    %2525 = vmatprep.subr.mxu0 0.0
    %2526 = vmatpush1.xpose.msra.mxu0 0.0
    %2527 = vmatprep.subr.mxu0 0.0
    %2528 = vmatpush1.xpose.msra.mxu0 0.0
    %2529 = vmatprep.subr.mxu0 0.0
    %2530 = vmatpush1.xpose.msra.mxu0 0.0
    %2531 = vmatprep.subr.mxu0 0.0
    %2532 = vmatpush1.xpose.msra.mxu0 0.0
    %2533 = vmatprep.subr.mxu0 0.0
    %2534 = vmatpush1.xpose.msra.mxu0 0.0
    %2535 = vmatprep.subr.mxu0 0.0
    %2536 = vmatpush1.xpose.msra.mxu0 0.0
    %2537 = vmatprep.subr.mxu0 0.0
    %2538 = vmatpush1.xpose.msra.mxu0 0.0
    %2539 = vmatprep.subr.mxu0 0.0
    %2540 = vmatpush1.xpose.msra.mxu0 0.0
    %2541 = vmatprep.subr.mxu0 0.0
    %2542 = vmatpush1.xpose.msra.mxu0 0.0
    %2543 = vmatprep.subr.mxu0 0.0
    %2544 = vmatpush1.xpose.msra.mxu0 0.0
    %2545 = vmatprep.subr.mxu0 0.0
    %2546 = vmatpush1.xpose.msra.mxu0 0.0
    %2547 = vmatprep.subr.mxu0 0.0
    %2548 = vmatpush1.xpose.msra.mxu0 %v2515
    %2549 = vmatprep.subr.mxu0 0.0
    %2550 = vmatpush2.xpose.msra.mxu0 0.0
    %2551 = vmatprep.subr.mxu0 0.0
    %2552 = vmatpush2.xpose.msra.mxu0 0.0
    %2553 = vmatprep.subr.mxu0 0.0
    %2554 = vmatpush2.xpose.msra.mxu0 0.0
    %2555 = vmatprep.subr.mxu0 0.0
    %2556 = vmatpush2.xpose.msra.mxu0 0.0
    %2557 = vmatprep.subr.mxu0 0.0
    %2558 = vmatpush2.xpose.msra.mxu0 0.0
    %2559 = vmatprep.subr.mxu0 0.0
    %2560 = vmatpush2.xpose.msra.mxu0 0.0
    %2561 = vmatprep.subr.mxu0 0.0
    %2562 = vmatpush2.xpose.msra.mxu0 0.0
    %2563 = vmatprep.subr.mxu0 0.0
    %2564 = vmatpush2.xpose.msra.mxu0 0.0
    %2565 = vmatprep.subr.mxu0 0.0
    %2566 = vmatpush2.xpose.msra.mxu0 0.0
    %2567 = vmatprep.subr.mxu0 0.0
    %2568 = vmatpush2.xpose.msra.mxu0 0.0
    %2569 = vmatprep.subr.mxu0 0.0
    %2570 = vmatpush2.xpose.msra.mxu0 0.0
    %2571 = vmatprep.subr.mxu0 0.0
    %2572 = vmatpush2.xpose.msra.mxu0 0.0
    %2573 = vmatprep.subr.mxu0 0.0
    %2574 = vmatpush2.xpose.msra.mxu0 0.0
    %2575 = vmatprep.subr.mxu0 0.0
    %2576 = vmatpush2.xpose.msra.mxu0 0.0
    %2577 = vmatprep.subr.mxu0 0.0
    %2578 = vmatpush2.xpose.msra.mxu0 0.0
    %2579 = vmatprep.subr.mxu0 0.0
    %2580 = vmatpush2.xpose.msra.mxu0 0.0
    %2581 = vmatprep.mubr.f32.mxu0 0.0
    %2582 = vmatmul.mubr.f32.gmra.mxu0 %v2513
    %v2583 = vpop.f32.mrf.mxu0
    %v2584 = vadd.f32 0.0, %v2583
    %v2585 = vpop.f32.mrf.mxu0
    %2586 = vdwg.mxu0
    %v2587 = vsel %vm164, %v2039, -inf
    %2588 = vmax.xlane.f32.xlu0 %v2587
    %v2589 = vpop.xlane.xlu0 %2588
    %v2590 = vsel %vm164, %v2116, -inf
    %2591 = vmax.xlane.f32.xlu0 %v2590
    %v2592 = vpop.xlane.xlu0 %2591
    %v2593 = vsel %vm164, %v2194, -inf
    %2594 = vmax.xlane.f32.xlu0 %v2593
    %v2595 = vpop.xlane.xlu0 %2594
    %v2596 = vsel %vm164, %v2272, -inf
    %2597 = vmax.xlane.f32.xlu0 %v2596
    %v2598 = vpop.xlane.xlu0 %2597
    %v2599 = vsel %vm164, %v2350, -inf
    %2600 = vmax.xlane.f32.xlu0 %v2599
    %v2601 = vpop.xlane.xlu0 %2600
    %v2602 = vsel %vm164, %v2428, -inf
    %2603 = vmax.xlane.f32.xlu0 %v2602
    %v2604 = vpop.xlane.xlu0 %2603
    %v2605 = vsel %vm164, %v2506, -inf
    %2606 = vmax.xlane.f32.xlu0 %v2605
    %v2607 = vpop.xlane.xlu0 %2606
    %v2608 = vsel %vm164, %v2584, -inf
    %2609 = vmax.xlane.f32.xlu0 %v2608
    %v2610 = vpop.xlane.xlu0 %2609
    %v2611 = vsub.f32 %v2039, %v2589
    %v2612 = vsub.f32 %v2116, %v2592
    %v2613 = vsub.f32 %v2194, %v2595
    %v2614 = vsub.f32 %v2272, %v2598
    %v2615 = vsub.f32 %v2350, %v2601
    %v2616 = vsub.f32 %v2428, %v2604
    %v2617 = vsub.f32 %v2506, %v2607
    %v2618 = vsub.f32 %v2584, %v2610
    %v2619 = vmul.f32 %v2611, 1.442695
    %v2620 = vpow.pop %v2619
    %v2621 = vmul.f32 %v2612, 1.442695
    %v2622 = vpow.pop %v2621
    %v2623 = vmul.f32 %v2613, 1.442695
    %v2624 = vpow.pop %v2623
    %v2625 = vmul.f32 %v2614, 1.442695
    %v2626 = vpow.pop %v2625
    %v2627 = vmul.f32 %v2615, 1.442695
    %v2628 = vpow.pop %v2627
    %v2629 = vmul.f32 %v2616, 1.442695
    %v2630 = vpow.pop %v2629
    %v2631 = vmul.f32 %v2617, 1.442695
    %v2632 = vpow.pop %v2631
    %v2633 = vmul.f32 %v2618, 1.442695
    %v2634 = vpow.pop %v2633
    %v2635 = vsel %vm164, %v2620, 0.0
    %2636 = vadd.xlane.f32.xlu0 %v2635
    %v2637 = vpop.xlane.xlu0 %2636
    %v2638 = vsel %vm164, %v2622, 0.0
    %2639 = vadd.xlane.f32.xlu0 %v2638
    %v2640 = vpop.xlane.xlu0 %2639
    %v2641 = vsel %vm164, %v2624, 0.0
    %2642 = vadd.xlane.f32.xlu0 %v2641
    %v2643 = vpop.xlane.xlu0 %2642
    %v2644 = vsel %vm164, %v2626, 0.0
    %2645 = vadd.xlane.f32.xlu0 %v2644
    %v2646 = vpop.xlane.xlu0 %2645
    %v2647 = vsel %vm164, %v2628, 0.0
    %2648 = vadd.xlane.f32.xlu0 %v2647
    %v2649 = vpop.xlane.xlu0 %2648
    %v2650 = vsel %vm164, %v2630, 0.0
    %2651 = vadd.xlane.f32.xlu0 %v2650
    %v2652 = vpop.xlane.xlu0 %2651
    %v2653 = vsel %vm164, %v2632, 0.0
    %2654 = vadd.xlane.f32.xlu0 %v2653
    %v2655 = vpop.xlane.xlu0 %2654
    %v2656 = vsel %vm164, %v2634, 0.0
    %2657 = vadd.xlane.f32.xlu0 %v2656
    %v2658 = vpop.xlane.xlu0 %2657
    %v2659 = vrcp.pop %v2637
    %v2660 = vmul.f32 %v2620, %v2659
    %v2661 = vrcp.pop %v2640
    %v2662 = vmul.f32 %v2622, %v2661
    %v2663 = vrcp.pop %v2643
    %v2664 = vmul.f32 %v2624, %v2663
    %v2665 = vrcp.pop %v2646
    %v2666 = vmul.f32 %v2626, %v2665
    %v2667 = vrcp.pop %v2649
    %v2668 = vmul.f32 %v2628, %v2667
    %v2669 = vrcp.pop %v2652
    %v2670 = vmul.f32 %v2630, %v2669
    %v2671 = vrcp.pop %v2655
    %v2672 = vmul.f32 %v2632, %v2671
    %v2673 = vrcp.pop %v2658
    %v2674 = vmul.f32 %v2634, %v2673
    %v2675 = vsel %vm164, %v2660, 0.0
    %v2676 = vsel %vm164, %v2664, 0.0
    %v2677 = vadd.f32 %v2675, %v2676
    %v2678 = vsel %vm164, %v2668, 0.0
    %v2679 = vadd.f32 %v2677, %v2678
    %v2680 = vsel %vm164, %v2672, 0.0
    %v2681 = vadd.f32 %v2679, %v2680
    %v2682 = vsel %vm164, %v2662, 0.0
    %v2683 = vsel %vm164, %v2666, 0.0
    %v2684 = vadd.f32 %v2682, %v2683
    %v2685 = vsel %vm164, %v2670, 0.0
    %v2686 = vadd.f32 %v2684, %v2685
    %v2687 = vsel %vm164, %v2674, 0.0
    %v2688 = vadd.f32 %v2686, %v2687
    %v2689 = vmul.f32 %v2681, 0.25
    %v2690 = vmul.f32 %v2688, 0.25
    %2691 = vrot.lane.b32.xlu0 %v1957, 64
    %v2692 = vpop.permute.xlu0 %2691
    %v2695 = vsel %vm164, %v2660, 0
    %2697 = vmatprep.subr.mxu0 0.0
    %2698 = vmatpush1.msra.mxu0 0.0
    %2699 = vmatprep.subr.mxu0 0.0
    %2700 = vmatpush1.msra.mxu0 0.0
    %2701 = vmatprep.subr.mxu0 0.0
    %2702 = vmatpush1.msra.mxu0 0.0
    %2703 = vmatprep.subr.mxu0 0.0
    %2704 = vmatpush1.msra.mxu0 0.0
    %2705 = vmatprep.subr.mxu0 0.0
    %2706 = vmatpush1.msra.mxu0 0.0
    %2707 = vmatprep.subr.mxu0 0.0
    %2708 = vmatpush1.msra.mxu0 0.0
    %2709 = vmatprep.subr.mxu0 0.0
    %2710 = vmatpush1.msra.mxu0 0.0
    %2711 = vmatprep.subr.mxu0 0.0
    %2712 = vmatpush1.msra.mxu0 0.0
    %2713 = vmatprep.subr.mxu0 0.0
    %2714 = vmatpush1.msra.mxu0 0.0
    %2715 = vmatprep.subr.mxu0 0.0
    %2716 = vmatpush1.msra.mxu0 0.0
    %2717 = vmatprep.subr.mxu0 0.0
    %2718 = vmatpush1.msra.mxu0 0.0
    %2719 = vmatprep.subr.mxu0 0.0
    %2720 = vmatpush1.msra.mxu0 0.0
    %2721 = vmatprep.subr.mxu0 0.0
    %2722 = vmatpush1.msra.mxu0 0.0
    %2723 = vmatprep.subr.mxu0 0.0
    %2724 = vmatpush1.msra.mxu0 0.0
    %2725 = vmatprep.subr.mxu0 0.0
    %2726 = vmatpush1.msra.mxu0 0.0
    %2727 = vmatprep.subr.mxu0 0.0
    %2728 = vmatpush1.msra.mxu0 %v2692
    %2729 = vmatprep.subr.mxu0 0.0
    %2730 = vmatpush2.msra.mxu0 0.0
    %2731 = vmatprep.subr.mxu0 0.0
    %2732 = vmatpush2.msra.mxu0 0.0
    %2733 = vmatprep.subr.mxu0 0.0
    %2734 = vmatpush2.msra.mxu0 0.0
    %2735 = vmatprep.subr.mxu0 0.0
    %2736 = vmatpush2.msra.mxu0 0.0
    %2737 = vmatprep.subr.mxu0 0.0
    %2738 = vmatpush2.msra.mxu0 0.0
    %2739 = vmatprep.subr.mxu0 0.0
    %2740 = vmatpush2.msra.mxu0 0.0
    %2741 = vmatprep.subr.mxu0 0.0
    %2742 = vmatpush2.msra.mxu0 0.0
    %2743 = vmatprep.subr.mxu0 0.0
    %2744 = vmatpush2.msra.mxu0 0.0
    %2745 = vmatprep.subr.mxu0 0.0
    %2746 = vmatpush2.msra.mxu0 0.0
    %2747 = vmatprep.subr.mxu0 0.0
    %2748 = vmatpush2.msra.mxu0 0.0
    %2749 = vmatprep.subr.mxu0 0.0
    %2750 = vmatpush2.msra.mxu0 0.0
    %2751 = vmatprep.subr.mxu0 0.0
    %2752 = vmatpush2.msra.mxu0 0.0
    %2753 = vmatprep.subr.mxu0 0.0
    %2754 = vmatpush2.msra.mxu0 0.0
    %2755 = vmatprep.subr.mxu0 0.0
    %2756 = vmatpush2.msra.mxu0 0.0
    %2757 = vmatprep.subr.mxu0 0.0
    %2758 = vmatpush2.msra.mxu0 0.0
    %2759 = vmatprep.subr.mxu0 0.0
    %2760 = vmatpush2.msra.mxu0 0.0
    %2761 = vmatprep.mubr.f32.mxu0 0.0
    %2762 = vmatmul.mubr.f32.gmra.mxu0 %v2695
    %v2763 = vpop.f32.mrf.mxu0
    %v2764 = vadd.f32 0.0, %v2763
    %v2765 = vpop.f32.mrf.mxu0
    %2766 = vdwg.mxu0
    %2767 = vrot.lane.b32.xlu0 %v1962, 64
    %v2768 = vpop.permute.xlu0 %2767
    %v2771 = vsel %vm164, %v2662, 0
    %2773 = vmatprep.subr.mxu0 0.0
    %2774 = vmatpush1.msra.mxu0 0.0
    %2775 = vmatprep.subr.mxu0 0.0
    %2776 = vmatpush1.msra.mxu0 0.0
    %2777 = vmatprep.subr.mxu0 0.0
    %2778 = vmatpush1.msra.mxu0 0.0
    %2779 = vmatprep.subr.mxu0 0.0
    %2780 = vmatpush1.msra.mxu0 0.0
    %2781 = vmatprep.subr.mxu0 0.0
    %2782 = vmatpush1.msra.mxu0 0.0
    %2783 = vmatprep.subr.mxu0 0.0
    %2784 = vmatpush1.msra.mxu0 0.0
    %2785 = vmatprep.subr.mxu0 0.0
    %2786 = vmatpush1.msra.mxu0 0.0
    %2787 = vmatprep.subr.mxu0 0.0
    %2788 = vmatpush1.msra.mxu0 0.0
    %2789 = vmatprep.subr.mxu0 0.0
    %2790 = vmatpush1.msra.mxu0 0.0
    %2791 = vmatprep.subr.mxu0 0.0
    %2792 = vmatpush1.msra.mxu0 0.0
    %2793 = vmatprep.subr.mxu0 0.0
    %2794 = vmatpush1.msra.mxu0 0.0
    %2795 = vmatprep.subr.mxu0 0.0
    %2796 = vmatpush1.msra.mxu0 0.0
    %2797 = vmatprep.subr.mxu0 0.0
    %2798 = vmatpush1.msra.mxu0 0.0
    %2799 = vmatprep.subr.mxu0 0.0
    %2800 = vmatpush1.msra.mxu0 0.0
    %2801 = vmatprep.subr.mxu0 0.0
    %2802 = vmatpush1.msra.mxu0 0.0
    %2803 = vmatprep.subr.mxu0 0.0
    %2804 = vmatpush1.msra.mxu0 %v2768
    %2805 = vmatprep.subr.mxu0 0.0
    %2806 = vmatpush2.msra.mxu0 0.0
    %2807 = vmatprep.subr.mxu0 0.0
    %2808 = vmatpush2.msra.mxu0 0.0
    %2809 = vmatprep.subr.mxu0 0.0
    %2810 = vmatpush2.msra.mxu0 0.0
    %2811 = vmatprep.subr.mxu0 0.0
    %2812 = vmatpush2.msra.mxu0 0.0
    %2813 = vmatprep.subr.mxu0 0.0
    %2814 = vmatpush2.msra.mxu0 0.0
    %2815 = vmatprep.subr.mxu0 0.0
    %2816 = vmatpush2.msra.mxu0 0.0
    %2817 = vmatprep.subr.mxu0 0.0
    %2818 = vmatpush2.msra.mxu0 0.0
    %2819 = vmatprep.subr.mxu0 0.0
    %2820 = vmatpush2.msra.mxu0 0.0
    %2821 = vmatprep.subr.mxu0 0.0
    %2822 = vmatpush2.msra.mxu0 0.0
    %2823 = vmatprep.subr.mxu0 0.0
    %2824 = vmatpush2.msra.mxu0 0.0
    %2825 = vmatprep.subr.mxu0 0.0
    %2826 = vmatpush2.msra.mxu0 0.0
    %2827 = vmatprep.subr.mxu0 0.0
    %2828 = vmatpush2.msra.mxu0 0.0
    %2829 = vmatprep.subr.mxu0 0.0
    %2830 = vmatpush2.msra.mxu0 0.0
    %2831 = vmatprep.subr.mxu0 0.0
    %2832 = vmatpush2.msra.mxu0 0.0
    %2833 = vmatprep.subr.mxu0 0.0
    %2834 = vmatpush2.msra.mxu0 0.0
    %2835 = vmatprep.subr.mxu0 0.0
    %2836 = vmatpush2.msra.mxu0 0.0
    %2837 = vmatprep.mubr.f32.mxu0 0.0
    %2838 = vmatmul.mubr.f32.gmra.mxu0 %v2771
    %v2839 = vpop.f32.mrf.mxu0
    %v2840 = vadd.f32 0.0, %v2839
    %v2841 = vpop.f32.mrf.mxu0
    %2842 = vdwg.mxu0
    %2843 = vrot.lane.b32.xlu0 %v1957, 56
    %v2844 = vpop.permute.xlu0 %2843
    %v2847 = vsel %vm164, %v2664, 0
    %2849 = vmatprep.subr.mxu0 0.0
    %2850 = vmatpush1.msra.mxu0 0.0
    %2851 = vmatprep.subr.mxu0 0.0
    %2852 = vmatpush1.msra.mxu0 0.0
    %2853 = vmatprep.subr.mxu0 0.0
    %2854 = vmatpush1.msra.mxu0 0.0
    %2855 = vmatprep.subr.mxu0 0.0
    %2856 = vmatpush1.msra.mxu0 0.0
    %2857 = vmatprep.subr.mxu0 0.0
    %2858 = vmatpush1.msra.mxu0 0.0
    %2859 = vmatprep.subr.mxu0 0.0
    %2860 = vmatpush1.msra.mxu0 0.0
    %2861 = vmatprep.subr.mxu0 0.0
    %2862 = vmatpush1.msra.mxu0 0.0
    %2863 = vmatprep.subr.mxu0 0.0
    %2864 = vmatpush1.msra.mxu0 0.0
    %2865 = vmatprep.subr.mxu0 0.0
    %2866 = vmatpush1.msra.mxu0 0.0
    %2867 = vmatprep.subr.mxu0 0.0
    %2868 = vmatpush1.msra.mxu0 0.0
    %2869 = vmatprep.subr.mxu0 0.0
    %2870 = vmatpush1.msra.mxu0 0.0
    %2871 = vmatprep.subr.mxu0 0.0
    %2872 = vmatpush1.msra.mxu0 0.0
    %2873 = vmatprep.subr.mxu0 0.0
    %2874 = vmatpush1.msra.mxu0 0.0
    %2875 = vmatprep.subr.mxu0 0.0
    %2876 = vmatpush1.msra.mxu0 0.0
    %2877 = vmatprep.subr.mxu0 0.0
    %2878 = vmatpush1.msra.mxu0 0.0
    %2879 = vmatprep.subr.mxu0 0.0
    %2880 = vmatpush1.msra.mxu0 %v2844
    %2881 = vmatprep.subr.mxu0 0.0
    %2882 = vmatpush2.msra.mxu0 0.0
    %2883 = vmatprep.subr.mxu0 0.0
    %2884 = vmatpush2.msra.mxu0 0.0
    %2885 = vmatprep.subr.mxu0 0.0
    %2886 = vmatpush2.msra.mxu0 0.0
    %2887 = vmatprep.subr.mxu0 0.0
    %2888 = vmatpush2.msra.mxu0 0.0
    %2889 = vmatprep.subr.mxu0 0.0
    %2890 = vmatpush2.msra.mxu0 0.0
    %2891 = vmatprep.subr.mxu0 0.0
    %2892 = vmatpush2.msra.mxu0 0.0
    %2893 = vmatprep.subr.mxu0 0.0
    %2894 = vmatpush2.msra.mxu0 0.0
    %2895 = vmatprep.subr.mxu0 0.0
    %2896 = vmatpush2.msra.mxu0 0.0
    %2897 = vmatprep.subr.mxu0 0.0
    %2898 = vmatpush2.msra.mxu0 0.0
    %2899 = vmatprep.subr.mxu0 0.0
    %2900 = vmatpush2.msra.mxu0 0.0
    %2901 = vmatprep.subr.mxu0 0.0
    %2902 = vmatpush2.msra.mxu0 0.0
    %2903 = vmatprep.subr.mxu0 0.0
    %2904 = vmatpush2.msra.mxu0 0.0
    %2905 = vmatprep.subr.mxu0 0.0
    %2906 = vmatpush2.msra.mxu0 0.0
    %2907 = vmatprep.subr.mxu0 0.0
    %2908 = vmatpush2.msra.mxu0 0.0
    %2909 = vmatprep.subr.mxu0 0.0
    %2910 = vmatpush2.msra.mxu0 0.0
    %2911 = vmatprep.subr.mxu0 0.0
    %2912 = vmatpush2.msra.mxu0 0.0
    %2913 = vmatprep.mubr.f32.mxu0 0.0
    %2914 = vmatmul.mubr.f32.gmra.mxu0 %v2847
    %v2915 = vpop.f32.mrf.mxu0
    %v2916 = vadd.f32 0.0, %v2915
    %v2917 = vpop.f32.mrf.mxu0
    %2918 = vdwg.mxu0
    %2919 = vrot.lane.b32.xlu0 %v1962, 56
    %v2920 = vpop.permute.xlu0 %2919
    %v2923 = vsel %vm164, %v2666, 0
    %2925 = vmatprep.subr.mxu0 0.0
    %2926 = vmatpush1.msra.mxu0 0.0
    %2927 = vmatprep.subr.mxu0 0.0
    %2928 = vmatpush1.msra.mxu0 0.0
    %2929 = vmatprep.subr.mxu0 0.0
    %2930 = vmatpush1.msra.mxu0 0.0
    %2931 = vmatprep.subr.mxu0 0.0
    %2932 = vmatpush1.msra.mxu0 0.0
    %2933 = vmatprep.subr.mxu0 0.0
    %2934 = vmatpush1.msra.mxu0 0.0
    %2935 = vmatprep.subr.mxu0 0.0
    %2936 = vmatpush1.msra.mxu0 0.0
    %2937 = vmatprep.subr.mxu0 0.0
    %2938 = vmatpush1.msra.mxu0 0.0
    %2939 = vmatprep.subr.mxu0 0.0
    %2940 = vmatpush1.msra.mxu0 0.0
    %2941 = vmatprep.subr.mxu0 0.0
    %2942 = vmatpush1.msra.mxu0 0.0
    %2943 = vmatprep.subr.mxu0 0.0
    %2944 = vmatpush1.msra.mxu0 0.0
    %2945 = vmatprep.subr.mxu0 0.0
    %2946 = vmatpush1.msra.mxu0 0.0
    %2947 = vmatprep.subr.mxu0 0.0
    %2948 = vmatpush1.msra.mxu0 0.0
    %2949 = vmatprep.subr.mxu0 0.0
    %2950 = vmatpush1.msra.mxu0 0.0
    %2951 = vmatprep.subr.mxu0 0.0
    %2952 = vmatpush1.msra.mxu0 0.0
    %2953 = vmatprep.subr.mxu0 0.0
    %2954 = vmatpush1.msra.mxu0 0.0
    %2955 = vmatprep.subr.mxu0 0.0
    %2956 = vmatpush1.msra.mxu0 %v2920
    %2957 = vmatprep.subr.mxu0 0.0
    %2958 = vmatpush2.msra.mxu0 0.0
    %2959 = vmatprep.subr.mxu0 0.0
    %2960 = vmatpush2.msra.mxu0 0.0
    %2961 = vmatprep.subr.mxu0 0.0
    %2962 = vmatpush2.msra.mxu0 0.0
    %2963 = vmatprep.subr.mxu0 0.0
    %2964 = vmatpush2.msra.mxu0 0.0
    %2965 = vmatprep.subr.mxu0 0.0
    %2966 = vmatpush2.msra.mxu0 0.0
    %2967 = vmatprep.subr.mxu0 0.0
    %2968 = vmatpush2.msra.mxu0 0.0
    %2969 = vmatprep.subr.mxu0 0.0
    %2970 = vmatpush2.msra.mxu0 0.0
    %2971 = vmatprep.subr.mxu0 0.0
    %2972 = vmatpush2.msra.mxu0 0.0
    %2973 = vmatprep.subr.mxu0 0.0
    %2974 = vmatpush2.msra.mxu0 0.0
    %2975 = vmatprep.subr.mxu0 0.0
    %2976 = vmatpush2.msra.mxu0 0.0
    %2977 = vmatprep.subr.mxu0 0.0
    %2978 = vmatpush2.msra.mxu0 0.0
    %2979 = vmatprep.subr.mxu0 0.0
    %2980 = vmatpush2.msra.mxu0 0.0
    %2981 = vmatprep.subr.mxu0 0.0
    %2982 = vmatpush2.msra.mxu0 0.0
    %2983 = vmatprep.subr.mxu0 0.0
    %2984 = vmatpush2.msra.mxu0 0.0
    %2985 = vmatprep.subr.mxu0 0.0
    %2986 = vmatpush2.msra.mxu0 0.0
    %2987 = vmatprep.subr.mxu0 0.0
    %2988 = vmatpush2.msra.mxu0 0.0
    %2989 = vmatprep.mubr.f32.mxu0 0.0
    %2990 = vmatmul.mubr.f32.gmra.mxu0 %v2923
    %v2991 = vpop.f32.mrf.mxu0
    %v2992 = vadd.f32 0.0, %v2991
    %v2993 = vpop.f32.mrf.mxu0
    %2994 = vdwg.mxu0
    %2995 = vrot.lane.b32.xlu0 %v1957, 48
    %v2996 = vpop.permute.xlu0 %2995
    %v2999 = vsel %vm164, %v2668, 0
    %3001 = vmatprep.subr.mxu0 0.0
    %3002 = vmatpush1.msra.mxu0 0.0
    %3003 = vmatprep.subr.mxu0 0.0
    %3004 = vmatpush1.msra.mxu0 0.0
    %3005 = vmatprep.subr.mxu0 0.0
    %3006 = vmatpush1.msra.mxu0 0.0
    %3007 = vmatprep.subr.mxu0 0.0
    %3008 = vmatpush1.msra.mxu0 0.0
    %3009 = vmatprep.subr.mxu0 0.0
    %3010 = vmatpush1.msra.mxu0 0.0
    %3011 = vmatprep.subr.mxu0 0.0
    %3012 = vmatpush1.msra.mxu0 0.0
    %3013 = vmatprep.subr.mxu0 0.0
    %3014 = vmatpush1.msra.mxu0 0.0
    %3015 = vmatprep.subr.mxu0 0.0
    %3016 = vmatpush1.msra.mxu0 0.0
    %3017 = vmatprep.subr.mxu0 0.0
    %3018 = vmatpush1.msra.mxu0 0.0
    %3019 = vmatprep.subr.mxu0 0.0
    %3020 = vmatpush1.msra.mxu0 0.0
    %3021 = vmatprep.subr.mxu0 0.0
    %3022 = vmatpush1.msra.mxu0 0.0
    %3023 = vmatprep.subr.mxu0 0.0
    %3024 = vmatpush1.msra.mxu0 0.0
    %3025 = vmatprep.subr.mxu0 0.0
    %3026 = vmatpush1.msra.mxu0 0.0
    %3027 = vmatprep.subr.mxu0 0.0
    %3028 = vmatpush1.msra.mxu0 0.0
    %3029 = vmatprep.subr.mxu0 0.0
    %3030 = vmatpush1.msra.mxu0 0.0
    %3031 = vmatprep.subr.mxu0 0.0
    %3032 = vmatpush1.msra.mxu0 %v2996
    %3033 = vmatprep.subr.mxu0 0.0
    %3034 = vmatpush2.msra.mxu0 0.0
    %3035 = vmatprep.subr.mxu0 0.0
    %3036 = vmatpush2.msra.mxu0 0.0
    %3037 = vmatprep.subr.mxu0 0.0
    %3038 = vmatpush2.msra.mxu0 0.0
    %3039 = vmatprep.subr.mxu0 0.0
    %3040 = vmatpush2.msra.mxu0 0.0
    %3041 = vmatprep.subr.mxu0 0.0
    %3042 = vmatpush2.msra.mxu0 0.0
    %3043 = vmatprep.subr.mxu0 0.0
    %3044 = vmatpush2.msra.mxu0 0.0
    %3045 = vmatprep.subr.mxu0 0.0
    %3046 = vmatpush2.msra.mxu0 0.0
    %3047 = vmatprep.subr.mxu0 0.0
    %3048 = vmatpush2.msra.mxu0 0.0
    %3049 = vmatprep.subr.mxu0 0.0
    %3050 = vmatpush2.msra.mxu0 0.0
    %3051 = vmatprep.subr.mxu0 0.0
    %3052 = vmatpush2.msra.mxu0 0.0
    %3053 = vmatprep.subr.mxu0 0.0
    %3054 = vmatpush2.msra.mxu0 0.0
    %3055 = vmatprep.subr.mxu0 0.0
    %3056 = vmatpush2.msra.mxu0 0.0
    %3057 = vmatprep.subr.mxu0 0.0
    %3058 = vmatpush2.msra.mxu0 0.0
    %3059 = vmatprep.subr.mxu0 0.0
    %3060 = vmatpush2.msra.mxu0 0.0
    %3061 = vmatprep.subr.mxu0 0.0
    %3062 = vmatpush2.msra.mxu0 0.0
    %3063 = vmatprep.subr.mxu0 0.0
    %3064 = vmatpush2.msra.mxu0 0.0
    %3065 = vmatprep.mubr.f32.mxu0 0.0
    %3066 = vmatmul.mubr.f32.gmra.mxu0 %v2999
    %v3067 = vpop.f32.mrf.mxu0
    %v3068 = vadd.f32 0.0, %v3067
    %v3069 = vpop.f32.mrf.mxu0
    %3070 = vdwg.mxu0
    %3071 = vrot.lane.b32.xlu0 %v1962, 48
    %v3072 = vpop.permute.xlu0 %3071
    %v3075 = vsel %vm164, %v2670, 0
    %3077 = vmatprep.subr.mxu0 0.0
    %3078 = vmatpush1.msra.mxu0 0.0
    %3079 = vmatprep.subr.mxu0 0.0
    %3080 = vmatpush1.msra.mxu0 0.0
    %3081 = vmatprep.subr.mxu0 0.0
    %3082 = vmatpush1.msra.mxu0 0.0
    %3083 = vmatprep.subr.mxu0 0.0
    %3084 = vmatpush1.msra.mxu0 0.0
    %3085 = vmatprep.subr.mxu0 0.0
    %3086 = vmatpush1.msra.mxu0 0.0
    %3087 = vmatprep.subr.mxu0 0.0
    %3088 = vmatpush1.msra.mxu0 0.0
    %3089 = vmatprep.subr.mxu0 0.0
    %3090 = vmatpush1.msra.mxu0 0.0
    %3091 = vmatprep.subr.mxu0 0.0
    %3092 = vmatpush1.msra.mxu0 0.0
    %3093 = vmatprep.subr.mxu0 0.0
    %3094 = vmatpush1.msra.mxu0 0.0
    %3095 = vmatprep.subr.mxu0 0.0
    %3096 = vmatpush1.msra.mxu0 0.0
    %3097 = vmatprep.subr.mxu0 0.0
    %3098 = vmatpush1.msra.mxu0 0.0
    %3099 = vmatprep.subr.mxu0 0.0
    %3100 = vmatpush1.msra.mxu0 0.0
    %3101 = vmatprep.subr.mxu0 0.0
    %3102 = vmatpush1.msra.mxu0 0.0
    %3103 = vmatprep.subr.mxu0 0.0
    %3104 = vmatpush1.msra.mxu0 0.0
    %3105 = vmatprep.subr.mxu0 0.0
    %3106 = vmatpush1.msra.mxu0 0.0
    %3107 = vmatprep.subr.mxu0 0.0
    %3108 = vmatpush1.msra.mxu0 %v3072
    %3109 = vmatprep.subr.mxu0 0.0
    %3110 = vmatpush2.msra.mxu0 0.0
    %3111 = vmatprep.subr.mxu0 0.0
    %3112 = vmatpush2.msra.mxu0 0.0
    %3113 = vmatprep.subr.mxu0 0.0
    %3114 = vmatpush2.msra.mxu0 0.0
    %3115 = vmatprep.subr.mxu0 0.0
    %3116 = vmatpush2.msra.mxu0 0.0
    %3117 = vmatprep.subr.mxu0 0.0
    %3118 = vmatpush2.msra.mxu0 0.0
    %3119 = vmatprep.subr.mxu0 0.0
    %3120 = vmatpush2.msra.mxu0 0.0
    %3121 = vmatprep.subr.mxu0 0.0
    %3122 = vmatpush2.msra.mxu0 0.0
    %3123 = vmatprep.subr.mxu0 0.0
    %3124 = vmatpush2.msra.mxu0 0.0
    %3125 = vmatprep.subr.mxu0 0.0
    %3126 = vmatpush2.msra.mxu0 0.0
    %3127 = vmatprep.subr.mxu0 0.0
    %3128 = vmatpush2.msra.mxu0 0.0
    %3129 = vmatprep.subr.mxu0 0.0
    %3130 = vmatpush2.msra.mxu0 0.0
    %3131 = vmatprep.subr.mxu0 0.0
    %3132 = vmatpush2.msra.mxu0 0.0
    %3133 = vmatprep.subr.mxu0 0.0
    %3134 = vmatpush2.msra.mxu0 0.0
    %3135 = vmatprep.subr.mxu0 0.0
    %3136 = vmatpush2.msra.mxu0 0.0
    %3137 = vmatprep.subr.mxu0 0.0
    %3138 = vmatpush2.msra.mxu0 0.0
    %3139 = vmatprep.subr.mxu0 0.0
    %3140 = vmatpush2.msra.mxu0 0.0
    %3141 = vmatprep.mubr.f32.mxu0 0.0
    %3142 = vmatmul.mubr.f32.gmra.mxu0 %v3075
    %v3143 = vpop.f32.mrf.mxu0
    %v3144 = vadd.f32 0.0, %v3143
    %v3145 = vpop.f32.mrf.mxu0
    %3146 = vdwg.mxu0
    %3147 = vrot.lane.b32.xlu0 %v1957, 40
    %v3148 = vpop.permute.xlu0 %3147
    %v3151 = vsel %vm164, %v2672, 0
    %3153 = vmatprep.subr.mxu0 0.0
    %3154 = vmatpush1.msra.mxu0 0.0
    %3155 = vmatprep.subr.mxu0 0.0
    %3156 = vmatpush1.msra.mxu0 0.0
    %3157 = vmatprep.subr.mxu0 0.0
    %3158 = vmatpush1.msra.mxu0 0.0
    %3159 = vmatprep.subr.mxu0 0.0
    %3160 = vmatpush1.msra.mxu0 0.0
    %3161 = vmatprep.subr.mxu0 0.0
    %3162 = vmatpush1.msra.mxu0 0.0
    %3163 = vmatprep.subr.mxu0 0.0
    %3164 = vmatpush1.msra.mxu0 0.0
    %3165 = vmatprep.subr.mxu0 0.0
    %3166 = vmatpush1.msra.mxu0 0.0
    %3167 = vmatprep.subr.mxu0 0.0
    %3168 = vmatpush1.msra.mxu0 0.0
    %3169 = vmatprep.subr.mxu0 0.0
    %3170 = vmatpush1.msra.mxu0 0.0
    %3171 = vmatprep.subr.mxu0 0.0
    %3172 = vmatpush1.msra.mxu0 0.0
    %3173 = vmatprep.subr.mxu0 0.0
    %3174 = vmatpush1.msra.mxu0 0.0
    %3175 = vmatprep.subr.mxu0 0.0
    %3176 = vmatpush1.msra.mxu0 0.0
    %3177 = vmatprep.subr.mxu0 0.0
    %3178 = vmatpush1.msra.mxu0 0.0
    %3179 = vmatprep.subr.mxu0 0.0
    %3180 = vmatpush1.msra.mxu0 0.0
    %3181 = vmatprep.subr.mxu0 0.0
    %3182 = vmatpush1.msra.mxu0 0.0
    %3183 = vmatprep.subr.mxu0 0.0
    %3184 = vmatpush1.msra.mxu0 %v3148
    %3185 = vmatprep.subr.mxu0 0.0
    %3186 = vmatpush2.msra.mxu0 0.0
    %3187 = vmatprep.subr.mxu0 0.0
    %3188 = vmatpush2.msra.mxu0 0.0
    %3189 = vmatprep.subr.mxu0 0.0
    %3190 = vmatpush2.msra.mxu0 0.0
    %3191 = vmatprep.subr.mxu0 0.0
    %3192 = vmatpush2.msra.mxu0 0.0
    %3193 = vmatprep.subr.mxu0 0.0
    %3194 = vmatpush2.msra.mxu0 0.0
    %3195 = vmatprep.subr.mxu0 0.0
    %3196 = vmatpush2.msra.mxu0 0.0
    %3197 = vmatprep.subr.mxu0 0.0
    %3198 = vmatpush2.msra.mxu0 0.0
    %3199 = vmatprep.subr.mxu0 0.0
    %3200 = vmatpush2.msra.mxu0 0.0
    %3201 = vmatprep.subr.mxu0 0.0
    %3202 = vmatpush2.msra.mxu0 0.0
    %3203 = vmatprep.subr.mxu0 0.0
    %3204 = vmatpush2.msra.mxu0 0.0
    %3205 = vmatprep.subr.mxu0 0.0
    %3206 = vmatpush2.msra.mxu0 0.0
    %3207 = vmatprep.subr.mxu0 0.0
    %3208 = vmatpush2.msra.mxu0 0.0
    %3209 = vmatprep.subr.mxu0 0.0
    %3210 = vmatpush2.msra.mxu0 0.0
    %3211 = vmatprep.subr.mxu0 0.0
    %3212 = vmatpush2.msra.mxu0 0.0
    %3213 = vmatprep.subr.mxu0 0.0
    %3214 = vmatpush2.msra.mxu0 0.0
    %3215 = vmatprep.subr.mxu0 0.0
    %3216 = vmatpush2.msra.mxu0 0.0
    %3217 = vmatprep.mubr.f32.mxu0 0.0
    %3218 = vmatmul.mubr.f32.gmra.mxu0 %v3151
    %v3219 = vpop.f32.mrf.mxu0
    %v3220 = vadd.f32 0.0, %v3219
    %v3221 = vpop.f32.mrf.mxu0
    %3222 = vdwg.mxu0
    %3223 = vrot.lane.b32.xlu0 %v1962, 40
    %v3224 = vpop.permute.xlu0 %3223
    %v3227 = vsel %vm164, %v2674, 0
    %3229 = vmatprep.subr.mxu0 0.0
    %3230 = vmatpush1.msra.mxu0 0.0
    %3231 = vmatprep.subr.mxu0 0.0
    %3232 = vmatpush1.msra.mxu0 0.0
    %3233 = vmatprep.subr.mxu0 0.0
    %3234 = vmatpush1.msra.mxu0 0.0
    %3235 = vmatprep.subr.mxu0 0.0
    %3236 = vmatpush1.msra.mxu0 0.0
    %3237 = vmatprep.subr.mxu0 0.0
    %3238 = vmatpush1.msra.mxu0 0.0
    %3239 = vmatprep.subr.mxu0 0.0
    %3240 = vmatpush1.msra.mxu0 0.0
    %3241 = vmatprep.subr.mxu0 0.0
    %3242 = vmatpush1.msra.mxu0 0.0
    %3243 = vmatprep.subr.mxu0 0.0
    %3244 = vmatpush1.msra.mxu0 0.0
    %3245 = vmatprep.subr.mxu0 0.0
    %3246 = vmatpush1.msra.mxu0 0.0
    %3247 = vmatprep.subr.mxu0 0.0
    %3248 = vmatpush1.msra.mxu0 0.0
    %3249 = vmatprep.subr.mxu0 0.0
    %3250 = vmatpush1.msra.mxu0 0.0
    %3251 = vmatprep.subr.mxu0 0.0
    %3252 = vmatpush1.msra.mxu0 0.0
    %3253 = vmatprep.subr.mxu0 0.0
    %3254 = vmatpush1.msra.mxu0 0.0
    %3255 = vmatprep.subr.mxu0 0.0
    %3256 = vmatpush1.msra.mxu0 0.0
    %3257 = vmatprep.subr.mxu0 0.0
    %3258 = vmatpush1.msra.mxu0 0.0
    %3259 = vmatprep.subr.mxu0 0.0
    %3260 = vmatpush1.msra.mxu0 %v3224
    %3261 = vmatprep.subr.mxu0 0.0
    %3262 = vmatpush2.msra.mxu0 0.0
    %3263 = vmatprep.subr.mxu0 0.0
    %3264 = vmatpush2.msra.mxu0 0.0
    %3265 = vmatprep.subr.mxu0 0.0
    %3266 = vmatpush2.msra.mxu0 0.0
    %3267 = vmatprep.subr.mxu0 0.0
    %3268 = vmatpush2.msra.mxu0 0.0
    %3269 = vmatprep.subr.mxu0 0.0
    %3270 = vmatpush2.msra.mxu0 0.0
    %3271 = vmatprep.subr.mxu0 0.0
    %3272 = vmatpush2.msra.mxu0 0.0
    %3273 = vmatprep.subr.mxu0 0.0
    %3274 = vmatpush2.msra.mxu0 0.0
    %3275 = vmatprep.subr.mxu0 0.0
    %3276 = vmatpush2.msra.mxu0 0.0
    %3277 = vmatprep.subr.mxu0 0.0
    %3278 = vmatpush2.msra.mxu0 0.0
    %3279 = vmatprep.subr.mxu0 0.0
    %3280 = vmatpush2.msra.mxu0 0.0
    %3281 = vmatprep.subr.mxu0 0.0
    %3282 = vmatpush2.msra.mxu0 0.0
    %3283 = vmatprep.subr.mxu0 0.0
    %3284 = vmatpush2.msra.mxu0 0.0
    %3285 = vmatprep.subr.mxu0 0.0
    %3286 = vmatpush2.msra.mxu0 0.0
    %3287 = vmatprep.subr.mxu0 0.0
    %3288 = vmatpush2.msra.mxu0 0.0
    %3289 = vmatprep.subr.mxu0 0.0
    %3290 = vmatpush2.msra.mxu0 0.0
    %3291 = vmatprep.subr.mxu0 0.0
    %3292 = vmatpush2.msra.mxu0 0.0
    %3293 = vmatprep.mubr.f32.mxu0 0.0
    %3294 = vmatmul.mubr.f32.gmra.mxu0 %v3227
    %v3295 = vpop.f32.mrf.mxu0
    %v3296 = vadd.f32 0.0, %v3295
    %v3297 = vpop.f32.mrf.mxu0
    %3298 = vdwg.mxu0
    %3301 = vrot.lane.b32.xlu0 %v2916, 8
    %v3302 = vpop.permute.xlu0 %3301
    %3303 = vrot.lane.b32.xlu0 %v2992, 8
    %v3304 = vpop.permute.xlu0 %3303
    %3309 = vrot.lane.b32.xlu0 %v3068, 16
    %v3310 = vpop.permute.xlu0 %3309
    %3311 = vrot.lane.b32.xlu0 %v3144, 16
    %v3312 = vpop.permute.xlu0 %3311
    %3317 = vrot.lane.b32.xlu0 %v3220, 24
    %v3318 = vpop.permute.xlu0 %3317
    %3319 = vrot.lane.b32.xlu0 %v3296, 24
    %v3320 = vpop.permute.xlu0 %3319
    %v3323 = vsel %vm164, %v2764, %v3302
    %v3324 = vsel %vm164, %v2840, %v3304
    %v3325 = vsel %vm1506, %v3323, %v3310
    %v3326 = vsel %vm1506, %v3324, %v3312
    %v3327 = vsel %vm1509, %v3325, %v3318
    %v3328 = vsel %vm1509, %v3326, %v3320
    %s3329 = scalar_lea.vmem %s3, 32
    %v3330 = vld [vmem:[%s3329] sm:$0xff]
    %v3331 = vld [vmem:[%s3329 + $0x8] sm:$0xff]
    %v3332 = vld [vmem:[%s3329 + $0x10] sm:$0xff]
    %v3333 = vld [vmem:[%s3329 + $0x18] sm:$0xff]
    %v3334 = vld [vmem:[%s4 + $0x1] sm:$0x1]
    %v3335 = vlaneseq
    %v3336 = vshrl.u32 %v3335, 7
    %v3337 = vsub.s32 0, %v3336
    %v3338 = vrot.slane %v3334, %v3337
    %v3340 = vsel %vm79, %v3327, 0
    %v3343 = vsel %vm79, %v3328, 0
    %3345 = vmatprep.subr.mxu0 0.0
    %3346 = vmatpush1.msra.mxu0 0.0
    %3347 = vmatprep.subr.mxu0 0.0
    %3348 = vmatpush1.msra.mxu0 0.0
    %3349 = vmatprep.subr.mxu0 0.0
    %3350 = vmatpush1.msra.mxu0 0.0
    %3351 = vmatprep.subr.mxu0 0.0
    %3352 = vmatpush1.msra.mxu0 0.0
    %3353 = vmatprep.subr.mxu0 0.0
    %3354 = vmatpush1.msra.mxu0 0.0
    %3355 = vmatprep.subr.mxu0 0.0
    %3356 = vmatpush1.msra.mxu0 0.0
    %3357 = vmatprep.subr.mxu0 0.0
    %3358 = vmatpush1.msra.mxu0 0.0
    %3359 = vmatprep.subr.mxu0 0.0
    %3360 = vmatpush1.msra.mxu0 0.0
    %3361 = vmatprep.subr.mxu0 0.0
    %3362 = vmatpush1.msra.mxu0 0.0
    %3363 = vmatprep.subr.mxu0 0.0
    %3364 = vmatpush1.msra.mxu0 0.0
    %3365 = vmatprep.subr.mxu0 0.0
    %3366 = vmatpush1.msra.mxu0 0.0
    %3367 = vmatprep.subr.mxu0 0.0
    %3368 = vmatpush1.msra.mxu0 0.0
    %3369 = vmatprep.subr.mxu0 0.0
    %3370 = vmatpush1.msra.mxu0 %v3333
    %3371 = vmatprep.subr.mxu0 0.0
    %3372 = vmatpush1.msra.mxu0 %v3332
    %3373 = vmatprep.subr.mxu0 0.0
    %3374 = vmatpush1.msra.mxu0 %v3331
    %3375 = vmatprep.subr.mxu0 0.0
    %3376 = vmatpush1.msra.mxu0 %v3330
    %3377 = vmatprep.subr.mxu0 0.0
    %3378 = vmatpush2.msra.mxu0 0.0
    %3379 = vmatprep.subr.mxu0 0.0
    %3380 = vmatpush2.msra.mxu0 0.0
    %3381 = vmatprep.subr.mxu0 0.0
    %3382 = vmatpush2.msra.mxu0 0.0
    %3383 = vmatprep.subr.mxu0 0.0
    %3384 = vmatpush2.msra.mxu0 0.0
    %3385 = vmatprep.subr.mxu0 0.0
    %3386 = vmatpush2.msra.mxu0 0.0
    %3387 = vmatprep.subr.mxu0 0.0
    %3388 = vmatpush2.msra.mxu0 0.0
    %3389 = vmatprep.subr.mxu0 0.0
    %3390 = vmatpush2.msra.mxu0 0.0
    %3391 = vmatprep.subr.mxu0 0.0
    %3392 = vmatpush2.msra.mxu0 0.0
    %3393 = vmatprep.subr.mxu0 0.0
    %3394 = vmatpush2.msra.mxu0 0.0
    %3395 = vmatprep.subr.mxu0 0.0
    %3396 = vmatpush2.msra.mxu0 0.0
    %3397 = vmatprep.subr.mxu0 0.0
    %3398 = vmatpush2.msra.mxu0 0.0
    %3399 = vmatprep.subr.mxu0 0.0
    %3400 = vmatpush2.msra.mxu0 0.0
    %3401 = vmatprep.subr.mxu0 0.0
    %3402 = vmatpush2.msra.mxu0 0.0
    %3403 = vmatprep.subr.mxu0 0.0
    %3404 = vmatpush2.msra.mxu0 0.0
    %3405 = vmatprep.subr.mxu0 0.0
    %3406 = vmatpush2.msra.mxu0 0.0
    %3407 = vmatprep.subr.mxu0 0.0
    %3408 = vmatpush2.msra.mxu0 0.0
    %3409 = vmatprep.mubr.f32.mxu0 0.0
    %3410 = vmatmul.mubr.f32.gmra.mxu0 %v3340
    %v3411 = vpop.f32.mrf.mxu0
    %v3412 = vadd.f32 %v3338, %v3411
    %v3413 = vpop.f32.mrf.mxu0
    %3414 = vmatprep.mubr.f32.mxu0 0.0
    %3415 = vmatmul.mubr.f32.gmra.mxu0 %v3343
    %v3416 = vpop.f32.mrf.mxu0
    %v3417 = vadd.f32 %v3338, %v3416
    %v3418 = vpop.f32.mrf.mxu0
    %3419 = vdwg.mxu0
    %v3420 = vadd.f32 %v1872, %v3412
    %v3421 = vadd.f32 %v1873, %v3417
    %v3422 = vld [vmem:[%s9 + $0x1] sm:$0x1]
    %v3423 = vld [vmem:[%s10 + $0x1] sm:$0x1]
    %v3424 = vsel %vm79, %v3420, 0.0
    %3425 = vadd.xlane.f32.xlu0 %v3424
    %v3426 = vpop.xlane.xlu0 %3425
    %v3427 = vsel %vm79, %v3421, 0.0
    %3428 = vadd.xlane.f32.xlu0 %v3427
    %v3429 = vpop.xlane.xlu0 %3428
    %v3430 = vmul.f32 %v3426, %v1612
    %v3431 = vmul.f32 %v3429, %v1612
    %v3432 = vsub.f32 %v3420, %v3430
    %v3433 = vsub.f32 %v3421, %v3431
    %v3434 = vmul.f32 %v3432, %v3432
    %v3435 = vmul.f32 %v3433, %v3433
    %v3436 = vsel %vm79, %v3434, 0.0
    %3437 = vadd.xlane.f32.xlu0 %v3436
    %v3438 = vpop.xlane.xlu0 %3437
    %v3439 = vsel %vm79, %v3435, 0.0
    %3440 = vadd.xlane.f32.xlu0 %v3439
    %v3441 = vpop.xlane.xlu0 %3440
    %v3442 = vmul.f32 %v3438, %v1612
    %v3443 = vmul.f32 %v3441, %v1612
    %v3444 = vadd.f32 %v3442, 1e-05
    %v3445 = vadd.f32 %v3443, 1e-05
    %v3446 = vrsqrt.pop %v3444
    %v3447 = vrsqrt.pop %v3445
    %v3448 = vmul.f32 %v3432, %v3446
    %v3449 = vmul.f32 %v3433, %v3447
    %v3450 = vlaneseq
    %v3451 = vshrl.u32 %v3450, 7
    %v3452 = vsub.s32 0, %v3451
    %v3453 = vrot.slane %v3422, %v3452
    %v3454 = vmul.f32 %v3448, %v3453
    %v3455 = vmul.f32 %v3449, %v3453
    %v3456 = vlaneseq
    %v3457 = vshrl.u32 %v3456, 7
    %v3458 = vsub.s32 0, %v3457
    %v3459 = vrot.slane %v3423, %v3458
    %v3460 = vadd.f32 %v3454, %v3459
    %v3461 = vadd.f32 %v3455, %v3459
    %s3462 = scalar_lea.vmem %s5, 32
    %v3463 = vld [vmem:[%s3462] sm:$0xff]
    %v3464 = vld [vmem:[%s3462 + $0x8] sm:$0xff]
    %v3465 = vld [vmem:[%s3462 + $0x10] sm:$0xff]
    %v3466 = vld [vmem:[%s3462 + $0x18] sm:$0xff]
    %v3467 = vld [vmem:[%s6 + $0x1] sm:$0x1]
    %v3468 = vlaneseq
    %v3469 = vshrl.u32 %v3468, 7
    %v3470 = vsub.s32 0, %v3469
    %v3471 = vrot.slane %v3467, %v3470
    %v3473 = vsel %vm79, %v3460, 0
    %v3476 = vsel %vm79, %v3461, 0
    %3478 = vmatprep.subr.mxu0 0.0
    %3479 = vmatpush1.msra.mxu0 0.0
    %3480 = vmatprep.subr.mxu0 0.0
    %3481 = vmatpush1.msra.mxu0 0.0
    %3482 = vmatprep.subr.mxu0 0.0
    %3483 = vmatpush1.msra.mxu0 0.0
    %3484 = vmatprep.subr.mxu0 0.0
    %3485 = vmatpush1.msra.mxu0 0.0
    %3486 = vmatprep.subr.mxu0 0.0
    %3487 = vmatpush1.msra.mxu0 0.0
    %3488 = vmatprep.subr.mxu0 0.0
    %3489 = vmatpush1.msra.mxu0 0.0
    %3490 = vmatprep.subr.mxu0 0.0
    %3491 = vmatpush1.msra.mxu0 0.0
    %3492 = vmatprep.subr.mxu0 0.0
    %3493 = vmatpush1.msra.mxu0 0.0
    %3494 = vmatprep.subr.mxu0 0.0
    %3495 = vmatpush1.msra.mxu0 0.0
    %3496 = vmatprep.subr.mxu0 0.0
    %3497 = vmatpush1.msra.mxu0 0.0
    %3498 = vmatprep.subr.mxu0 0.0
    %3499 = vmatpush1.msra.mxu0 0.0
    %3500 = vmatprep.subr.mxu0 0.0
    %3501 = vmatpush1.msra.mxu0 0.0
    %3502 = vmatprep.subr.mxu0 0.0
    %3503 = vmatpush1.msra.mxu0 %v3466
    %3504 = vmatprep.subr.mxu0 0.0
    %3505 = vmatpush1.msra.mxu0 %v3465
    %3506 = vmatprep.subr.mxu0 0.0
    %3507 = vmatpush1.msra.mxu0 %v3464
    %3508 = vmatprep.subr.mxu0 0.0
    %3509 = vmatpush1.msra.mxu0 %v3463
    %3510 = vmatprep.subr.mxu0 0.0
    %3511 = vmatpush2.msra.mxu0 0.0
    %3512 = vmatprep.subr.mxu0 0.0
    %3513 = vmatpush2.msra.mxu0 0.0
    %3514 = vmatprep.subr.mxu0 0.0
    %3515 = vmatpush2.msra.mxu0 0.0
    %3516 = vmatprep.subr.mxu0 0.0
    %3517 = vmatpush2.msra.mxu0 0.0
    %3518 = vmatprep.subr.mxu0 0.0
    %3519 = vmatpush2.msra.mxu0 0.0
    %3520 = vmatprep.subr.mxu0 0.0
    %3521 = vmatpush2.msra.mxu0 0.0
    %3522 = vmatprep.subr.mxu0 0.0
    %3523 = vmatpush2.msra.mxu0 0.0
    %3524 = vmatprep.subr.mxu0 0.0
    %3525 = vmatpush2.msra.mxu0 0.0
    %3526 = vmatprep.subr.mxu0 0.0
    %3527 = vmatpush2.msra.mxu0 0.0
    %3528 = vmatprep.subr.mxu0 0.0
    %3529 = vmatpush2.msra.mxu0 0.0
    %3530 = vmatprep.subr.mxu0 0.0
    %3531 = vmatpush2.msra.mxu0 0.0
    %3532 = vmatprep.subr.mxu0 0.0
    %3533 = vmatpush2.msra.mxu0 0.0
    %3534 = vmatprep.subr.mxu0 0.0
    %3535 = vmatpush2.msra.mxu0 0.0
    %3536 = vmatprep.subr.mxu0 0.0
    %3537 = vmatpush2.msra.mxu0 0.0
    %3538 = vmatprep.subr.mxu0 0.0
    %3539 = vmatpush2.msra.mxu0 0.0
    %3540 = vmatprep.subr.mxu0 0.0
    %3541 = vmatpush2.msra.mxu0 0.0
    %3542 = vmatprep.mubr.f32.mxu0 0.0
    %3543 = vmatmul.mubr.f32.gmra.mxu0 %v3473
    %v3544 = vpop.f32.mrf.mxu0
    %v3545 = vadd.f32 %v3471, %v3544
    %v3546 = vpop.f32.mrf.mxu0
    %3547 = vmatprep.mubr.f32.mxu0 0.0
    %3548 = vmatmul.mubr.f32.gmra.mxu0 %v3476
    %v3549 = vpop.f32.mrf.mxu0
    %v3550 = vadd.f32 %v3471, %v3549
    %v3551 = vpop.f32.mrf.mxu0
    %3552 = vdwg.mxu0
    %v3553 = vmax.f32 %v3545, 0.0
    %v3554 = vmax.f32 %v3550, 0.0
    %s3555 = scalar_lea.vmem %s7, 64
    %v3556 = vld [vmem:[%s3555] sm:$0xff]
    %v3557 = vld [vmem:[%s3555 + $0x8] sm:$0xff]
    %v3558 = vld [vmem:[%s3555 + $0x10] sm:$0xff]
    %v3559 = vld [vmem:[%s3555 + $0x18] sm:$0xff]
    %v3560 = vld [vmem:[%s3555 + $0x20] sm:$0xff]
    %v3561 = vld [vmem:[%s3555 + $0x28] sm:$0xff]
    %v3562 = vld [vmem:[%s3555 + $0x30] sm:$0xff]
    %v3563 = vld [vmem:[%s3555 + $0x38] sm:$0xff]
    %v3564 = vld [vmem:[%s8 + $0x1] sm:$0x1]
    %v3565 = vlaneseq
    %v3566 = vshrl.u32 %v3565, 7
    %v3567 = vsub.s32 0, %v3566
    %v3568 = vrot.slane %v3564, %v3567
    %v3570 = vsel %vm1750, %v3553, 0
    %v3573 = vsel %vm1750, %v3554, 0
    %3575 = vmatprep.subr.mxu0 0.0
    %3576 = vmatpush1.msra.mxu0 0.0
    %3577 = vmatprep.subr.mxu0 0.0
    %3578 = vmatpush1.msra.mxu0 0.0
    %3579 = vmatprep.subr.mxu0 0.0
    %3580 = vmatpush1.msra.mxu0 0.0
    %3581 = vmatprep.subr.mxu0 0.0
    %3582 = vmatpush1.msra.mxu0 0.0
    %3583 = vmatprep.subr.mxu0 0.0
    %3584 = vmatpush1.msra.mxu0 0.0
    %3585 = vmatprep.subr.mxu0 0.0
    %3586 = vmatpush1.msra.mxu0 0.0
    %3587 = vmatprep.subr.mxu0 0.0
    %3588 = vmatpush1.msra.mxu0 0.0
    %3589 = vmatprep.subr.mxu0 0.0
    %3590 = vmatpush1.msra.mxu0 0.0
    %3591 = vmatprep.subr.mxu0 0.0
    %3592 = vmatpush1.msra.mxu0 %v3563
    %3593 = vmatprep.subr.mxu0 0.0
    %3594 = vmatpush1.msra.mxu0 %v3562
    %3595 = vmatprep.subr.mxu0 0.0
    %3596 = vmatpush1.msra.mxu0 %v3561
    %3597 = vmatprep.subr.mxu0 0.0
    %3598 = vmatpush1.msra.mxu0 %v3560
    %3599 = vmatprep.subr.mxu0 0.0
    %3600 = vmatpush1.msra.mxu0 %v3559
    %3601 = vmatprep.subr.mxu0 0.0
    %3602 = vmatpush1.msra.mxu0 %v3558
    %3603 = vmatprep.subr.mxu0 0.0
    %3604 = vmatpush1.msra.mxu0 %v3557
    %3605 = vmatprep.subr.mxu0 0.0
    %3606 = vmatpush1.msra.mxu0 %v3556
    %3607 = vmatprep.subr.mxu0 0.0
    %3608 = vmatpush2.msra.mxu0 0.0
    %3609 = vmatprep.subr.mxu0 0.0
    %3610 = vmatpush2.msra.mxu0 0.0
    %3611 = vmatprep.subr.mxu0 0.0
    %3612 = vmatpush2.msra.mxu0 0.0
    %3613 = vmatprep.subr.mxu0 0.0
    %3614 = vmatpush2.msra.mxu0 0.0
    %3615 = vmatprep.subr.mxu0 0.0
    %3616 = vmatpush2.msra.mxu0 0.0
    %3617 = vmatprep.subr.mxu0 0.0
    %3618 = vmatpush2.msra.mxu0 0.0
    %3619 = vmatprep.subr.mxu0 0.0
    %3620 = vmatpush2.msra.mxu0 0.0
    %3621 = vmatprep.subr.mxu0 0.0
    %3622 = vmatpush2.msra.mxu0 0.0
    %3623 = vmatprep.subr.mxu0 0.0
    %3624 = vmatpush2.msra.mxu0 0.0
    %3625 = vmatprep.subr.mxu0 0.0
    %3626 = vmatpush2.msra.mxu0 0.0
    %3627 = vmatprep.subr.mxu0 0.0
    %3628 = vmatpush2.msra.mxu0 0.0
    %3629 = vmatprep.subr.mxu0 0.0
    %3630 = vmatpush2.msra.mxu0 0.0
    %3631 = vmatprep.subr.mxu0 0.0
    %3632 = vmatpush2.msra.mxu0 0.0
    %3633 = vmatprep.subr.mxu0 0.0
    %3634 = vmatpush2.msra.mxu0 0.0
    %3635 = vmatprep.subr.mxu0 0.0
    %3636 = vmatpush2.msra.mxu0 0.0
    %3637 = vmatprep.subr.mxu0 0.0
    %3638 = vmatpush2.msra.mxu0 0.0
    %3639 = vmatprep.mubr.f32.mxu0 0.0
    %3640 = vmatmul.mubr.f32.gmra.mxu0 %v3570
    %v3641 = vpop.f32.mrf.mxu0
    %v3642 = vadd.f32 %v3568, %v3641
    %v3643 = vpop.f32.mrf.mxu0
    %3644 = vmatprep.mubr.f32.mxu0 0.0
    %3645 = vmatmul.mubr.f32.gmra.mxu0 %v3573
    %v3646 = vpop.f32.mrf.mxu0
    %v3647 = vadd.f32 %v3568, %v3646
    %v3648 = vpop.f32.mrf.mxu0
    %3649 = vdwg.mxu0
    %v3650 = vadd.f32 %v3460, %v3642
    %v3651 = vadd.f32 %v3461, %v3647
    %v3652 = vld [vmem:[%s11 + $0x1] sm:$0x1]
    %v3653 = vld [vmem:[%s12 + $0x1] sm:$0x1]
    %v3654 = vsel %vm79, %v3650, 0.0
    %3655 = vadd.xlane.f32.xlu0 %v3654
    %v3656 = vpop.xlane.xlu0 %3655
    %v3657 = vsel %vm79, %v3651, 0.0
    %3658 = vadd.xlane.f32.xlu0 %v3657
    %v3659 = vpop.xlane.xlu0 %3658
    %v3660 = vmul.f32 %v3656, %v1612
    %v3661 = vmul.f32 %v3659, %v1612
    %v3662 = vsub.f32 %v3650, %v3660
    %v3663 = vsub.f32 %v3651, %v3661
    %v3664 = vmul.f32 %v3662, %v3662
    %v3665 = vmul.f32 %v3663, %v3663
    %v3666 = vsel %vm79, %v3664, 0.0
    %3667 = vadd.xlane.f32.xlu0 %v3666
    %v3668 = vpop.xlane.xlu0 %3667
    %v3669 = vsel %vm79, %v3665, 0.0
    %3670 = vadd.xlane.f32.xlu0 %v3669
    %v3671 = vpop.xlane.xlu0 %3670
    %v3672 = vmul.f32 %v3668, %v1612
    %v3673 = vmul.f32 %v3671, %v1612
    %v3674 = vadd.f32 %v3672, 1e-05
    %v3675 = vadd.f32 %v3673, 1e-05
    %v3676 = vrsqrt.pop %v3674
    %v3677 = vrsqrt.pop %v3675
    %v3678 = vmul.f32 %v3662, %v3676
    %v3679 = vmul.f32 %v3663, %v3677
    %v3680 = vlaneseq
    %v3681 = vshrl.u32 %v3680, 7
    %v3682 = vsub.s32 0, %v3681
    %v3683 = vrot.slane %v3652, %v3682
    %v3684 = vmul.f32 %v3678, %v3683
    %v3685 = vmul.f32 %v3679, %v3683
    %v3686 = vlaneseq
    %v3687 = vshrl.u32 %v3686, 7
    %v3688 = vsub.s32 0, %v3687
    %v3689 = vrot.slane %v3653, %v3688
    %v3690 = vadd.f32 %v3684, %v3689
    %v3691 = vadd.f32 %v3685, %v3689
    %v3692 = vld [vmem:[%s13] sm:$0x1]
    %v3693 = vld [vmem:[%s14] sm:$0x1]
    %v3694 = vsel %vm79, %v3690, 0.0
    %3695 = vadd.xlane.f32.xlu0 %v3694
    %v3696 = vpop.xlane.xlu0 %3695
    %v3697 = vsel %vm79, %v3691, 0.0
    %3698 = vadd.xlane.f32.xlu0 %v3697
    %v3699 = vpop.xlane.xlu0 %3698
    %v3700 = vmul.f32 %v3696, %v1612
    %v3701 = vmul.f32 %v3699, %v1612
    %v3702 = vsub.f32 %v3690, %v3700
    %v3703 = vsub.f32 %v3691, %v3701
    %v3704 = vmul.f32 %v3702, %v3702
    %v3705 = vmul.f32 %v3703, %v3703
    %v3706 = vsel %vm79, %v3704, 0.0
    %3707 = vadd.xlane.f32.xlu0 %v3706
    %v3708 = vpop.xlane.xlu0 %3707
    %v3709 = vsel %vm79, %v3705, 0.0
    %3710 = vadd.xlane.f32.xlu0 %v3709
    %v3711 = vpop.xlane.xlu0 %3710
    %v3712 = vmul.f32 %v3708, %v1612
    %v3713 = vmul.f32 %v3711, %v1612
    %v3714 = vadd.f32 %v3712, 1e-05
    %v3715 = vadd.f32 %v3713, 1e-05
    %v3716 = vrsqrt.pop %v3714
    %v3717 = vrsqrt.pop %v3715
    %v3718 = vmul.f32 %v3702, %v3716
    %v3719 = vmul.f32 %v3703, %v3717
    %v3721 = vlaneseq
    %v3722 = vshrl.u32 %v3721, 7
    %v3723 = vsub.s32 0, %v3722
    %v3724 = vrot.slane %v3692, %v3723
    %v3726 = vmul.f32 %v3718, %v3724
    %v3727 = vmul.f32 %v3719, %v3724
    %v3729 = vlaneseq
    %v3730 = vshrl.u32 %v3729, 7
    %v3731 = vsub.s32 0, %v3730
    %v3732 = vrot.slane %v3693, %v3731
    %v3734 = vadd.f32 %v3726, %v3732
    %v3735 = vadd.f32 %v3727, %v3732
    %3736 = vst.msk [vmem:[#allocation5] sm:$0xff] %vm79, %v3734
    %3737 = vst.msk [vmem:[#allocation5 + $0x8] sm:$0xff] %vm79, %v3735
    %3738 = vst.msk [vmem:[#allocation6] sm:$0xff] %vm164, %v2689
    %3739 = vst.msk [vmem:[#allocation6 + $0x8] sm:$0xff] %vm164, %v2690
    // Predicated region
    $region66: #{tpu_custom_call.1} parent=1 // pred_check
      _
    $region67: #{tpu_custom_call.1} parent=1 // pred_check_branch
      %3741 = sbr.rel (0) target = $region69
    $region68: #{tpu_custom_call.1} parent=1 // pred_region
      %s3743 = ssub.s32 256, 256
      %3744 = vsyncadd [#allocation4], %s3743
      %s3745 = sshll.u32 [#allocation5], 4
      %s3746 = int_to_ptr.vmem [resolvable:$true] %s3745
      %3751 = dma.vmem_to_hbm [thread:$0]  %s3746, 256, %s15, [#allocation4], 128, 128, 8
    $region69: #{tpu_custom_call.1} parent=1 // pred_fallthru
      _
    // Predicated region
    $region70: #{tpu_custom_call.1} parent=1 // pred_check
      _
    $region71: #{tpu_custom_call.1} parent=1 // pred_check_branch
      %3753 = sbr.rel (0) target = $region73
    $region72: #{tpu_custom_call.1} parent=1 // pred_region
      %s3755 = ssub.s32 256, 256
      %3756 = vsyncadd [#allocation7], %s3755
      %s3757 = sshll.u32 [#allocation6], 4
      %s3758 = int_to_ptr.vmem [resolvable:$true] %s3757
      %3763 = dma.vmem_to_hbm [thread:$0]  %s3758, 256, %s16, [#allocation7], 128, 128, 8
    $region73: #{tpu_custom_call.1} parent=1 // pred_fallthru
      _
    // Predicated region
    $region74: #{tpu_custom_call.1} parent=1 // pred_check
      _
    $region75: #{tpu_custom_call.1} parent=1 // pred_check_branch
      %3765 = sbr.rel (0) target = $region77
    $region76: #{tpu_custom_call.1} parent=1 // pred_region
      %3766 = dma.done [#allocation4], 256
    $region77: #{tpu_custom_call.1} parent=1 // pred_fallthru
      _
    // Predicated region
    $region78: #{tpu_custom_call.1} parent=1 // pred_check
      _
    $region79: #{tpu_custom_call.1} parent=1 // pred_check_branch
      %3768 = sbr.rel (0) target = $region81
    $region80: #{tpu_custom_call.1} parent=1 // pred_region
      %3769 = dma.done [#allocation7], 256
    $region81: #{tpu_custom_call.1} parent=1 // pred_fallthru
      _
    %3770 = vsyncpa [#allocation3], 1
    %3771 = vsyncpa [#allocation4], 1
    %3772 = vsyncpa [#allocation7], 1

</llo_original>
